<compile_context>
chip_gen: v5e
topology: v5e:2x2
jax: 0.10.0
libtpu: 0.0.40
codegen_flags: <defaults>
</compile_context>

<pallas_src>
import jax
import jax.numpy as jnp
from jax.experimental import pallas as pl
from jax.experimental.pallas import tpu as pltpu

LANE = 128


def _round_up(n, m):
    return ((n + m - 1) // m) * m


def mlp_kernel(x_ref, w1_ref, b1_ref, w2_ref, b2_ref, w3_ref, b3_ref, o_ref):
    cdt = w1_ref.dtype  # MXU operand dtype (bf16 on v6e/v7x, or f32)
    x = x_ref[...]

    # f32 accumulate on the MXU; bias add + ReLU in f32 on the VPU.
    h1 = jnp.dot(x, w1_ref[...], preferred_element_type=jnp.float32) + b1_ref[...]
    h1 = jnp.maximum(h1, 0.0).astype(cdt)

    h2 = jnp.dot(h1, w2_ref[...], preferred_element_type=jnp.float32) + b2_ref[...]
    h2 = jnp.maximum(h2, 0.0).astype(cdt)

    h3 = jnp.dot(h2, w3_ref[...], preferred_element_type=jnp.float32) + b3_ref[...]
    o_ref[...] = jax.nn.sigmoid(h3).astype(o_ref.dtype)


def init_params(key, i_dim, h_dim, o_dim, dtype=jnp.float32):
    """torch.nn.Linear-style init; weights stored as (in, out) == W.T, bias (1, out)."""
    ks = jax.random.split(key, 6)

    def linear(kw, kb, fan_in, fan_out):
        bound = 1.0 / jnp.sqrt(fan_in)
        w = jax.random.uniform(kw, (fan_in, fan_out), dtype, -bound, bound)
        b = jax.random.uniform(kb, (1, fan_out), dtype, -bound, bound)
        return w, b

    w1, b1 = linear(ks[0], ks[1], i_dim, h_dim)
    w2, b2 = linear(ks[2], ks[3], h_dim, h_dim)
    w3, b3 = linear(ks[4], ks[5], h_dim, o_dim)
    return (w1, b1, w2, b2, w3, b3)


def prepare_params(params, compute_dtype=jnp.bfloat16, lane=LANE):
    """One-time (init-time) zero-pad of feature dims up to `lane` multiples and
    cast of weights to the MXU operand dtype. Biases stay f32 (post-accum add)."""
    w1, b1, w2, b2, w3, b3 = params
    i_dim, h_dim = w1.shape
    o_dim = w3.shape[1]
    i_p, h_p, o_p = (_round_up(d, lane) for d in (i_dim, h_dim, o_dim))

    def pad2(a, rows, cols):
        return jnp.pad(a, ((0, rows - a.shape[0]), (0, cols - a.shape[1])))

    w1p = pad2(w1, i_p, h_p).astype(compute_dtype)
    w2p = pad2(w2, h_p, h_p).astype(compute_dtype)
    w3p = pad2(w3, h_p, o_p).astype(compute_dtype)
    b1p = pad2(b1, 1, h_p).astype(jnp.float32)
    b2p = pad2(b2, 1, h_p).astype(jnp.float32)
    b3p = pad2(b3, 1, o_p).astype(jnp.float32)
    return (w1p, b1p, w2p, b2p, w3p, b3p)


def _build_pallas_call(block_b, i_p, h_p, o_p, b_pad, out_dtype, cost, single_buffer):
    # Resident operands: constant index_map; request single buffering when supported.
    kw = {"pipeline_mode": pl.Buffered(1)} if single_buffer else {}

    def resident(shape):
        return pl.BlockSpec(shape, lambda i: (0, 0), **kw)

    grid = (b_pad // block_b,)
    return pl.pallas_call(
        mlp_kernel,
        out_shape=jax.ShapeDtypeStruct((b_pad, o_p), out_dtype),
        grid_spec=pltpu.PrefetchScalarGridSpec(
            num_scalar_prefetch=0,
            grid=grid,
            in_specs=[
                pl.BlockSpec((block_b, i_p), lambda i: (i, 0)),  # x tile (pipelined)
                resident((i_p, h_p)),   # w1
                resident((1, h_p)),     # b1
                resident((h_p, h_p)),   # w2
                resident((1, h_p)),     # b2
                resident((h_p, o_p)),   # w3
                resident((1, o_p)),     # b3
            ],
            out_specs=pl.BlockSpec((block_b, o_p), lambda i: (i, 0)),
        ),
        compiler_params=pltpu.CompilerParams(
            dimension_semantics=("parallel",),      # batch steps shard across TCs (v7x)
            vmem_limit_bytes=64 * 1024 * 1024,
        ),
        cost_estimate=cost,
    )


def network_forward(x, padded_params, o_dim, *, block_b=256):
    """x: (B, i_dim) f32; padded_params from prepare_params(); returns (B, o_dim)."""
    w1p, b1p, w2p, b2p, w3p, b3p = padded_params
    B, i_dim = x.shape
    i_p, h_p = w1p.shape
    o_p = w3p.shape[1]
    cdt = w1p.dtype

    # Batch tile: multiple of 16 (covers f32 sublane=8 and bf16 packing), clamped to B.
    block_b = max(16, min(block_b, _round_up(B, 16)))
    block_b = _round_up(block_b, 16)
    b_pad = _round_up(B, block_b)           # no ragged last tile

    # Pad batch rows + feature lanes; cast x to the MXU operand dtype.
    x_p = jnp.pad(x, ((0, b_pad - B), (0, i_p - i_dim))).astype(cdt)

    flops = 2 * b_pad * (i_p * h_p + h_p * h_p + h_p * o_p)
    bytes_accessed = (
        x_p.size * x_p.dtype.itemsize
        + sum(a.size * a.dtype.itemsize for a in padded_params)
        + b_pad * o_p * x.dtype.itemsize
    )
    cost = pl.CostEstimate(
        flops=flops, transcendentals=b_pad * o_p, bytes_accessed=bytes_accessed
    )

    args = (x_p, w1p, b1p, w2p, b2p, w3p, b3p)
    try:
        out = _build_pallas_call(
            block_b, i_p, h_p, o_p, b_pad, x.dtype, cost, single_buffer=True
        )(*args)
    except Exception:
        # This jax version does not honor pipeline_mode on top-level pallas_call;
        # fall back to default double-buffered resident weights (correctness first).
        out = _build_pallas_call(
            block_b, i_p, h_p, o_p, b_pad, x.dtype, cost, single_buffer=False
        )(*args)

    return out[:B, :o_dim]


def reference_forward(x, params):
    w1, b1, w2, b2, w3, b3 = params
    h = jnp.maximum(x @ w1 + b1, 0.0)
    h = jnp.maximum(h @ w2 + b2, 0.0)
    return jax.nn.sigmoid(h @ w3 + b3)


if __name__ == "__main__":
    key = jax.random.PRNGKey(0)
    k_x, k_p = jax.random.split(key)

    # Small shapes consistent with Network(i_dim, h_dim, o_dim); B large enough
    # for >=2 grid steps so pipelining / v7x dual-TC sharding actually engage.
    B, i_dim, h_dim, o_dim = 512, 16, 32, 8
    x = jax.random.normal(k_x, (B, i_dim), dtype=jnp.float32)
    params = init_params(k_p, i_dim, h_dim, o_dim)
    ref = reference_forward(x, params)

    # Default perf path: bf16 MXU operands, f32 accumulate (2 grid steps of 256 rows).
    p_bf16 = prepare_params(params, compute_dtype=jnp.bfloat16)
    out = jax.block_until_ready(network_forward(x, p_bf16, o_dim, block_b=256))
    assert out.shape == (B, o_dim)
    assert jnp.allclose(out, ref, atol=3e-2, rtol=3e-2), "bf16 kernel mismatch vs reference"

    # f32-operand path for a tight numerical check of the fused kernel.
    p_f32 = prepare_params(params, compute_dtype=jnp.float32)
    out32 = jax.block_until_ready(network_forward(x, p_f32, o_dim, block_b=256))
    assert jnp.allclose(out32, ref, atol=1e-5, rtol=1e-5), "f32 kernel mismatch vs reference"

    print("KERNEL_OK")
</pallas_src>

<mosaic_0001>
module attributes {stable_mosaic.version = 11 : i64} {
  func.func @mlp_kernel(%arg0: i32, %arg1: memref<256x128xbf16, #tpu.memory_space<vmem>>, %arg2: memref<128x128xbf16, #tpu.memory_space<vmem>>, %arg3: memref<1x128xf32, #tpu.memory_space<vmem>>, %arg4: memref<128x128xbf16, #tpu.memory_space<vmem>>, %arg5: memref<1x128xf32, #tpu.memory_space<vmem>>, %arg6: memref<128x128xbf16, #tpu.memory_space<vmem>>, %arg7: memref<1x128xf32, #tpu.memory_space<vmem>>, %arg8: memref<256x128xf32, #tpu.memory_space<vmem>>) attributes {dimension_semantics = [#tpu.dimension_semantics<parallel>], iteration_bounds = array<i64: 2>, scalar_prefetch = 0 : i64, scratch_operands = 0 : i64, tpu.core_type = #tpu.core_type<tc>, window_params = [{transform_indices = @transform_0, window_bounds = array<i64: 256, 128>}, {pipeline_mode = #tpu.pipeline_mode<synchronous>, transform_indices = @transform_1, window_bounds = array<i64: 128, 128>}, {pipeline_mode = #tpu.pipeline_mode<synchronous>, transform_indices = @transform_2, window_bounds = array<i64: 1, 128>}, {pipeline_mode = #tpu.pipeline_mode<synchronous>, transform_indices = @transform_3, window_bounds = array<i64: 128, 128>}, {pipeline_mode = #tpu.pipeline_mode<synchronous>, transform_indices = @transform_4, window_bounds = array<i64: 1, 128>}, {pipeline_mode = #tpu.pipeline_mode<synchronous>, transform_indices = @transform_5, window_bounds = array<i64: 128, 128>}, {pipeline_mode = #tpu.pipeline_mode<synchronous>, transform_indices = @transform_6, window_bounds = array<i64: 1, 128>}, {transform_indices = @transform_7, window_bounds = array<i64: 256, 128>}]} {
    %c0 = arith.constant 0 : index
    %c0_0 = arith.constant 0 : index
    %0 = vector.load %arg1[%c0, %c0_0] : memref<256x128xbf16, #tpu.memory_space<vmem>>, vector<256x128xbf16>
    %c0_1 = arith.constant 0 : index
    %c0_2 = arith.constant 0 : index
    %1 = vector.load %arg2[%c0_1, %c0_2] : memref<128x128xbf16, #tpu.memory_space<vmem>>, vector<128x128xbf16>
    %cst = arith.constant dense<0.000000e+00> : vector<256x128xf32>
    %2 = tpu.matmul %0, %1, %cst {dimension_numbers = #tpu.dot_dimension_numbers<[1], [0], [0], [1], [0, 0, 1, 1], [], []>} : vector<256x128xbf16>, vector<128x128xbf16>, vector<256x128xf32> -> vector<256x128xf32>
    %c0_3 = arith.constant 0 : index
    %c0_4 = arith.constant 0 : index
    %3 = vector.load %arg3[%c0_3, %c0_4] : memref<1x128xf32, #tpu.memory_space<vmem>>, vector<1x128xf32>
    %4 = vector.broadcast %3 : vector<1x128xf32> to vector<256x128xf32>
    %5 = arith.addf %2, %4 : vector<256x128xf32>
    %cst_5 = arith.constant 0.000000e+00 : f32
    %6 = vector.broadcast %cst_5 : f32 to vector<256x128xf32>
    %7 = arith.maximumf %5, %6 : vector<256x128xf32>
    %8 = arith.truncf %7 : vector<256x128xf32> to vector<256x128xbf16>
    %c0_6 = arith.constant 0 : index
    %c0_7 = arith.constant 0 : index
    %9 = vector.load %arg4[%c0_6, %c0_7] : memref<128x128xbf16, #tpu.memory_space<vmem>>, vector<128x128xbf16>
    %cst_8 = arith.constant dense<0.000000e+00> : vector<256x128xf32>
    %10 = tpu.matmul %8, %9, %cst_8 {dimension_numbers = #tpu.dot_dimension_numbers<[1], [0], [0], [1], [0, 0, 1, 1], [], []>} : vector<256x128xbf16>, vector<128x128xbf16>, vector<256x128xf32> -> vector<256x128xf32>
    %c0_9 = arith.constant 0 : index
    %c0_10 = arith.constant 0 : index
    %11 = vector.load %arg5[%c0_9, %c0_10] : memref<1x128xf32, #tpu.memory_space<vmem>>, vector<1x128xf32>
    %12 = vector.broadcast %11 : vector<1x128xf32> to vector<256x128xf32>
    %13 = arith.addf %10, %12 : vector<256x128xf32>
    %cst_11 = arith.constant 0.000000e+00 : f32
    %14 = vector.broadcast %cst_11 : f32 to vector<256x128xf32>
    %15 = arith.maximumf %13, %14 : vector<256x128xf32>
    %16 = arith.truncf %15 : vector<256x128xf32> to vector<256x128xbf16>
    %c0_12 = arith.constant 0 : index
    %c0_13 = arith.constant 0 : index
    %17 = vector.load %arg6[%c0_12, %c0_13] : memref<128x128xbf16, #tpu.memory_space<vmem>>, vector<128x128xbf16>
    %cst_14 = arith.constant dense<0.000000e+00> : vector<256x128xf32>
    %18 = tpu.matmul %16, %17, %cst_14 {dimension_numbers = #tpu.dot_dimension_numbers<[1], [0], [0], [1], [0, 0, 1, 1], [], []>} : vector<256x128xbf16>, vector<128x128xbf16>, vector<256x128xf32> -> vector<256x128xf32>
    %c0_15 = arith.constant 0 : index
    %c0_16 = arith.constant 0 : index
    %19 = vector.load %arg7[%c0_15, %c0_16] : memref<1x128xf32, #tpu.memory_space<vmem>>, vector<1x128xf32>
    %20 = vector.broadcast %19 : vector<1x128xf32> to vector<256x128xf32>
    %21 = arith.addf %18, %20 : vector<256x128xf32>
    %22 = arith.negf %21 : vector<256x128xf32>
    %23 = math.exp %22 : vector<256x128xf32>
    %cst_17 = arith.constant 1.000000e+00 : f32
    %24 = vector.broadcast %cst_17 : f32 to vector<256x128xf32>
    %25 = arith.addf %24, %23 : vector<256x128xf32>
    %26 = arith.divf %24, %25 : vector<256x128xf32>
    %c0_18 = arith.constant 0 : index
    %c0_19 = arith.constant 0 : index
    %27 = vector.load %arg8[%c0_18, %c0_19] : memref<256x128xf32, #tpu.memory_space<vmem>>, vector<256x128xf32>
    tpu.vector_store %arg8[%c0_18, %c0_19], %26 {strides = array<i32>} : memref<256x128xf32, #tpu.memory_space<vmem>>, vector<256x128xf32>,
    return
  }
  func.func @transform_0(%arg0: i32) -> (i32, i32) {
    %c0_i32 = arith.constant 0 : i32
    %c0_i32_0 = arith.constant 0 : i32
    return %arg0, %c0_i32 : i32, i32
  }
  func.func @transform_1(%arg0: i32) -> (i32, i32) {
    %c0_i32 = arith.constant 0 : i32
    %c0_i32_0 = arith.constant 0 : i32
    %c0_i32_1 = arith.constant 0 : i32
    return %c0_i32, %c0_i32_0 : i32, i32
  }
  func.func @transform_2(%arg0: i32) -> (i32, i32) {
    %c0_i32 = arith.constant 0 : i32
    %c0_i32_0 = arith.constant 0 : i32
    %c0_i32_1 = arith.constant 0 : i32
    return %c0_i32, %c0_i32_0 : i32, i32
  }
  func.func @transform_3(%arg0: i32) -> (i32, i32) {
    %c0_i32 = arith.constant 0 : i32
    %c0_i32_0 = arith.constant 0 : i32
    %c0_i32_1 = arith.constant 0 : i32
    return %c0_i32, %c0_i32_0 : i32, i32
  }
  func.func @transform_4(%arg0: i32) -> (i32, i32) {
    %c0_i32 = arith.constant 0 : i32
    %c0_i32_0 = arith.constant 0 : i32
    %c0_i32_1 = arith.constant 0 : i32
    return %c0_i32, %c0_i32_0 : i32, i32
  }
  func.func @transform_5(%arg0: i32) -> (i32, i32) {
    %c0_i32 = arith.constant 0 : i32
    %c0_i32_0 = arith.constant 0 : i32
    %c0_i32_1 = arith.constant 0 : i32
    return %c0_i32, %c0_i32_0 : i32, i32
  }
  func.func @transform_6(%arg0: i32) -> (i32, i32) {
    %c0_i32 = arith.constant 0 : i32
    %c0_i32_0 = arith.constant 0 : i32
    %c0_i32_1 = arith.constant 0 : i32
    return %c0_i32, %c0_i32_0 : i32, i32
  }
  func.func @transform_7(%arg0: i32) -> (i32, i32) {
    %c0_i32 = arith.constant 0 : i32
    %c0_i32_0 = arith.constant 0 : i32
    return %arg0, %c0_i32 : i32, i32
  }
}

module attributes {stable_mosaic.version = 11 : i64} {
  func.func @mlp_kernel(%arg0: i32, %arg1: memref<256x128xbf16, #tpu.memory_space<vmem>>, %arg2: memref<128x128xbf16, #tpu.memory_space<vmem>>, %arg3: memref<1x128xf32, #tpu.memory_space<vmem>>, %arg4: memref<128x128xbf16, #tpu.memory_space<vmem>>, %arg5: memref<1x128xf32, #tpu.memory_space<vmem>>, %arg6: memref<128x128xbf16, #tpu.memory_space<vmem>>, %arg7: memref<1x128xf32, #tpu.memory_space<vmem>>, %arg8: memref<256x128xf32, #tpu.memory_space<vmem>>) attributes {dimension_semantics = [#tpu.dimension_semantics<parallel>], iteration_bounds = array<i64: 2>, scalar_prefetch = 0 : i64, scratch_operands = 0 : i64, tpu.core_type = #tpu.core_type<tc>, window_params = [{transform_indices = @transform_0, window_bounds = array<i64: 256, 128>}, {pipeline_mode = #tpu.pipeline_mode<synchronous>, transform_indices = @transform_1, window_bounds = array<i64: 128, 128>}, {pipeline_mode = #tpu.pipeline_mode<synchronous>, transform_indices = @transform_2, window_bounds = array<i64: 1, 128>}, {pipeline_mode = #tpu.pipeline_mode<synchronous>, transform_indices = @transform_3, window_bounds = array<i64: 128, 128>}, {pipeline_mode = #tpu.pipeline_mode<synchronous>, transform_indices = @transform_4, window_bounds = array<i64: 1, 128>}, {pipeline_mode = #tpu.pipeline_mode<synchronous>, transform_indices = @transform_5, window_bounds = array<i64: 128, 128>}, {pipeline_mode = #tpu.pipeline_mode<synchronous>, transform_indices = @transform_6, window_bounds = array<i64: 1, 128>}, {transform_indices = @transform_7, window_bounds = array<i64: 256, 128>}]} {
    %c0 = arith.constant 0 : index
    %c0_0 = arith.constant 0 : index
    %0 = vector.load %arg1[%c0, %c0_0] : memref<256x128xbf16, #tpu.memory_space<vmem>>, vector<256x128xbf16>
    %c0_1 = arith.constant 0 : index
    %c0_2 = arith.constant 0 : index
    %1 = vector.load %arg2[%c0_1, %c0_2] : memref<128x128xbf16, #tpu.memory_space<vmem>>, vector<128x128xbf16>
    %cst = arith.constant dense<0.000000e+00> : vector<256x128xf32>
    %2 = tpu.matmul %0, %1, %cst {dimension_numbers = #tpu.dot_dimension_numbers<[1], [0], [0], [1], [0, 0, 1, 1], [], []>} : vector<256x128xbf16>, vector<128x128xbf16>, vector<256x128xf32> -> vector<256x128xf32>
    %c0_3 = arith.constant 0 : index
    %c0_4 = arith.constant 0 : index
    %3 = vector.load %arg3[%c0_3, %c0_4] : memref<1x128xf32, #tpu.memory_space<vmem>>, vector<1x128xf32>
    %4 = vector.broadcast %3 : vector<1x128xf32> to vector<256x128xf32>
    %5 = arith.addf %2, %4 : vector<256x128xf32>
    %cst_5 = arith.constant 0.000000e+00 : f32
    %6 = vector.broadcast %cst_5 : f32 to vector<256x128xf32>
    %7 = arith.maximumf %5, %6 : vector<256x128xf32>
    %8 = arith.truncf %7 : vector<256x128xf32> to vector<256x128xbf16>
    %c0_6 = arith.constant 0 : index
    %c0_7 = arith.constant 0 : index
    %9 = vector.load %arg4[%c0_6, %c0_7] : memref<128x128xbf16, #tpu.memory_space<vmem>>, vector<128x128xbf16>
    %cst_8 = arith.constant dense<0.000000e+00> : vector<256x128xf32>
    %10 = tpu.matmul %8, %9, %cst_8 {dimension_numbers = #tpu.dot_dimension_numbers<[1], [0], [0], [1], [0, 0, 1, 1], [], []>} : vector<256x128xbf16>, vector<128x128xbf16>, vector<256x128xf32> -> vector<256x128xf32>
    %c0_9 = arith.constant 0 : index
    %c0_10 = arith.constant 0 : index
    %11 = vector.load %arg5[%c0_9, %c0_10] : memref<1x128xf32, #tpu.memory_space<vmem>>, vector<1x128xf32>
    %12 = vector.broadcast %11 : vector<1x128xf32> to vector<256x128xf32>
    %13 = arith.addf %10, %12 : vector<256x128xf32>
    %cst_11 = arith.constant 0.000000e+00 : f32
    %14 = vector.broadcast %cst_11 : f32 to vector<256x128xf32>
    %15 = arith.maximumf %13, %14 : vector<256x128xf32>
    %16 = arith.truncf %15 : vector<256x128xf32> to vector<256x128xbf16>
    %c0_12 = arith.constant 0 : index
    %c0_13 = arith.constant 0 : index
    %17 = vector.load %arg6[%c0_12, %c0_13] : memref<128x128xbf16, #tpu.memory_space<vmem>>, vector<128x128xbf16>
    %cst_14 = arith.constant dense<0.000000e+00> : vector<256x128xf32>
    %18 = tpu.matmul %16, %17, %cst_14 {dimension_numbers = #tpu.dot_dimension_numbers<[1], [0], [0], [1], [0, 0, 1, 1], [], []>} : vector<256x128xbf16>, vector<128x128xbf16>, vector<256x128xf32> -> vector<256x128xf32>
    %c0_15 = arith.constant 0 : index
    %c0_16 = arith.constant 0 : index
    %19 = vector.load %arg7[%c0_15, %c0_16] : memref<1x128xf32, #tpu.memory_space<vmem>>, vector<1x128xf32>
    %20 = vector.broadcast %19 : vector<1x128xf32> to vector<256x128xf32>
    %21 = arith.addf %18, %20 : vector<256x128xf32>
    %22 = arith.negf %21 : vector<256x128xf32>
    %23 = math.exp %22 : vector<256x128xf32>
    %cst_17 = arith.constant 1.000000e+00 : f32
    %24 = vector.broadcast %cst_17 : f32 to vector<256x128xf32>
    %25 = arith.addf %24, %23 : vector<256x128xf32>
    %26 = arith.divf %24, %25 : vector<256x128xf32>
    %c0_18 = arith.constant 0 : index
    %c0_19 = arith.constant 0 : index
    %27 = vector.load %arg8[%c0_18, %c0_19] : memref<256x128xf32, #tpu.memory_space<vmem>>, vector<256x128xf32>
    tpu.vector_store %arg8[%c0_18, %c0_19], %26 {strides = array<i32>} : memref<256x128xf32, #tpu.memory_space<vmem>>, vector<256x128xf32>,
    return
  }
  func.func @transform_0(%arg0: i32) -> (i32, i32) {
    %c0_i32 = arith.constant 0 : i32
    %c0_i32_0 = arith.constant 0 : i32
    return %arg0, %c0_i32 : i32, i32
  }
  func.func @transform_1(%arg0: i32) -> (i32, i32) {
    %c0_i32 = arith.constant 0 : i32
    %c0_i32_0 = arith.constant 0 : i32
    %c0_i32_1 = arith.constant 0 : i32
    return %c0_i32, %c0_i32_0 : i32, i32
  }
  func.func @transform_2(%arg0: i32) -> (i32, i32) {
    %c0_i32 = arith.constant 0 : i32
    %c0_i32_0 = arith.constant 0 : i32
    %c0_i32_1 = arith.constant 0 : i32
    return %c0_i32, %c0_i32_0 : i32, i32
  }
  func.func @transform_3(%arg0: i32) -> (i32, i32) {
    %c0_i32 = arith.constant 0 : i32
    %c0_i32_0 = arith.constant 0 : i32
    %c0_i32_1 = arith.constant 0 : i32
    return %c0_i32, %c0_i32_0 : i32, i32
  }
  func.func @transform_4(%arg0: i32) -> (i32, i32) {
    %c0_i32 = arith.constant 0 : i32
    %c0_i32_0 = arith.constant 0 : i32
    %c0_i32_1 = arith.constant 0 : i32
    return %c0_i32, %c0_i32_0 : i32, i32
  }
  func.func @transform_5(%arg0: i32) -> (i32, i32) {
    %c0_i32 = arith.constant 0 : i32
    %c0_i32_0 = arith.constant 0 : i32
    %c0_i32_1 = arith.constant 0 : i32
    return %c0_i32, %c0_i32_0 : i32, i32
  }
  func.func @transform_6(%arg0: i32) -> (i32, i32) {
    %c0_i32 = arith.constant 0 : i32
    %c0_i32_0 = arith.constant 0 : i32
    %c0_i32_1 = arith.constant 0 : i32
    return %c0_i32, %c0_i32_0 : i32, i32
  }
  func.func @transform_7(%arg0: i32) -> (i32, i32) {
    %c0_i32 = arith.constant 0 : i32
    %c0_i32_0 = arith.constant 0 : i32
    return %arg0, %c0_i32 : i32, i32
  }
}

</mosaic_0001>

<llo_original>
// kernel: tpu_custom_call.1
$region0: #{tpu_custom_call.1}
  #allocation0 [shape = 'u32[]', space=smem, size = 0x4, offset = 0x4, fixed_abs, tag = 'smem constant byte address 0x4 - core index']
  #allocation1 [shape = 'u32[72,128]{1,0:T(1,128)}', space=vmem, size = 0x9000, scoped, tag = 'internal scratch']
  %s0 = inlined_call_operand.hbm [shape: bf16[512,128], index: 0, kind: input, shape index: {}]
  %s1 = inlined_call_operand.hbm [shape: bf16[128,128], index: 1, kind: input, shape index: {}]
  %s2 = inlined_call_operand.vmem [shape: f32[1,128], index: 2, kind: input, shape index: {}]
  %s3 = inlined_call_operand.hbm [shape: bf16[128,128], index: 3, kind: input, shape index: {}]
  %s4 = inlined_call_operand.vmem [shape: f32[1,128], index: 4, kind: input, shape index: {}]
  %s5 = inlined_call_operand.hbm [shape: bf16[128,128], index: 5, kind: input, shape index: {}]
  %s6 = inlined_call_operand.vmem [shape: f32[1,128], index: 6, kind: input, shape index: {}]
  %s7 = inlined_call_operand.hbm [shape: f32[512,128], index: 7, kind: output, shape index: {}]
  %s8 = sld [smem:[#allocation0]]
  $region77: #{tpu_custom_call.1} parent=0
    _
  %s10 = ssub.s32 1, %s8
  %s11 = scalar_select 0, %s10, %s8
  $region1: #{tpu_custom_call.1} parent=0
    #allocation2 [shape = 'u8[131072]{0}', space=vmem, size = 0x20000, scoped, tag = 'input window, operand 0']
    #allocation3 [shape = 's32[2]{0}', space=sflag, size = 0x8, scoped, tag = 'scoped memory for tpu_custom_call.1']
    #allocation4 [shape = 's32[2]{0}', space=sflag, size = 0x8, scoped, tag = 'scoped memory for tpu_custom_call.1']
    #allocation5 [shape = 'u8[32768]{0}', space=vmem, size = 0x8000, scoped, tag = 'input window, operand 1, single buffered']
    #allocation6 [shape = 's32[1]{0}', space=sflag, size = 0x4, scoped, tag = 'scoped memory for tpu_custom_call.1']
    #allocation7 [shape = 'u8[32768]{0}', space=vmem, size = 0x8000, scoped, tag = 'input window, operand 3, single buffered']
    #allocation8 [shape = 'u8[32768]{0}', space=vmem, size = 0x8000, scoped, tag = 'input window, operand 5, single buffered']
    #allocation9 [shape = 's32[1]{0}', space=sflag, size = 0x4, scoped, tag = 'scoped memory for tpu_custom_call.1']
    #allocation10 [shape = 'u8[262144]{0}', space=vmem, size = 0x40000, scoped, tag = 'output window, operand 0']
    %12 = vsyncpa [#allocation3], 0
    %s13 = scalar_lea.sflag [#allocation3], 1
    %14 = vsyncpa %s13, 0
    %15 = vsyncpa [#allocation6], 0
    %16 = vsyncpa [#allocation9], 0
    %17 = vsyncpa [#allocation4], 0
    %s18 = scalar_lea.sflag [#allocation4], 1
    %19 = vsyncpa %s18, 0
    loop: start=0, step=1, limit=4
    $region2: #{tpu_custom_call.1} parent=1 // loop_pre_header
      _
    $region3: #{tpu_custom_call.1} parent=1 // loop_header
      %s21 = sphi 0, %s25
      %p22 = scmp.ge.s32.totalorder %s21, 4
      %s31 = sphi 0, %s33
      %s34 = sphi 0, %s31
      %s35 = sphi 0, %s34
      %s51 = sphi 0, %s35
      %s55 = sphi 0, %s55
      %s57 = sphi 0, %s55
      %s58 = sphi 0, %s57
      %s72 = sphi 0, %s58
      %s76 = sphi 0, %s76
      %s78 = sphi 0, %s76
      %s79 = sphi 0, %s78
      %s93 = sphi 0, %s79
      %s97 = sphi 0, %s97
      %s99 = sphi 0, %s97
      %s100 = sphi 0, %s99
      %s114 = sphi 0, %s100
      %s118 = sphi 0, %s118
      %s120 = sphi 0, %s118
      %s121 = sphi 0, %s120
      %s135 = sphi 0, %s121
      %s139 = sphi 0, %s139
      %s141 = sphi 0, %s139
      %s142 = sphi 0, %s141
      %s156 = sphi 0, %s142
      %s160 = sphi 0, %s160
      %s162 = sphi 0, %s160
      %s163 = sphi 0, %s162
      %s177 = sphi 0, %s163
      %s183 = sphi 0, %s185
      %s186 = sphi 0, %s183
      %s187 = sphi 0, %s186
      %s203 = sphi 0, %s187
    $region4: #{tpu_custom_call.1} parent=1 // loop_header_branch
      %24 = sbr.rel (%p22) target = $region8
    $region5: #{tpu_custom_call.1} parent=1 // loop_body
      %s26 = ssub.s32 %s21, 1
      %s27 = ssub.s32 %s21, 2
      %s28 = sadd.s32 %s21, 1
      %s29 = ssub.s32 %s21, %s28
      %p30 = scmp.eq.s32.totalorder %s29, 0
      %s32 = sadd.s32 %s31, 1
      %s33 = scalar_select %p30, %s31, %s32
      %p36 = pneg %p30
      %p37 = scmp.eq.s32.totalorder %s21, 1
      %p38 = por %p36, %p37
      %p39 = scmp.ne.s32.totalorder %s31, %s34
      %p40 = scmp.eq.s32.totalorder %s21, 0
      %p41 = por %p39, %p40
      %p42 = scmp.ne.s32.totalorder %s31, %s34
      %p43 = scmp.eq.s32.totalorder %s26, 1
      %p44 = por %p42, %p43
      %p45 = scmp.ne.s32.totalorder %s34, %s35
      %p46 = scmp.eq.s32.totalorder %s26, 0
      %p47 = por %p45, %p46
      %p48 = scmp.ne.s32.totalorder %s34, %s35
      %p49 = scmp.eq.s32.totalorder %s27, 1
      %p50 = por %p48, %p49
      %p52 = scmp.ne.s32.totalorder %s35, %s51
      %p53 = scmp.eq.s32.totalorder %s27, 0
      %p54 = por %p52, %p53
      %s56 = sadd.s32 %s55, 1
      %p59 = scmp.eq.s32.totalorder %s21, 1
      %p60 = scmp.ne.s32.totalorder %s55, %s57
      %p61 = scmp.eq.s32.totalorder %s21, 0
      %p62 = por %p60, %p61
      %p63 = scmp.ne.s32.totalorder %s55, %s57
      %p64 = scmp.eq.s32.totalorder %s26, 1
      %p65 = por %p63, %p64
      %p66 = scmp.ne.s32.totalorder %s57, %s58
      %p67 = scmp.eq.s32.totalorder %s26, 0
      %p68 = por %p66, %p67
      %p69 = scmp.ne.s32.totalorder %s57, %s58
      %p70 = scmp.eq.s32.totalorder %s27, 1
      %p71 = por %p69, %p70
      %p73 = scmp.ne.s32.totalorder %s58, %s72
      %p74 = scmp.eq.s32.totalorder %s27, 0
      %p75 = por %p73, %p74
      %s77 = sadd.s32 %s76, 1
      %p80 = scmp.eq.s32.totalorder %s21, 1
      %p81 = scmp.ne.s32.totalorder %s76, %s78
      %p82 = scmp.eq.s32.totalorder %s21, 0
      %p83 = por %p81, %p82
      %p84 = scmp.ne.s32.totalorder %s76, %s78
      %p85 = scmp.eq.s32.totalorder %s26, 1
      %p86 = por %p84, %p85
      %p87 = scmp.ne.s32.totalorder %s78, %s79
      %p88 = scmp.eq.s32.totalorder %s26, 0
      %p89 = por %p87, %p88
      %p90 = scmp.ne.s32.totalorder %s78, %s79
      %p91 = scmp.eq.s32.totalorder %s27, 1
      %p92 = por %p90, %p91
      %p94 = scmp.ne.s32.totalorder %s79, %s93
      %p95 = scmp.eq.s32.totalorder %s27, 0
      %p96 = por %p94, %p95
      %s98 = sadd.s32 %s97, 1
      %p101 = scmp.eq.s32.totalorder %s21, 1
      %p102 = scmp.ne.s32.totalorder %s97, %s99
      %p103 = scmp.eq.s32.totalorder %s21, 0
      %p104 = por %p102, %p103
      %p105 = scmp.ne.s32.totalorder %s97, %s99
      %p106 = scmp.eq.s32.totalorder %s26, 1
      %p107 = por %p105, %p106
      %p108 = scmp.ne.s32.totalorder %s99, %s100
      %p109 = scmp.eq.s32.totalorder %s26, 0
      %p110 = por %p108, %p109
      %p111 = scmp.ne.s32.totalorder %s99, %s100
      %p112 = scmp.eq.s32.totalorder %s27, 1
      %p113 = por %p111, %p112
      %p115 = scmp.ne.s32.totalorder %s100, %s114
      %p116 = scmp.eq.s32.totalorder %s27, 0
      %p117 = por %p115, %p116
      %s119 = sadd.s32 %s118, 1
      %p122 = scmp.eq.s32.totalorder %s21, 1
      %p123 = scmp.ne.s32.totalorder %s118, %s120
      %p124 = scmp.eq.s32.totalorder %s21, 0
      %p125 = por %p123, %p124
      %p126 = scmp.ne.s32.totalorder %s118, %s120
      %p127 = scmp.eq.s32.totalorder %s26, 1
      %p128 = por %p126, %p127
      %p129 = scmp.ne.s32.totalorder %s120, %s121
      %p130 = scmp.eq.s32.totalorder %s26, 0
      %p131 = por %p129, %p130
      %p132 = scmp.ne.s32.totalorder %s120, %s121
      %p133 = scmp.eq.s32.totalorder %s27, 1
      %p134 = por %p132, %p133
      %p136 = scmp.ne.s32.totalorder %s121, %s135
      %p137 = scmp.eq.s32.totalorder %s27, 0
      %p138 = por %p136, %p137
      %s140 = sadd.s32 %s139, 1
      %p143 = scmp.eq.s32.totalorder %s21, 1
      %p144 = scmp.ne.s32.totalorder %s139, %s141
      %p145 = scmp.eq.s32.totalorder %s21, 0
      %p146 = por %p144, %p145
      %p147 = scmp.ne.s32.totalorder %s139, %s141
      %p148 = scmp.eq.s32.totalorder %s26, 1
      %p149 = por %p147, %p148
      %p150 = scmp.ne.s32.totalorder %s141, %s142
      %p151 = scmp.eq.s32.totalorder %s26, 0
      %p152 = por %p150, %p151
      %p153 = scmp.ne.s32.totalorder %s141, %s142
      %p154 = scmp.eq.s32.totalorder %s27, 1
      %p155 = por %p153, %p154
      %p157 = scmp.ne.s32.totalorder %s142, %s156
      %p158 = scmp.eq.s32.totalorder %s27, 0
      %p159 = por %p157, %p158
      %s161 = sadd.s32 %s160, 1
      %p164 = scmp.eq.s32.totalorder %s21, 1
      %p165 = scmp.ne.s32.totalorder %s160, %s162
      %p166 = scmp.eq.s32.totalorder %s21, 0
      %p167 = por %p165, %p166
      %p168 = scmp.ne.s32.totalorder %s160, %s162
      %p169 = scmp.eq.s32.totalorder %s26, 1
      %p170 = por %p168, %p169
      %p171 = scmp.ne.s32.totalorder %s162, %s163
      %p172 = scmp.eq.s32.totalorder %s26, 0
      %p173 = por %p171, %p172
      %p174 = scmp.ne.s32.totalorder %s162, %s163
      %p175 = scmp.eq.s32.totalorder %s27, 1
      %p176 = por %p174, %p175
      %p178 = scmp.ne.s32.totalorder %s163, %s177
      %p179 = scmp.eq.s32.totalorder %s27, 0
      %p180 = por %p178, %p179
      %s181 = ssub.s32 %s21, %s28
      %p182 = scmp.eq.s32.totalorder %s181, 0
      %s184 = sadd.s32 %s183, 1
      %s185 = scalar_select %p182, %s183, %s184
      %p188 = pneg %p182
      %p189 = scmp.eq.s32.totalorder %s21, 1
      %p190 = por %p188, %p189
      %p191 = scmp.ne.s32.totalorder %s183, %s186
      %p192 = scmp.eq.s32.totalorder %s21, 0
      %p193 = por %p191, %p192
      %p194 = scmp.ne.s32.totalorder %s183, %s186
      %p195 = scmp.eq.s32.totalorder %s26, 1
      %p196 = por %p194, %p195
      %p197 = scmp.ne.s32.totalorder %s186, %s187
      %p198 = scmp.eq.s32.totalorder %s26, 0
      %p199 = por %p197, %p198
      %p200 = scmp.ne.s32.totalorder %s186, %s187
      %p201 = scmp.eq.s32.totalorder %s27, 1
      %p202 = por %p200, %p201
      %p204 = scmp.ne.s32.totalorder %s187, %s203
      %p205 = scmp.eq.s32.totalorder %s27, 0
      %p206 = por %p204, %p205
      %p207 = scmp.le.s32.totalorder 1, %s21
      %p208 = scmp.lt.s32.totalorder %s21, 3
      %p209 = pnand %p207, %p208
      %p210 = pneg %p209
      // Predicated region
      $region9: #{tpu_custom_call.1} parent=5 // pred_check
        _
      $region10: #{tpu_custom_call.1} parent=5 // pred_check_branch
        %212 = sbr.rel (%p209) target = $region12
      $region11: #{tpu_custom_call.1} parent=5 // pred_region
        %s213 = ssub.s32 %s21, 1
        // Predicated region
        $region13: #{tpu_custom_call.1} parent=11 // pred_check
          %p214 = pneg %p68
        $region14: #{tpu_custom_call.1} parent=11 // pred_check_branch
          %216 = sbr.rel (%p214) target = $region16
        $region15: #{tpu_custom_call.1} parent=11 // pred_region
          %218 = vsyncadd [#allocation6], 0
          %s219 = sshll.u32 %s1, 4
          %s220 = int_to_ptr.hbm [resolvable:$true] %s219
          %s221 = sshll.u32 [#allocation5], 4
          %s222 = int_to_ptr.vmem [resolvable:$true] %s221
          %227 = dma.hbm_to_vmem [thread:$0]  %s220, 1024, %s222, [#allocation6], 64, 64, 4
        $region16: #{tpu_custom_call.1} parent=11 // pred_fallthru
          _
        // Predicated region
        $region17: #{tpu_custom_call.1} parent=11 // pred_check
          %p228 = pneg %p89
        $region18: #{tpu_custom_call.1} parent=11 // pred_check_branch
          %230 = sbr.rel (%p228) target = $region20
        $region19: #{tpu_custom_call.1} parent=11 // pred_region
          _
        $region20: #{tpu_custom_call.1} parent=11 // pred_fallthru
          _
        // Predicated region
        $region21: #{tpu_custom_call.1} parent=11 // pred_check
          %p231 = pneg %p110
        $region22: #{tpu_custom_call.1} parent=11 // pred_check_branch
          %233 = sbr.rel (%p231) target = $region24
        $region23: #{tpu_custom_call.1} parent=11 // pred_region
          %235 = vsyncadd [#allocation6], 0
          %s236 = sshll.u32 %s3, 4
          %s237 = int_to_ptr.hbm [resolvable:$true] %s236
          %s238 = sshll.u32 [#allocation7], 4
          %s239 = int_to_ptr.vmem [resolvable:$true] %s238
          %244 = dma.hbm_to_vmem [thread:$0]  %s237, 1024, %s239, [#allocation6], 64, 64, 4
        $region24: #{tpu_custom_call.1} parent=11 // pred_fallthru
          _
        // Predicated region
        $region25: #{tpu_custom_call.1} parent=11 // pred_check
          %p245 = pneg %p131
        $region26: #{tpu_custom_call.1} parent=11 // pred_check_branch
          %247 = sbr.rel (%p245) target = $region28
        $region27: #{tpu_custom_call.1} parent=11 // pred_region
          _
        $region28: #{tpu_custom_call.1} parent=11 // pred_fallthru
          _
        // Predicated region
        $region29: #{tpu_custom_call.1} parent=11 // pred_check
          %p248 = pneg %p152
        $region30: #{tpu_custom_call.1} parent=11 // pred_check_branch
          %250 = sbr.rel (%p248) target = $region32
        $region31: #{tpu_custom_call.1} parent=11 // pred_region
          %252 = vsyncadd [#allocation9], 0
          %s253 = sshll.u32 %s5, 4
          %s254 = int_to_ptr.hbm [resolvable:$true] %s253
          %s255 = sshll.u32 [#allocation8], 4
          %s256 = int_to_ptr.vmem [resolvable:$true] %s255
          %261 = dma.hbm_to_vmem [thread:$0]  %s254, 1024, %s256, [#allocation9], 64, 64, 4
        $region32: #{tpu_custom_call.1} parent=11 // pred_fallthru
          _
        // Predicated region
        $region33: #{tpu_custom_call.1} parent=11 // pred_check
          %p262 = pneg %p173
        $region34: #{tpu_custom_call.1} parent=11 // pred_check_branch
          %264 = sbr.rel (%p262) target = $region36
        $region35: #{tpu_custom_call.1} parent=11 // pred_region
          _
        $region36: #{tpu_custom_call.1} parent=11 // pred_fallthru
          _
      $region12: #{tpu_custom_call.1} parent=5 // pred_fallthru
        _
      %p265 = scmp.lt.s32.totalorder %s21, 2
      // Predicated region
      $region37: #{tpu_custom_call.1} parent=5 // pred_check
        %p266 = pneg %p265
      $region38: #{tpu_custom_call.1} parent=5 // pred_check_branch
        %268 = sbr.rel (%p266) target = $region40
      $region39: #{tpu_custom_call.1} parent=5 // pred_region
        // Predicated region
        $region41: #{tpu_custom_call.1} parent=39 // pred_check
          %p269 = pneg %p41
        $region42: #{tpu_custom_call.1} parent=39 // pred_check_branch
          %271 = sbr.rel (%p269) target = $region44
        $region43: #{tpu_custom_call.1} parent=39 // pred_region
          %s272 = sand.u32 %s31, 1
          %s273 = scalar_lea.sflag [#allocation3], %s272
          %s274 = sand.u32 %s31, 1
          %s275 = smul.addr %s274, 128
          %s276 = scalar_lea.vmem [#allocation2], %s275
          %s277 = smul.u32 32, %s21
          %279 = vsyncadd %s273, 0
          %s280 = smul.addr %s277, 4
          %s281 = scalar_lea.hbm %s0, %s280
          %s282 = sshll.u32 %s281, 4
          %s283 = int_to_ptr.hbm [resolvable:$true] %s282
          %s284 = sshll.u32 %s276, 4
          %s285 = int_to_ptr.vmem [resolvable:$true] %s284
          %290 = dma.hbm_to_vmem [thread:$0]  %s283, 2048, %s285, %s273, 64, 64, 4
        $region44: #{tpu_custom_call.1} parent=39 // pred_fallthru
          _
      $region40: #{tpu_custom_call.1} parent=5 // pred_fallthru
        _
      %p291 = scmp.le.s32.totalorder 1, %s21
      %p292 = scmp.lt.s32.totalorder %s21, 3
      %p293 = pnand %p291, %p292
      %p294 = pneg %p293
      // Predicated region
      $region45: #{tpu_custom_call.1} parent=5 // pred_check
        _
      $region46: #{tpu_custom_call.1} parent=5 // pred_check_branch
        %296 = sbr.rel (%p293) target = $region48
      $region47: #{tpu_custom_call.1} parent=5 // pred_region
        %s297 = ssub.s32 %s21, 1
        %s298 = sand.u32 %s34, 1
        %s299 = scalar_lea.sflag [#allocation3], %s298
        %s300 = sand.u32 %s34, 1
        %s301 = smul.addr %s300, 128
        %s302 = scalar_lea.vmem [#allocation2], %s301
        // Predicated region
        $region49: #{tpu_custom_call.1} parent=47 // pred_check
          %p303 = pneg %p47
        $region50: #{tpu_custom_call.1} parent=47 // pred_check_branch
          %305 = sbr.rel (%p303) target = $region52
        $region51: #{tpu_custom_call.1} parent=47 // pred_region
          %307 = dma.done %s299, 2048
        $region52: #{tpu_custom_call.1} parent=47 // pred_fallthru
          _
        // Predicated region
        $region53: #{tpu_custom_call.1} parent=47 // pred_check
          %p308 = pneg %p68
        $region54: #{tpu_custom_call.1} parent=47 // pred_check_branch
          %310 = sbr.rel (%p308) target = $region56
        $region55: #{tpu_custom_call.1} parent=47 // pred_region
          %312 = dma.done [#allocation6], 1024
        $region56: #{tpu_custom_call.1} parent=47 // pred_fallthru
          _
        // Predicated region
        $region57: #{tpu_custom_call.1} parent=47 // pred_check
          %p313 = pneg %p110
        $region58: #{tpu_custom_call.1} parent=47 // pred_check_branch
          %315 = sbr.rel (%p313) target = $region60
        $region59: #{tpu_custom_call.1} parent=47 // pred_region
          %317 = dma.done [#allocation6], 1024
        $region60: #{tpu_custom_call.1} parent=47 // pred_fallthru
          _
        // Predicated region
        $region61: #{tpu_custom_call.1} parent=47 // pred_check
          %p318 = pneg %p152
        $region62: #{tpu_custom_call.1} parent=47 // pred_check_branch
          %320 = sbr.rel (%p318) target = $region64
        $region63: #{tpu_custom_call.1} parent=47 // pred_region
          %322 = dma.done [#allocation9], 1024
        $region64: #{tpu_custom_call.1} parent=47 // pred_fallthru
          _
        %s323 = sand.u32 %s34, 1
        %s324 = scalar_lea.sflag [#allocation3], %s323
        %s325 = sand.u32 %s34, 1
        %s326 = smul.addr %s325, 128
        %s327 = scalar_lea.vmem [#allocation2], %s326
        %p328 = pneg %p47
        %p329 = pneg %p44
        %p330 = pneg %p68
        %p331 = pneg %p65
        %p332 = pneg %p89
        %p333 = pneg %p86
        %p334 = pneg %p110
        %p335 = pneg %p107
        %p336 = pneg %p131
        %p337 = pneg %p128
        %p338 = pneg %p152
        %p339 = pneg %p149
        %p340 = pneg %p173
        %p341 = pneg %p170
        %p342 = pneg %p199
        %p343 = pneg %p196
        %s344 = sand.u32 %s186, 1
        %s345 = scalar_lea.sflag [#allocation4], %s344
        %s346 = sand.u32 %s186, 1
        %s347 = smul.addr %s346, 256
        %s348 = scalar_lea.vmem [#allocation10], %s347
        %s349 = smul.u32 32, %s26
        %s350 = smul.u32 32, %s26
        %v351 = vld [vmem:[%s302] sm:$0xf]
        %v352 = vld [vmem:[%s302 + $0x4] sm:$0xf]
        %v353 = vld [vmem:[%s302 + $0x8] sm:$0xf]
        %v354 = vld [vmem:[%s302 + $0xc] sm:$0xf]
        %v355 = vld [vmem:[%s302 + $0x10] sm:$0xf]
        %v356 = vld [vmem:[%s302 + $0x14] sm:$0xf]
        %v357 = vld [vmem:[%s302 + $0x18] sm:$0xf]
        %v358 = vld [vmem:[%s302 + $0x1c] sm:$0xf]
        %v359 = vld [vmem:[%s302 + $0x20] sm:$0xf]
        %v360 = vld [vmem:[%s302 + $0x24] sm:$0xf]
        %v361 = vld [vmem:[%s302 + $0x28] sm:$0xf]
        %v362 = vld [vmem:[%s302 + $0x2c] sm:$0xf]
        %v363 = vld [vmem:[%s302 + $0x30] sm:$0xf]
        %v364 = vld [vmem:[%s302 + $0x34] sm:$0xf]
        %v365 = vld [vmem:[%s302 + $0x38] sm:$0xf]
        %v366 = vld [vmem:[%s302 + $0x3c] sm:$0xf]
        %v367 = vld [vmem:[%s302 + $0x40] sm:$0xf]
        %v368 = vld [vmem:[%s302 + $0x44] sm:$0xf]
        %v369 = vld [vmem:[%s302 + $0x48] sm:$0xf]
        %v370 = vld [vmem:[%s302 + $0x4c] sm:$0xf]
        %v371 = vld [vmem:[%s302 + $0x50] sm:$0xf]
        %v372 = vld [vmem:[%s302 + $0x54] sm:$0xf]
        %v373 = vld [vmem:[%s302 + $0x58] sm:$0xf]
        %v374 = vld [vmem:[%s302 + $0x5c] sm:$0xf]
        %v375 = vld [vmem:[%s302 + $0x60] sm:$0xf]
        %v376 = vld [vmem:[%s302 + $0x64] sm:$0xf]
        %v377 = vld [vmem:[%s302 + $0x68] sm:$0xf]
        %v378 = vld [vmem:[%s302 + $0x6c] sm:$0xf]
        %v379 = vld [vmem:[%s302 + $0x70] sm:$0xf]
        %v380 = vld [vmem:[%s302 + $0x74] sm:$0xf]
        %v381 = vld [vmem:[%s302 + $0x78] sm:$0xf]
        %v382 = vld [vmem:[%s302 + $0x7c] sm:$0xf]
        %v383 = vld [vmem:[#allocation5] sm:$0xf]
        %v384 = vld [vmem:[#allocation5 + $0x4] sm:$0xf]
        %v385 = vld [vmem:[#allocation5 + $0x8] sm:$0xf]
        %v386 = vld [vmem:[#allocation5 + $0xc] sm:$0xf]
        %v387 = vld [vmem:[#allocation5 + $0x10] sm:$0xf]
        %v388 = vld [vmem:[#allocation5 + $0x14] sm:$0xf]
        %v389 = vld [vmem:[#allocation5 + $0x18] sm:$0xf]
        %v390 = vld [vmem:[#allocation5 + $0x1c] sm:$0xf]
        %v391 = vld [vmem:[#allocation5 + $0x20] sm:$0xf]
        %v392 = vld [vmem:[#allocation5 + $0x24] sm:$0xf]
        %v393 = vld [vmem:[#allocation5 + $0x28] sm:$0xf]
        %v394 = vld [vmem:[#allocation5 + $0x2c] sm:$0xf]
        %v395 = vld [vmem:[#allocation5 + $0x30] sm:$0xf]
        %v396 = vld [vmem:[#allocation5 + $0x34] sm:$0xf]
        %v397 = vld [vmem:[#allocation5 + $0x38] sm:$0xf]
        %v398 = vld [vmem:[#allocation5 + $0x3c] sm:$0xf]
        %v399 = vld [vmem:[%s2] sm:$0x1]
        %v401 = vperm.slane %v399, 0
        %v435 = vunpack.c.l.b16 %v351
        %v436 = vunpack.c.l.b16 %v352
        %v437 = vunpack.c.l.b16 %v353
        %v438 = vunpack.c.l.b16 %v354
        %v439 = vunpack.c.l.b16 %v355
        %v440 = vunpack.c.l.b16 %v356
        %v441 = vunpack.c.l.b16 %v357
        %v442 = vunpack.c.l.b16 %v358
        %v443 = vunpack.c.l.b16 %v359
        %v444 = vunpack.c.l.b16 %v360
        %v445 = vunpack.c.l.b16 %v361
        %v446 = vunpack.c.l.b16 %v362
        %v447 = vunpack.c.l.b16 %v363
        %v448 = vunpack.c.l.b16 %v364
        %v449 = vunpack.c.l.b16 %v365
        %v450 = vunpack.c.l.b16 %v366
        %v451 = vunpack.c.l.b16 %v367
        %v452 = vunpack.c.l.b16 %v368
        %v453 = vunpack.c.l.b16 %v369
        %v454 = vunpack.c.l.b16 %v370
        %v455 = vunpack.c.l.b16 %v371
        %v456 = vunpack.c.l.b16 %v372
        %v457 = vunpack.c.l.b16 %v373
        %v458 = vunpack.c.l.b16 %v374
        %v459 = vunpack.c.l.b16 %v375
        %v460 = vunpack.c.l.b16 %v376
        %v461 = vunpack.c.l.b16 %v377
        %v462 = vunpack.c.l.b16 %v378
        %v463 = vunpack.c.l.b16 %v379
        %v464 = vunpack.c.l.b16 %v380
        %v465 = vunpack.c.l.b16 %v381
        %v466 = vunpack.c.l.b16 %v382
        %v467 = vpack.c.b16 %v436, %v435
        %v468 = vpack.c.b16 %v438, %v437
        %v469 = vpack.c.b16 %v440, %v439
        %v470 = vpack.c.b16 %v442, %v441
        %v471 = vpack.c.b16 %v444, %v443
        %v472 = vpack.c.b16 %v446, %v445
        %v473 = vpack.c.b16 %v448, %v447
        %v474 = vpack.c.b16 %v450, %v449
        %v475 = vpack.c.b16 %v452, %v451
        %v476 = vpack.c.b16 %v454, %v453
        %v477 = vpack.c.b16 %v456, %v455
        %v478 = vpack.c.b16 %v458, %v457
        %v479 = vpack.c.b16 %v460, %v459
        %v480 = vpack.c.b16 %v462, %v461
        %v481 = vpack.c.b16 %v464, %v463
        %v482 = vpack.c.b16 %v466, %v465
        %v515 = vunpack.c.l.b16 %v383
        %v516 = vunpack.c.l.b16 %v384
        %v517 = vunpack.c.l.b16 %v385
        %v518 = vunpack.c.l.b16 %v386
        %v519 = vunpack.c.l.b16 %v387
        %v520 = vunpack.c.l.b16 %v388
        %v521 = vunpack.c.l.b16 %v389
        %v522 = vunpack.c.l.b16 %v390
        %v523 = vunpack.c.l.b16 %v391
        %v524 = vunpack.c.l.b16 %v392
        %v525 = vunpack.c.l.b16 %v393
        %v526 = vunpack.c.l.b16 %v394
        %v527 = vunpack.c.l.b16 %v395
        %v528 = vunpack.c.l.b16 %v396
        %v529 = vunpack.c.l.b16 %v397
        %v530 = vunpack.c.l.b16 %v398
        %v531 = vpack.c.b16 %v516, %v515
        %v532 = vpack.c.b16 %v518, %v517
        %v533 = vpack.c.b16 %v520, %v519
        %v534 = vpack.c.b16 %v522, %v521
        %v535 = vpack.c.b16 %v524, %v523
        %v536 = vpack.c.b16 %v526, %v525
        %v537 = vpack.c.b16 %v528, %v527
        %v538 = vpack.c.b16 %v530, %v529
        %547 = vmatpush.bf16.msra.mxu0 %v538
        %548 = vmatpush.bf16.msra.mxu0 %v537
        %549 = vmatpush.bf16.msra.mxu0 %v536
        %550 = vmatpush.bf16.msra.mxu0 %v535
        %551 = vmatpush.bf16.msra.mxu0 %v534
        %552 = vmatpush.bf16.msra.mxu0 %v533
        %553 = vmatpush.bf16.msra.mxu0 %v532
        %554 = vmatpush.bf16.msra.mxu0 %v531
        %555 = vmatmul.bf16.gmra.mxu0 %v467
        %v556 = vpop.f32.mrf.mxu0
        %v557 = vadd.f32 %v401, %v556
        %v558 = vpop.f32.mrf.mxu0
        %v559 = vadd.f32 %v401, %v558
        %560 = vmatmul.bf16.gmra.mxu0 %v468
        %v561 = vpop.f32.mrf.mxu0
        %v562 = vadd.f32 %v401, %v561
        %v563 = vpop.f32.mrf.mxu0
        %v564 = vadd.f32 %v401, %v563
        %565 = vmatmul.bf16.gmra.mxu0 %v469
        %v566 = vpop.f32.mrf.mxu0
        %v567 = vadd.f32 %v401, %v566
        %v568 = vpop.f32.mrf.mxu0
        %v569 = vadd.f32 %v401, %v568
        %570 = vmatmul.bf16.gmra.mxu0 %v470
        %v571 = vpop.f32.mrf.mxu0
        %v572 = vadd.f32 %v401, %v571
        %v573 = vpop.f32.mrf.mxu0
        %v574 = vadd.f32 %v401, %v573
        %575 = vmatmul.bf16.gmra.mxu0 %v471
        %v576 = vpop.f32.mrf.mxu0
        %v577 = vadd.f32 %v401, %v576
        %v578 = vpop.f32.mrf.mxu0
        %v579 = vadd.f32 %v401, %v578
        %580 = vmatmul.bf16.gmra.mxu0 %v472
        %v581 = vpop.f32.mrf.mxu0
        %v582 = vadd.f32 %v401, %v581
        %v583 = vpop.f32.mrf.mxu0
        %v584 = vadd.f32 %v401, %v583
        %585 = vmatmul.bf16.gmra.mxu0 %v473
        %v586 = vpop.f32.mrf.mxu0
        %v587 = vadd.f32 %v401, %v586
        %v588 = vpop.f32.mrf.mxu0
        %v589 = vadd.f32 %v401, %v588
        %590 = vmatmul.bf16.gmra.mxu0 %v474
        %v591 = vpop.f32.mrf.mxu0
        %v592 = vadd.f32 %v401, %v591
        %v593 = vpop.f32.mrf.mxu0
        %v594 = vadd.f32 %v401, %v593
        %595 = vmatmul.bf16.gmra.mxu0 %v475
        %v596 = vpop.f32.mrf.mxu0
        %v597 = vadd.f32 %v401, %v596
        %v598 = vpop.f32.mrf.mxu0
        %v599 = vadd.f32 %v401, %v598
        %600 = vmatmul.bf16.gmra.mxu0 %v476
        %v601 = vpop.f32.mrf.mxu0
        %v602 = vadd.f32 %v401, %v601
        %v603 = vpop.f32.mrf.mxu0
        %v604 = vadd.f32 %v401, %v603
        %605 = vmatmul.bf16.gmra.mxu0 %v477
        %v606 = vpop.f32.mrf.mxu0
        %v607 = vadd.f32 %v401, %v606
        %v608 = vpop.f32.mrf.mxu0
        %v609 = vadd.f32 %v401, %v608
        %610 = vmatmul.bf16.gmra.mxu0 %v478
        %v611 = vpop.f32.mrf.mxu0
        %v612 = vadd.f32 %v401, %v611
        %v613 = vpop.f32.mrf.mxu0
        %v614 = vadd.f32 %v401, %v613
        %615 = vmatmul.bf16.gmra.mxu0 %v479
        %v616 = vpop.f32.mrf.mxu0
        %v617 = vadd.f32 %v401, %v616
        %v618 = vpop.f32.mrf.mxu0
        %v619 = vadd.f32 %v401, %v618
        %620 = vmatmul.bf16.gmra.mxu0 %v480
        %v621 = vpop.f32.mrf.mxu0
        %v622 = vadd.f32 %v401, %v621
        %v623 = vpop.f32.mrf.mxu0
        %v624 = vadd.f32 %v401, %v623
        %625 = vmatmul.bf16.gmra.mxu0 %v481
        %v626 = vpop.f32.mrf.mxu0
        %v627 = vadd.f32 %v401, %v626
        %v628 = vpop.f32.mrf.mxu0
        %v629 = vadd.f32 %v401, %v628
        %630 = vmatmul.bf16.gmra.mxu0 %v482
        %v631 = vpop.f32.mrf.mxu0
        %v632 = vadd.f32 %v401, %v631
        %v633 = vpop.f32.mrf.mxu0
        %v634 = vadd.f32 %v401, %v633
        %635 = vdwg.mxu0
        %v636 = vmax.f32 %v557, 0.0
        %v637 = vmax.f32 %v559, 0.0
        %v638 = vmax.f32 %v562, 0.0
        %v639 = vmax.f32 %v564, 0.0
        %v640 = vmax.f32 %v567, 0.0
        %v641 = vmax.f32 %v569, 0.0
        %v642 = vmax.f32 %v572, 0.0
        %v643 = vmax.f32 %v574, 0.0
        %v644 = vmax.f32 %v577, 0.0
        %v645 = vmax.f32 %v579, 0.0
        %v646 = vmax.f32 %v582, 0.0
        %v647 = vmax.f32 %v584, 0.0
        %v648 = vmax.f32 %v587, 0.0
        %v649 = vmax.f32 %v589, 0.0
        %v650 = vmax.f32 %v592, 0.0
        %v651 = vmax.f32 %v594, 0.0
        %v652 = vmax.f32 %v597, 0.0
        %v653 = vmax.f32 %v599, 0.0
        %v654 = vmax.f32 %v602, 0.0
        %v655 = vmax.f32 %v604, 0.0
        %v656 = vmax.f32 %v607, 0.0
        %v657 = vmax.f32 %v609, 0.0
        %v658 = vmax.f32 %v612, 0.0
        %v659 = vmax.f32 %v614, 0.0
        %v660 = vmax.f32 %v617, 0.0
        %v661 = vmax.f32 %v619, 0.0
        %v662 = vmax.f32 %v622, 0.0
        %v663 = vmax.f32 %v624, 0.0
        %v664 = vmax.f32 %v627, 0.0
        %v665 = vmax.f32 %v629, 0.0
        %v666 = vmax.f32 %v632, 0.0
        %v667 = vmax.f32 %v634, 0.0
        %v668 = vpack.c.bf16 %v637, %v636
        %v669 = vpack.c.bf16 %v639, %v638
        %v670 = vpack.c.bf16 %v641, %v640
        %v671 = vpack.c.bf16 %v643, %v642
        %v672 = vpack.c.bf16 %v645, %v644
        %v673 = vpack.c.bf16 %v647, %v646
        %v674 = vpack.c.bf16 %v649, %v648
        %v675 = vpack.c.bf16 %v651, %v650
        %v676 = vpack.c.bf16 %v653, %v652
        %v677 = vpack.c.bf16 %v655, %v654
        %v678 = vpack.c.bf16 %v657, %v656
        %v679 = vpack.c.bf16 %v659, %v658
        %v680 = vpack.c.bf16 %v661, %v660
        %v681 = vpack.c.bf16 %v663, %v662
        %v682 = vpack.c.bf16 %v665, %v664
        %v683 = vpack.c.bf16 %v667, %v666
        %v684 = vld [vmem:[#allocation7] sm:$0xf]
        %v685 = vld [vmem:[#allocation7 + $0x4] sm:$0xf]
        %v686 = vld [vmem:[#allocation7 + $0x8] sm:$0xf]
        %v687 = vld [vmem:[#allocation7 + $0xc] sm:$0xf]
        %v688 = vld [vmem:[#allocation7 + $0x10] sm:$0xf]
        %v689 = vld [vmem:[#allocation7 + $0x14] sm:$0xf]
        %v690 = vld [vmem:[#allocation7 + $0x18] sm:$0xf]
        %v691 = vld [vmem:[#allocation7 + $0x1c] sm:$0xf]
        %v692 = vld [vmem:[#allocation7 + $0x20] sm:$0xf]
        %v693 = vld [vmem:[#allocation7 + $0x24] sm:$0xf]
        %v694 = vld [vmem:[#allocation7 + $0x28] sm:$0xf]
        %v695 = vld [vmem:[#allocation7 + $0x2c] sm:$0xf]
        %v696 = vld [vmem:[#allocation7 + $0x30] sm:$0xf]
        %v697 = vld [vmem:[#allocation7 + $0x34] sm:$0xf]
        %v698 = vld [vmem:[#allocation7 + $0x38] sm:$0xf]
        %v699 = vld [vmem:[#allocation7 + $0x3c] sm:$0xf]
        %v700 = vld [vmem:[%s4] sm:$0x1]
        %v702 = vperm.slane %v700, 0
        %v720 = vunpack.c.l.b16 %v684
        %v721 = vunpack.c.l.b16 %v685
        %v722 = vunpack.c.l.b16 %v686
        %v723 = vunpack.c.l.b16 %v687
        %v724 = vunpack.c.l.b16 %v688
        %v725 = vunpack.c.l.b16 %v689
        %v726 = vunpack.c.l.b16 %v690
        %v727 = vunpack.c.l.b16 %v691
        %v728 = vunpack.c.l.b16 %v692
        %v729 = vunpack.c.l.b16 %v693
        %v730 = vunpack.c.l.b16 %v694
        %v731 = vunpack.c.l.b16 %v695
        %v732 = vunpack.c.l.b16 %v696
        %v733 = vunpack.c.l.b16 %v697
        %v734 = vunpack.c.l.b16 %v698
        %v735 = vunpack.c.l.b16 %v699
        %v736 = vpack.c.b16 %v721, %v720
        %v737 = vpack.c.b16 %v723, %v722
        %v738 = vpack.c.b16 %v725, %v724
        %v739 = vpack.c.b16 %v727, %v726
        %v740 = vpack.c.b16 %v729, %v728
        %v741 = vpack.c.b16 %v731, %v730
        %v742 = vpack.c.b16 %v733, %v732
        %v743 = vpack.c.b16 %v735, %v734
        %752 = vmatpush.bf16.msra.mxu0 %v743
        %753 = vmatpush.bf16.msra.mxu0 %v742
        %754 = vmatpush.bf16.msra.mxu0 %v741
        %755 = vmatpush.bf16.msra.mxu0 %v740
        %756 = vmatpush.bf16.msra.mxu0 %v739
        %757 = vmatpush.bf16.msra.mxu0 %v738
        %758 = vmatpush.bf16.msra.mxu0 %v737
        %759 = vmatpush.bf16.msra.mxu0 %v736
        %760 = vmatmul.bf16.gmra.mxu0 %v668
        %v761 = vpop.f32.mrf.mxu0
        %v762 = vadd.f32 %v702, %v761
        %v763 = vpop.f32.mrf.mxu0
        %v764 = vadd.f32 %v702, %v763
        %765 = vmatmul.bf16.gmra.mxu0 %v669
        %v766 = vpop.f32.mrf.mxu0
        %v767 = vadd.f32 %v702, %v766
        %v768 = vpop.f32.mrf.mxu0
        %v769 = vadd.f32 %v702, %v768
        %770 = vmatmul.bf16.gmra.mxu0 %v670
        %v771 = vpop.f32.mrf.mxu0
        %v772 = vadd.f32 %v702, %v771
        %v773 = vpop.f32.mrf.mxu0
        %v774 = vadd.f32 %v702, %v773
        %775 = vmatmul.bf16.gmra.mxu0 %v671
        %v776 = vpop.f32.mrf.mxu0
        %v777 = vadd.f32 %v702, %v776
        %v778 = vpop.f32.mrf.mxu0
        %v779 = vadd.f32 %v702, %v778
        %780 = vmatmul.bf16.gmra.mxu0 %v672
        %v781 = vpop.f32.mrf.mxu0
        %v782 = vadd.f32 %v702, %v781
        %v783 = vpop.f32.mrf.mxu0
        %v784 = vadd.f32 %v702, %v783
        %785 = vmatmul.bf16.gmra.mxu0 %v673
        %v786 = vpop.f32.mrf.mxu0
        %v787 = vadd.f32 %v702, %v786
        %v788 = vpop.f32.mrf.mxu0
        %v789 = vadd.f32 %v702, %v788
        %790 = vmatmul.bf16.gmra.mxu0 %v674
        %v791 = vpop.f32.mrf.mxu0
        %v792 = vadd.f32 %v702, %v791
        %v793 = vpop.f32.mrf.mxu0
        %v794 = vadd.f32 %v702, %v793
        %795 = vmatmul.bf16.gmra.mxu0 %v675
        %v796 = vpop.f32.mrf.mxu0
        %v797 = vadd.f32 %v702, %v796
        %v798 = vpop.f32.mrf.mxu0
        %v799 = vadd.f32 %v702, %v798
        %800 = vmatmul.bf16.gmra.mxu0 %v676
        %v801 = vpop.f32.mrf.mxu0
        %v802 = vadd.f32 %v702, %v801
        %v803 = vpop.f32.mrf.mxu0
        %v804 = vadd.f32 %v702, %v803
        %805 = vmatmul.bf16.gmra.mxu0 %v677
        %v806 = vpop.f32.mrf.mxu0
        %v807 = vadd.f32 %v702, %v806
        %v808 = vpop.f32.mrf.mxu0
        %v809 = vadd.f32 %v702, %v808
        %810 = vmatmul.bf16.gmra.mxu0 %v678
        %v811 = vpop.f32.mrf.mxu0
        %v812 = vadd.f32 %v702, %v811
        %v813 = vpop.f32.mrf.mxu0
        %v814 = vadd.f32 %v702, %v813
        %815 = vmatmul.bf16.gmra.mxu0 %v679
        %v816 = vpop.f32.mrf.mxu0
        %v817 = vadd.f32 %v702, %v816
        %v818 = vpop.f32.mrf.mxu0
        %v819 = vadd.f32 %v702, %v818
        %820 = vmatmul.bf16.gmra.mxu0 %v680
        %v821 = vpop.f32.mrf.mxu0
        %v822 = vadd.f32 %v702, %v821
        %v823 = vpop.f32.mrf.mxu0
        %v824 = vadd.f32 %v702, %v823
        %825 = vmatmul.bf16.gmra.mxu0 %v681
        %v826 = vpop.f32.mrf.mxu0
        %v827 = vadd.f32 %v702, %v826
        %v828 = vpop.f32.mrf.mxu0
        %v829 = vadd.f32 %v702, %v828
        %830 = vmatmul.bf16.gmra.mxu0 %v682
        %v831 = vpop.f32.mrf.mxu0
        %v832 = vadd.f32 %v702, %v831
        %v833 = vpop.f32.mrf.mxu0
        %v834 = vadd.f32 %v702, %v833
        %835 = vmatmul.bf16.gmra.mxu0 %v683
        %v836 = vpop.f32.mrf.mxu0
        %v837 = vadd.f32 %v702, %v836
        %v838 = vpop.f32.mrf.mxu0
        %v839 = vadd.f32 %v702, %v838
        %840 = vdwg.mxu0
        %v841 = vmax.f32 %v762, 0.0
        %v842 = vmax.f32 %v764, 0.0
        %v843 = vmax.f32 %v767, 0.0
        %v844 = vmax.f32 %v769, 0.0
        %v845 = vmax.f32 %v772, 0.0
        %v846 = vmax.f32 %v774, 0.0
        %v847 = vmax.f32 %v777, 0.0
        %v848 = vmax.f32 %v779, 0.0
        %v849 = vmax.f32 %v782, 0.0
        %v850 = vmax.f32 %v784, 0.0
        %v851 = vmax.f32 %v787, 0.0
        %v852 = vmax.f32 %v789, 0.0
        %v853 = vmax.f32 %v792, 0.0
        %v854 = vmax.f32 %v794, 0.0
        %v855 = vmax.f32 %v797, 0.0
        %v856 = vmax.f32 %v799, 0.0
        %v857 = vmax.f32 %v802, 0.0
        %v858 = vmax.f32 %v804, 0.0
        %v859 = vmax.f32 %v807, 0.0
        %v860 = vmax.f32 %v809, 0.0
        %v861 = vmax.f32 %v812, 0.0
        %v862 = vmax.f32 %v814, 0.0
        %v863 = vmax.f32 %v817, 0.0
        %v864 = vmax.f32 %v819, 0.0
        %v865 = vmax.f32 %v822, 0.0
        %v866 = vmax.f32 %v824, 0.0
        %v867 = vmax.f32 %v827, 0.0
        %v868 = vmax.f32 %v829, 0.0
        %v869 = vmax.f32 %v832, 0.0
        %v870 = vmax.f32 %v834, 0.0
        %v871 = vmax.f32 %v837, 0.0
        %v872 = vmax.f32 %v839, 0.0
        %v873 = vpack.c.bf16 %v842, %v841
        %v874 = vpack.c.bf16 %v844, %v843
        %v875 = vpack.c.bf16 %v846, %v845
        %v876 = vpack.c.bf16 %v848, %v847
        %v877 = vpack.c.bf16 %v850, %v849
        %v878 = vpack.c.bf16 %v852, %v851
        %v879 = vpack.c.bf16 %v854, %v853
        %v880 = vpack.c.bf16 %v856, %v855
        %v881 = vpack.c.bf16 %v858, %v857
        %v882 = vpack.c.bf16 %v860, %v859
        %v883 = vpack.c.bf16 %v862, %v861
        %v884 = vpack.c.bf16 %v864, %v863
        %v885 = vpack.c.bf16 %v866, %v865
        %v886 = vpack.c.bf16 %v868, %v867
        %v887 = vpack.c.bf16 %v870, %v869
        %v888 = vpack.c.bf16 %v872, %v871
        %v889 = vld [vmem:[#allocation8] sm:$0xf]
        %v890 = vld [vmem:[#allocation8 + $0x4] sm:$0xf]
        %v891 = vld [vmem:[#allocation8 + $0x8] sm:$0xf]
        %v892 = vld [vmem:[#allocation8 + $0xc] sm:$0xf]
        %v893 = vld [vmem:[#allocation8 + $0x10] sm:$0xf]
        %v894 = vld [vmem:[#allocation8 + $0x14] sm:$0xf]
        %v895 = vld [vmem:[#allocation8 + $0x18] sm:$0xf]
        %v896 = vld [vmem:[#allocation8 + $0x1c] sm:$0xf]
        %v897 = vld [vmem:[#allocation8 + $0x20] sm:$0xf]
        %v898 = vld [vmem:[#allocation8 + $0x24] sm:$0xf]
        %v899 = vld [vmem:[#allocation8 + $0x28] sm:$0xf]
        %v900 = vld [vmem:[#allocation8 + $0x2c] sm:$0xf]
        %v901 = vld [vmem:[#allocation8 + $0x30] sm:$0xf]
        %v902 = vld [vmem:[#allocation8 + $0x34] sm:$0xf]
        %v903 = vld [vmem:[#allocation8 + $0x38] sm:$0xf]
        %v904 = vld [vmem:[#allocation8 + $0x3c] sm:$0xf]
        %v905 = vld [vmem:[%s6] sm:$0x1]
        %v907 = vperm.slane %v905, 0
        %v925 = vunpack.c.l.b16 %v889
        %v926 = vunpack.c.l.b16 %v890
        %v927 = vunpack.c.l.b16 %v891
        %v928 = vunpack.c.l.b16 %v892
        %v929 = vunpack.c.l.b16 %v893
        %v930 = vunpack.c.l.b16 %v894
        %v931 = vunpack.c.l.b16 %v895
        %v932 = vunpack.c.l.b16 %v896
        %v933 = vunpack.c.l.b16 %v897
        %v934 = vunpack.c.l.b16 %v898
        %v935 = vunpack.c.l.b16 %v899
        %v936 = vunpack.c.l.b16 %v900
        %v937 = vunpack.c.l.b16 %v901
        %v938 = vunpack.c.l.b16 %v902
        %v939 = vunpack.c.l.b16 %v903
        %v940 = vunpack.c.l.b16 %v904
        %v941 = vpack.c.b16 %v926, %v925
        %v942 = vpack.c.b16 %v928, %v927
        %v943 = vpack.c.b16 %v930, %v929
        %v944 = vpack.c.b16 %v932, %v931
        %v945 = vpack.c.b16 %v934, %v933
        %v946 = vpack.c.b16 %v936, %v935
        %v947 = vpack.c.b16 %v938, %v937
        %v948 = vpack.c.b16 %v940, %v939
        %957 = vmatpush.bf16.msra.mxu0 %v948
        %958 = vmatpush.bf16.msra.mxu0 %v947
        %959 = vmatpush.bf16.msra.mxu0 %v946
        %960 = vmatpush.bf16.msra.mxu0 %v945
        %961 = vmatpush.bf16.msra.mxu0 %v944
        %962 = vmatpush.bf16.msra.mxu0 %v943
        %963 = vmatpush.bf16.msra.mxu0 %v942
        %964 = vmatpush.bf16.msra.mxu0 %v941
        %965 = vmatmul.bf16.gmra.mxu0 %v873
        %v966 = vpop.f32.mrf.mxu0
        %v967 = vadd.f32 %v907, %v966
        %v968 = vpop.f32.mrf.mxu0
        %v969 = vadd.f32 %v907, %v968
        %970 = vmatmul.bf16.gmra.mxu0 %v874
        %v971 = vpop.f32.mrf.mxu0
        %v972 = vadd.f32 %v907, %v971
        %v973 = vpop.f32.mrf.mxu0
        %v974 = vadd.f32 %v907, %v973
        %975 = vmatmul.bf16.gmra.mxu0 %v875
        %v976 = vpop.f32.mrf.mxu0
        %v977 = vadd.f32 %v907, %v976
        %v978 = vpop.f32.mrf.mxu0
        %v979 = vadd.f32 %v907, %v978
        %980 = vmatmul.bf16.gmra.mxu0 %v876
        %v981 = vpop.f32.mrf.mxu0
        %v982 = vadd.f32 %v907, %v981
        %v983 = vpop.f32.mrf.mxu0
        %v984 = vadd.f32 %v907, %v983
        %985 = vmatmul.bf16.gmra.mxu0 %v877
        %v986 = vpop.f32.mrf.mxu0
        %v987 = vadd.f32 %v907, %v986
        %v988 = vpop.f32.mrf.mxu0
        %v989 = vadd.f32 %v907, %v988
        %990 = vmatmul.bf16.gmra.mxu0 %v878
        %v991 = vpop.f32.mrf.mxu0
        %v992 = vadd.f32 %v907, %v991
        %v993 = vpop.f32.mrf.mxu0
        %v994 = vadd.f32 %v907, %v993
        %995 = vmatmul.bf16.gmra.mxu0 %v879
        %v996 = vpop.f32.mrf.mxu0
        %v997 = vadd.f32 %v907, %v996
        %v998 = vpop.f32.mrf.mxu0
        %v999 = vadd.f32 %v907, %v998
        %1000 = vmatmul.bf16.gmra.mxu0 %v880
        %v1001 = vpop.f32.mrf.mxu0
        %v1002 = vadd.f32 %v907, %v1001
        %v1003 = vpop.f32.mrf.mxu0
        %v1004 = vadd.f32 %v907, %v1003
        %1005 = vmatmul.bf16.gmra.mxu0 %v881
        %v1006 = vpop.f32.mrf.mxu0
        %v1007 = vadd.f32 %v907, %v1006
        %v1008 = vpop.f32.mrf.mxu0
        %v1009 = vadd.f32 %v907, %v1008
        %1010 = vmatmul.bf16.gmra.mxu0 %v882
        %v1011 = vpop.f32.mrf.mxu0
        %v1012 = vadd.f32 %v907, %v1011
        %v1013 = vpop.f32.mrf.mxu0
        %v1014 = vadd.f32 %v907, %v1013
        %1015 = vmatmul.bf16.gmra.mxu0 %v883
        %v1016 = vpop.f32.mrf.mxu0
        %v1017 = vadd.f32 %v907, %v1016
        %v1018 = vpop.f32.mrf.mxu0
        %v1019 = vadd.f32 %v907, %v1018
        %1020 = vmatmul.bf16.gmra.mxu0 %v884
        %v1021 = vpop.f32.mrf.mxu0
        %v1022 = vadd.f32 %v907, %v1021
        %v1023 = vpop.f32.mrf.mxu0
        %v1024 = vadd.f32 %v907, %v1023
        %1025 = vmatmul.bf16.gmra.mxu0 %v885
        %v1026 = vpop.f32.mrf.mxu0
        %v1027 = vadd.f32 %v907, %v1026
        %v1028 = vpop.f32.mrf.mxu0
        %v1029 = vadd.f32 %v907, %v1028
        %1030 = vmatmul.bf16.gmra.mxu0 %v886
        %v1031 = vpop.f32.mrf.mxu0
        %v1032 = vadd.f32 %v907, %v1031
        %v1033 = vpop.f32.mrf.mxu0
        %v1034 = vadd.f32 %v907, %v1033
        %1035 = vmatmul.bf16.gmra.mxu0 %v887
        %v1036 = vpop.f32.mrf.mxu0
        %v1037 = vadd.f32 %v907, %v1036
        %v1038 = vpop.f32.mrf.mxu0
        %v1039 = vadd.f32 %v907, %v1038
        %1040 = vmatmul.bf16.gmra.mxu0 %v888
        %v1041 = vpop.f32.mrf.mxu0
        %v1042 = vadd.f32 %v907, %v1041
        %v1043 = vpop.f32.mrf.mxu0
        %v1044 = vadd.f32 %v907, %v1043
        %1045 = vdwg.mxu0
        %v1046 = vxor.u32 %v967, 2147483648
        %v1047 = vxor.u32 %v969, 2147483648
        %v1048 = vxor.u32 %v972, 2147483648
        %v1049 = vxor.u32 %v974, 2147483648
        %v1050 = vxor.u32 %v977, 2147483648
        %v1051 = vxor.u32 %v979, 2147483648
        %v1052 = vxor.u32 %v982, 2147483648
        %v1053 = vxor.u32 %v984, 2147483648
        %v1054 = vxor.u32 %v987, 2147483648
        %v1055 = vxor.u32 %v989, 2147483648
        %v1056 = vxor.u32 %v992, 2147483648
        %v1057 = vxor.u32 %v994, 2147483648
        %v1058 = vxor.u32 %v997, 2147483648
        %v1059 = vxor.u32 %v999, 2147483648
        %v1060 = vxor.u32 %v1002, 2147483648
        %v1061 = vxor.u32 %v1004, 2147483648
        %v1062 = vxor.u32 %v1007, 2147483648
        %v1063 = vxor.u32 %v1009, 2147483648
        %v1064 = vxor.u32 %v1012, 2147483648
        %v1065 = vxor.u32 %v1014, 2147483648
        %v1066 = vxor.u32 %v1017, 2147483648
        %v1067 = vxor.u32 %v1019, 2147483648
        %v1068 = vxor.u32 %v1022, 2147483648
        %v1069 = vxor.u32 %v1024, 2147483648
        %v1070 = vxor.u32 %v1027, 2147483648
        %v1071 = vxor.u32 %v1029, 2147483648
        %v1072 = vxor.u32 %v1032, 2147483648
        %v1073 = vxor.u32 %v1034, 2147483648
        %v1074 = vxor.u32 %v1037, 2147483648
        %v1075 = vxor.u32 %v1039, 2147483648
        %v1076 = vxor.u32 %v1042, 2147483648
        %v1077 = vxor.u32 %v1044, 2147483648
        %v1078 = vmul.f32 %v1046, 1.442695
        %v1079 = vpow.pop %v1078
        %v1080 = vmul.f32 %v1047, 1.442695
        %v1081 = vpow.pop %v1080
        %v1082 = vmul.f32 %v1048, 1.442695
        %v1083 = vpow.pop %v1082
        %v1084 = vmul.f32 %v1049, 1.442695
        %v1085 = vpow.pop %v1084
        %v1086 = vmul.f32 %v1050, 1.442695
        %v1087 = vpow.pop %v1086
        %v1088 = vmul.f32 %v1051, 1.442695
        %v1089 = vpow.pop %v1088
        %v1090 = vmul.f32 %v1052, 1.442695
        %v1091 = vpow.pop %v1090
        %v1092 = vmul.f32 %v1053, 1.442695
        %v1093 = vpow.pop %v1092
        %v1094 = vmul.f32 %v1054, 1.442695
        %v1095 = vpow.pop %v1094
        %v1096 = vmul.f32 %v1055, 1.442695
        %v1097 = vpow.pop %v1096
        %v1098 = vmul.f32 %v1056, 1.442695
        %v1099 = vpow.pop %v1098
        %v1100 = vmul.f32 %v1057, 1.442695
        %v1101 = vpow.pop %v1100
        %v1102 = vmul.f32 %v1058, 1.442695
        %v1103 = vpow.pop %v1102
        %v1104 = vmul.f32 %v1059, 1.442695
        %v1105 = vpow.pop %v1104
        %v1106 = vmul.f32 %v1060, 1.442695
        %v1107 = vpow.pop %v1106
        %v1108 = vmul.f32 %v1061, 1.442695
        %v1109 = vpow.pop %v1108
        %v1110 = vmul.f32 %v1062, 1.442695
        %v1111 = vpow.pop %v1110
        %v1112 = vmul.f32 %v1063, 1.442695
        %v1113 = vpow.pop %v1112
        %v1114 = vmul.f32 %v1064, 1.442695
        %v1115 = vpow.pop %v1114
        %v1116 = vmul.f32 %v1065, 1.442695
        %v1117 = vpow.pop %v1116
        %v1118 = vmul.f32 %v1066, 1.442695
        %v1119 = vpow.pop %v1118
        %v1120 = vmul.f32 %v1067, 1.442695
        %v1121 = vpow.pop %v1120
        %v1122 = vmul.f32 %v1068, 1.442695
        %v1123 = vpow.pop %v1122
        %v1124 = vmul.f32 %v1069, 1.442695
        %v1125 = vpow.pop %v1124
        %v1126 = vmul.f32 %v1070, 1.442695
        %v1127 = vpow.pop %v1126
        %v1128 = vmul.f32 %v1071, 1.442695
        %v1129 = vpow.pop %v1128
        %v1130 = vmul.f32 %v1072, 1.442695
        %v1131 = vpow.pop %v1130
        %v1132 = vmul.f32 %v1073, 1.442695
        %v1133 = vpow.pop %v1132
        %v1134 = vmul.f32 %v1074, 1.442695
        %v1135 = vpow.pop %v1134
        %v1136 = vmul.f32 %v1075, 1.442695
        %v1137 = vpow.pop %v1136
        %v1138 = vmul.f32 %v1076, 1.442695
        %v1139 = vpow.pop %v1138
        %v1140 = vmul.f32 %v1077, 1.442695
        %v1141 = vpow.pop %v1140
        %v1142 = vadd.f32 %v1079, 1.0
        %v1143 = vadd.f32 %v1081, 1.0
        %v1144 = vadd.f32 %v1083, 1.0
        %v1145 = vadd.f32 %v1085, 1.0
        %v1146 = vadd.f32 %v1087, 1.0
        %v1147 = vadd.f32 %v1089, 1.0
        %v1148 = vadd.f32 %v1091, 1.0
        %v1149 = vadd.f32 %v1093, 1.0
        %v1150 = vadd.f32 %v1095, 1.0
        %v1151 = vadd.f32 %v1097, 1.0
        %v1152 = vadd.f32 %v1099, 1.0
        %v1153 = vadd.f32 %v1101, 1.0
        %v1154 = vadd.f32 %v1103, 1.0
        %v1155 = vadd.f32 %v1105, 1.0
        %v1156 = vadd.f32 %v1107, 1.0
        %v1157 = vadd.f32 %v1109, 1.0
        %v1158 = vadd.f32 %v1111, 1.0
        %v1159 = vadd.f32 %v1113, 1.0
        %v1160 = vadd.f32 %v1115, 1.0
        %v1161 = vadd.f32 %v1117, 1.0
        %v1162 = vadd.f32 %v1119, 1.0
        %v1163 = vadd.f32 %v1121, 1.0
        %v1164 = vadd.f32 %v1123, 1.0
        %v1165 = vadd.f32 %v1125, 1.0
        %v1166 = vadd.f32 %v1127, 1.0
        %v1167 = vadd.f32 %v1129, 1.0
        %v1168 = vadd.f32 %v1131, 1.0
        %v1169 = vadd.f32 %v1133, 1.0
        %v1170 = vadd.f32 %v1135, 1.0
        %v1171 = vadd.f32 %v1137, 1.0
        %v1172 = vadd.f32 %v1139, 1.0
        %v1173 = vadd.f32 %v1141, 1.0
        %v1174 = vrcp.pop %v1142
        %v1175 = vmul.f32 %v1142, %v1174
        %v1176 = vsub.f32 1.0, %v1175
        %v1177 = vmul.f32 %v1174, %v1176
        %v1178 = vadd.f32 %v1174, %v1177
        %vm1179 = vweird.f32 %v1142
        %vm1180 = vweird.f32 %v1174
        %vm1181 = vmor %vm1179, %vm1180
        %v1182 = vsel %vm1181, %v1174, %v1178
        %v1183 = vand.u32 2147483647, %v1142
        %vm1184 = vcmp.eq.f32.partialorder %v1183, 8.507059e+37
        %v1185 = vand.u32 %v1142, 2147483648
        %v1186 = vor.u32 1.1754944e-38, %v1185
        %v1187 = vsel %vm1184, %v1186, %v1182
        %v1188 = vmul.f32 1.0, %v1187
        %v1189 = vrcp.pop %v1143
        %v1190 = vmul.f32 %v1143, %v1189
        %v1191 = vsub.f32 1.0, %v1190
        %v1192 = vmul.f32 %v1189, %v1191
        %v1193 = vadd.f32 %v1189, %v1192
        %vm1194 = vweird.f32 %v1143
        %vm1195 = vweird.f32 %v1189
        %vm1196 = vmor %vm1194, %vm1195
        %v1197 = vsel %vm1196, %v1189, %v1193
        %v1198 = vand.u32 2147483647, %v1143
        %vm1199 = vcmp.eq.f32.partialorder %v1198, 8.507059e+37
        %v1200 = vand.u32 %v1143, 2147483648
        %v1201 = vor.u32 1.1754944e-38, %v1200
        %v1202 = vsel %vm1199, %v1201, %v1197
        %v1203 = vmul.f32 1.0, %v1202
        %v1204 = vrcp.pop %v1144
        %v1205 = vmul.f32 %v1144, %v1204
        %v1206 = vsub.f32 1.0, %v1205
        %v1207 = vmul.f32 %v1204, %v1206
        %v1208 = vadd.f32 %v1204, %v1207
        %vm1209 = vweird.f32 %v1144
        %vm1210 = vweird.f32 %v1204
        %vm1211 = vmor %vm1209, %vm1210
        %v1212 = vsel %vm1211, %v1204, %v1208
        %v1213 = vand.u32 2147483647, %v1144
        %vm1214 = vcmp.eq.f32.partialorder %v1213, 8.507059e+37
        %v1215 = vand.u32 %v1144, 2147483648
        %v1216 = vor.u32 1.1754944e-38, %v1215
        %v1217 = vsel %vm1214, %v1216, %v1212
        %v1218 = vmul.f32 1.0, %v1217
        %v1219 = vrcp.pop %v1145
        %v1220 = vmul.f32 %v1145, %v1219
        %v1221 = vsub.f32 1.0, %v1220
        %v1222 = vmul.f32 %v1219, %v1221
        %v1223 = vadd.f32 %v1219, %v1222
        %vm1224 = vweird.f32 %v1145
        %vm1225 = vweird.f32 %v1219
        %vm1226 = vmor %vm1224, %vm1225
        %v1227 = vsel %vm1226, %v1219, %v1223
        %v1228 = vand.u32 2147483647, %v1145
        %vm1229 = vcmp.eq.f32.partialorder %v1228, 8.507059e+37
        %v1230 = vand.u32 %v1145, 2147483648
        %v1231 = vor.u32 1.1754944e-38, %v1230
        %v1232 = vsel %vm1229, %v1231, %v1227
        %v1233 = vmul.f32 1.0, %v1232
        %v1234 = vrcp.pop %v1146
        %v1235 = vmul.f32 %v1146, %v1234
        %v1236 = vsub.f32 1.0, %v1235
        %v1237 = vmul.f32 %v1234, %v1236
        %v1238 = vadd.f32 %v1234, %v1237
        %vm1239 = vweird.f32 %v1146
        %vm1240 = vweird.f32 %v1234
        %vm1241 = vmor %vm1239, %vm1240
        %v1242 = vsel %vm1241, %v1234, %v1238
        %v1243 = vand.u32 2147483647, %v1146
        %vm1244 = vcmp.eq.f32.partialorder %v1243, 8.507059e+37
        %v1245 = vand.u32 %v1146, 2147483648
        %v1246 = vor.u32 1.1754944e-38, %v1245
        %v1247 = vsel %vm1244, %v1246, %v1242
        %v1248 = vmul.f32 1.0, %v1247
        %v1249 = vrcp.pop %v1147
        %v1250 = vmul.f32 %v1147, %v1249
        %v1251 = vsub.f32 1.0, %v1250
        %v1252 = vmul.f32 %v1249, %v1251
        %v1253 = vadd.f32 %v1249, %v1252
        %vm1254 = vweird.f32 %v1147
        %vm1255 = vweird.f32 %v1249
        %vm1256 = vmor %vm1254, %vm1255
        %v1257 = vsel %vm1256, %v1249, %v1253
        %v1258 = vand.u32 2147483647, %v1147
        %vm1259 = vcmp.eq.f32.partialorder %v1258, 8.507059e+37
        %v1260 = vand.u32 %v1147, 2147483648
        %v1261 = vor.u32 1.1754944e-38, %v1260
        %v1262 = vsel %vm1259, %v1261, %v1257
        %v1263 = vmul.f32 1.0, %v1262
        %v1264 = vrcp.pop %v1148
        %v1265 = vmul.f32 %v1148, %v1264
        %v1266 = vsub.f32 1.0, %v1265
        %v1267 = vmul.f32 %v1264, %v1266
        %v1268 = vadd.f32 %v1264, %v1267
        %vm1269 = vweird.f32 %v1148
        %vm1270 = vweird.f32 %v1264
        %vm1271 = vmor %vm1269, %vm1270
        %v1272 = vsel %vm1271, %v1264, %v1268
        %v1273 = vand.u32 2147483647, %v1148
        %vm1274 = vcmp.eq.f32.partialorder %v1273, 8.507059e+37
        %v1275 = vand.u32 %v1148, 2147483648
        %v1276 = vor.u32 1.1754944e-38, %v1275
        %v1277 = vsel %vm1274, %v1276, %v1272
        %v1278 = vmul.f32 1.0, %v1277
        %v1279 = vrcp.pop %v1149
        %v1280 = vmul.f32 %v1149, %v1279
        %v1281 = vsub.f32 1.0, %v1280
        %v1282 = vmul.f32 %v1279, %v1281
        %v1283 = vadd.f32 %v1279, %v1282
        %vm1284 = vweird.f32 %v1149
        %vm1285 = vweird.f32 %v1279
        %vm1286 = vmor %vm1284, %vm1285
        %v1287 = vsel %vm1286, %v1279, %v1283
        %v1288 = vand.u32 2147483647, %v1149
        %vm1289 = vcmp.eq.f32.partialorder %v1288, 8.507059e+37
        %v1290 = vand.u32 %v1149, 2147483648
        %v1291 = vor.u32 1.1754944e-38, %v1290
        %v1292 = vsel %vm1289, %v1291, %v1287
        %v1293 = vmul.f32 1.0, %v1292
        %v1294 = vrcp.pop %v1150
        %v1295 = vmul.f32 %v1150, %v1294
        %v1296 = vsub.f32 1.0, %v1295
        %v1297 = vmul.f32 %v1294, %v1296
        %v1298 = vadd.f32 %v1294, %v1297
        %vm1299 = vweird.f32 %v1150
        %vm1300 = vweird.f32 %v1294
        %vm1301 = vmor %vm1299, %vm1300
        %v1302 = vsel %vm1301, %v1294, %v1298
        %v1303 = vand.u32 2147483647, %v1150
        %vm1304 = vcmp.eq.f32.partialorder %v1303, 8.507059e+37
        %v1305 = vand.u32 %v1150, 2147483648
        %v1306 = vor.u32 1.1754944e-38, %v1305
        %v1307 = vsel %vm1304, %v1306, %v1302
        %v1308 = vmul.f32 1.0, %v1307
        %v1309 = vrcp.pop %v1151
        %v1310 = vmul.f32 %v1151, %v1309
        %v1311 = vsub.f32 1.0, %v1310
        %v1312 = vmul.f32 %v1309, %v1311
        %v1313 = vadd.f32 %v1309, %v1312
        %vm1314 = vweird.f32 %v1151
        %vm1315 = vweird.f32 %v1309
        %vm1316 = vmor %vm1314, %vm1315
        %v1317 = vsel %vm1316, %v1309, %v1313
        %v1318 = vand.u32 2147483647, %v1151
        %vm1319 = vcmp.eq.f32.partialorder %v1318, 8.507059e+37
        %v1320 = vand.u32 %v1151, 2147483648
        %v1321 = vor.u32 1.1754944e-38, %v1320
        %v1322 = vsel %vm1319, %v1321, %v1317
        %v1323 = vmul.f32 1.0, %v1322
        %v1324 = vrcp.pop %v1152
        %v1325 = vmul.f32 %v1152, %v1324
        %v1326 = vsub.f32 1.0, %v1325
        %v1327 = vmul.f32 %v1324, %v1326
        %v1328 = vadd.f32 %v1324, %v1327
        %vm1329 = vweird.f32 %v1152
        %vm1330 = vweird.f32 %v1324
        %vm1331 = vmor %vm1329, %vm1330
        %v1332 = vsel %vm1331, %v1324, %v1328
        %v1333 = vand.u32 2147483647, %v1152
        %vm1334 = vcmp.eq.f32.partialorder %v1333, 8.507059e+37
        %v1335 = vand.u32 %v1152, 2147483648
        %v1336 = vor.u32 1.1754944e-38, %v1335
        %v1337 = vsel %vm1334, %v1336, %v1332
        %v1338 = vmul.f32 1.0, %v1337
        %v1339 = vrcp.pop %v1153
        %v1340 = vmul.f32 %v1153, %v1339
        %v1341 = vsub.f32 1.0, %v1340
        %v1342 = vmul.f32 %v1339, %v1341
        %v1343 = vadd.f32 %v1339, %v1342
        %vm1344 = vweird.f32 %v1153
        %vm1345 = vweird.f32 %v1339
        %vm1346 = vmor %vm1344, %vm1345
        %v1347 = vsel %vm1346, %v1339, %v1343
        %v1348 = vand.u32 2147483647, %v1153
        %vm1349 = vcmp.eq.f32.partialorder %v1348, 8.507059e+37
        %v1350 = vand.u32 %v1153, 2147483648
        %v1351 = vor.u32 1.1754944e-38, %v1350
        %v1352 = vsel %vm1349, %v1351, %v1347
        %v1353 = vmul.f32 1.0, %v1352
        %v1354 = vrcp.pop %v1154
        %v1355 = vmul.f32 %v1154, %v1354
        %v1356 = vsub.f32 1.0, %v1355
        %v1357 = vmul.f32 %v1354, %v1356
        %v1358 = vadd.f32 %v1354, %v1357
        %vm1359 = vweird.f32 %v1154
        %vm1360 = vweird.f32 %v1354
        %vm1361 = vmor %vm1359, %vm1360
        %v1362 = vsel %vm1361, %v1354, %v1358
        %v1363 = vand.u32 2147483647, %v1154
        %vm1364 = vcmp.eq.f32.partialorder %v1363, 8.507059e+37
        %v1365 = vand.u32 %v1154, 2147483648
        %v1366 = vor.u32 1.1754944e-38, %v1365
        %v1367 = vsel %vm1364, %v1366, %v1362
        %v1368 = vmul.f32 1.0, %v1367
        %v1369 = vrcp.pop %v1155
        %v1370 = vmul.f32 %v1155, %v1369
        %v1371 = vsub.f32 1.0, %v1370
        %v1372 = vmul.f32 %v1369, %v1371
        %v1373 = vadd.f32 %v1369, %v1372
        %vm1374 = vweird.f32 %v1155
        %vm1375 = vweird.f32 %v1369
        %vm1376 = vmor %vm1374, %vm1375
        %v1377 = vsel %vm1376, %v1369, %v1373
        %v1378 = vand.u32 2147483647, %v1155
        %vm1379 = vcmp.eq.f32.partialorder %v1378, 8.507059e+37
        %v1380 = vand.u32 %v1155, 2147483648
        %v1381 = vor.u32 1.1754944e-38, %v1380
        %v1382 = vsel %vm1379, %v1381, %v1377
        %v1383 = vmul.f32 1.0, %v1382
        %v1384 = vrcp.pop %v1156
        %v1385 = vmul.f32 %v1156, %v1384
        %v1386 = vsub.f32 1.0, %v1385
        %v1387 = vmul.f32 %v1384, %v1386
        %v1388 = vadd.f32 %v1384, %v1387
        %vm1389 = vweird.f32 %v1156
        %vm1390 = vweird.f32 %v1384
        %vm1391 = vmor %vm1389, %vm1390
        %v1392 = vsel %vm1391, %v1384, %v1388
        %v1393 = vand.u32 2147483647, %v1156
        %vm1394 = vcmp.eq.f32.partialorder %v1393, 8.507059e+37
        %v1395 = vand.u32 %v1156, 2147483648
        %v1396 = vor.u32 1.1754944e-38, %v1395
        %v1397 = vsel %vm1394, %v1396, %v1392
        %v1398 = vmul.f32 1.0, %v1397
        %v1399 = vrcp.pop %v1157
        %v1400 = vmul.f32 %v1157, %v1399
        %v1401 = vsub.f32 1.0, %v1400
        %v1402 = vmul.f32 %v1399, %v1401
        %v1403 = vadd.f32 %v1399, %v1402
        %vm1404 = vweird.f32 %v1157
        %vm1405 = vweird.f32 %v1399
        %vm1406 = vmor %vm1404, %vm1405
        %v1407 = vsel %vm1406, %v1399, %v1403
        %v1408 = vand.u32 2147483647, %v1157
        %vm1409 = vcmp.eq.f32.partialorder %v1408, 8.507059e+37
        %v1410 = vand.u32 %v1157, 2147483648
        %v1411 = vor.u32 1.1754944e-38, %v1410
        %v1412 = vsel %vm1409, %v1411, %v1407
        %v1413 = vmul.f32 1.0, %v1412
        %v1414 = vrcp.pop %v1158
        %v1415 = vmul.f32 %v1158, %v1414
        %v1416 = vsub.f32 1.0, %v1415
        %v1417 = vmul.f32 %v1414, %v1416
        %v1418 = vadd.f32 %v1414, %v1417
        %vm1419 = vweird.f32 %v1158
        %vm1420 = vweird.f32 %v1414
        %vm1421 = vmor %vm1419, %vm1420
        %v1422 = vsel %vm1421, %v1414, %v1418
        %v1423 = vand.u32 2147483647, %v1158
        %vm1424 = vcmp.eq.f32.partialorder %v1423, 8.507059e+37
        %v1425 = vand.u32 %v1158, 2147483648
        %v1426 = vor.u32 1.1754944e-38, %v1425
        %v1427 = vsel %vm1424, %v1426, %v1422
        %v1428 = vmul.f32 1.0, %v1427
        %v1429 = vrcp.pop %v1159
        %v1430 = vmul.f32 %v1159, %v1429
        %v1431 = vsub.f32 1.0, %v1430
        %v1432 = vmul.f32 %v1429, %v1431
        %v1433 = vadd.f32 %v1429, %v1432
        %vm1434 = vweird.f32 %v1159
        %vm1435 = vweird.f32 %v1429
        %vm1436 = vmor %vm1434, %vm1435
        %v1437 = vsel %vm1436, %v1429, %v1433
        %v1438 = vand.u32 2147483647, %v1159
        %vm1439 = vcmp.eq.f32.partialorder %v1438, 8.507059e+37
        %v1440 = vand.u32 %v1159, 2147483648
        %v1441 = vor.u32 1.1754944e-38, %v1440
        %v1442 = vsel %vm1439, %v1441, %v1437
        %v1443 = vmul.f32 1.0, %v1442
        %v1444 = vrcp.pop %v1160
        %v1445 = vmul.f32 %v1160, %v1444
        %v1446 = vsub.f32 1.0, %v1445
        %v1447 = vmul.f32 %v1444, %v1446
        %v1448 = vadd.f32 %v1444, %v1447
        %vm1449 = vweird.f32 %v1160
        %vm1450 = vweird.f32 %v1444
        %vm1451 = vmor %vm1449, %vm1450
        %v1452 = vsel %vm1451, %v1444, %v1448
        %v1453 = vand.u32 2147483647, %v1160
        %vm1454 = vcmp.eq.f32.partialorder %v1453, 8.507059e+37
        %v1455 = vand.u32 %v1160, 2147483648
        %v1456 = vor.u32 1.1754944e-38, %v1455
        %v1457 = vsel %vm1454, %v1456, %v1452
        %v1458 = vmul.f32 1.0, %v1457
        %v1459 = vrcp.pop %v1161
        %v1460 = vmul.f32 %v1161, %v1459
        %v1461 = vsub.f32 1.0, %v1460
        %v1462 = vmul.f32 %v1459, %v1461
        %v1463 = vadd.f32 %v1459, %v1462
        %vm1464 = vweird.f32 %v1161
        %vm1465 = vweird.f32 %v1459
        %vm1466 = vmor %vm1464, %vm1465
        %v1467 = vsel %vm1466, %v1459, %v1463
        %v1468 = vand.u32 2147483647, %v1161
        %vm1469 = vcmp.eq.f32.partialorder %v1468, 8.507059e+37
        %v1470 = vand.u32 %v1161, 2147483648
        %v1471 = vor.u32 1.1754944e-38, %v1470
        %v1472 = vsel %vm1469, %v1471, %v1467
        %v1473 = vmul.f32 1.0, %v1472
        %v1474 = vrcp.pop %v1162
        %v1475 = vmul.f32 %v1162, %v1474
        %v1476 = vsub.f32 1.0, %v1475
        %v1477 = vmul.f32 %v1474, %v1476
        %v1478 = vadd.f32 %v1474, %v1477
        %vm1479 = vweird.f32 %v1162
        %vm1480 = vweird.f32 %v1474
        %vm1481 = vmor %vm1479, %vm1480
        %v1482 = vsel %vm1481, %v1474, %v1478
        %v1483 = vand.u32 2147483647, %v1162
        %vm1484 = vcmp.eq.f32.partialorder %v1483, 8.507059e+37
        %v1485 = vand.u32 %v1162, 2147483648
        %v1486 = vor.u32 1.1754944e-38, %v1485
        %v1487 = vsel %vm1484, %v1486, %v1482
        %v1488 = vmul.f32 1.0, %v1487
        %v1489 = vrcp.pop %v1163
        %v1490 = vmul.f32 %v1163, %v1489
        %v1491 = vsub.f32 1.0, %v1490
        %v1492 = vmul.f32 %v1489, %v1491
        %v1493 = vadd.f32 %v1489, %v1492
        %vm1494 = vweird.f32 %v1163
        %vm1495 = vweird.f32 %v1489
        %vm1496 = vmor %vm1494, %vm1495
        %v1497 = vsel %vm1496, %v1489, %v1493
        %v1498 = vand.u32 2147483647, %v1163
        %vm1499 = vcmp.eq.f32.partialorder %v1498, 8.507059e+37
        %v1500 = vand.u32 %v1163, 2147483648
        %v1501 = vor.u32 1.1754944e-38, %v1500
        %v1502 = vsel %vm1499, %v1501, %v1497
        %v1503 = vmul.f32 1.0, %v1502
        %v1504 = vrcp.pop %v1164
        %v1505 = vmul.f32 %v1164, %v1504
        %v1506 = vsub.f32 1.0, %v1505
        %v1507 = vmul.f32 %v1504, %v1506
        %v1508 = vadd.f32 %v1504, %v1507
        %vm1509 = vweird.f32 %v1164
        %vm1510 = vweird.f32 %v1504
        %vm1511 = vmor %vm1509, %vm1510
        %v1512 = vsel %vm1511, %v1504, %v1508
        %v1513 = vand.u32 2147483647, %v1164
        %vm1514 = vcmp.eq.f32.partialorder %v1513, 8.507059e+37
        %v1515 = vand.u32 %v1164, 2147483648
        %v1516 = vor.u32 1.1754944e-38, %v1515
        %v1517 = vsel %vm1514, %v1516, %v1512
        %v1518 = vmul.f32 1.0, %v1517
        %v1519 = vrcp.pop %v1165
        %v1520 = vmul.f32 %v1165, %v1519
        %v1521 = vsub.f32 1.0, %v1520
        %v1522 = vmul.f32 %v1519, %v1521
        %v1523 = vadd.f32 %v1519, %v1522
        %vm1524 = vweird.f32 %v1165
        %vm1525 = vweird.f32 %v1519
        %vm1526 = vmor %vm1524, %vm1525
        %v1527 = vsel %vm1526, %v1519, %v1523
        %v1528 = vand.u32 2147483647, %v1165
        %vm1529 = vcmp.eq.f32.partialorder %v1528, 8.507059e+37
        %v1530 = vand.u32 %v1165, 2147483648
        %v1531 = vor.u32 1.1754944e-38, %v1530
        %v1532 = vsel %vm1529, %v1531, %v1527
        %v1533 = vmul.f32 1.0, %v1532
        %v1534 = vrcp.pop %v1166
        %v1535 = vmul.f32 %v1166, %v1534
        %v1536 = vsub.f32 1.0, %v1535
        %v1537 = vmul.f32 %v1534, %v1536
        %v1538 = vadd.f32 %v1534, %v1537
        %vm1539 = vweird.f32 %v1166
        %vm1540 = vweird.f32 %v1534
        %vm1541 = vmor %vm1539, %vm1540
        %v1542 = vsel %vm1541, %v1534, %v1538
        %v1543 = vand.u32 2147483647, %v1166
        %vm1544 = vcmp.eq.f32.partialorder %v1543, 8.507059e+37
        %v1545 = vand.u32 %v1166, 2147483648
        %v1546 = vor.u32 1.1754944e-38, %v1545
        %v1547 = vsel %vm1544, %v1546, %v1542
        %v1548 = vmul.f32 1.0, %v1547
        %v1549 = vrcp.pop %v1167
        %v1550 = vmul.f32 %v1167, %v1549
        %v1551 = vsub.f32 1.0, %v1550
        %v1552 = vmul.f32 %v1549, %v1551
        %v1553 = vadd.f32 %v1549, %v1552
        %vm1554 = vweird.f32 %v1167
        %vm1555 = vweird.f32 %v1549
        %vm1556 = vmor %vm1554, %vm1555
        %v1557 = vsel %vm1556, %v1549, %v1553
        %v1558 = vand.u32 2147483647, %v1167
        %vm1559 = vcmp.eq.f32.partialorder %v1558, 8.507059e+37
        %v1560 = vand.u32 %v1167, 2147483648
        %v1561 = vor.u32 1.1754944e-38, %v1560
        %v1562 = vsel %vm1559, %v1561, %v1557
        %v1563 = vmul.f32 1.0, %v1562
        %v1564 = vrcp.pop %v1168
        %v1565 = vmul.f32 %v1168, %v1564
        %v1566 = vsub.f32 1.0, %v1565
        %v1567 = vmul.f32 %v1564, %v1566
        %v1568 = vadd.f32 %v1564, %v1567
        %vm1569 = vweird.f32 %v1168
        %vm1570 = vweird.f32 %v1564
        %vm1571 = vmor %vm1569, %vm1570
        %v1572 = vsel %vm1571, %v1564, %v1568
        %v1573 = vand.u32 2147483647, %v1168
        %vm1574 = vcmp.eq.f32.partialorder %v1573, 8.507059e+37
        %v1575 = vand.u32 %v1168, 2147483648
        %v1576 = vor.u32 1.1754944e-38, %v1575
        %v1577 = vsel %vm1574, %v1576, %v1572
        %v1578 = vmul.f32 1.0, %v1577
        %v1579 = vrcp.pop %v1169
        %v1580 = vmul.f32 %v1169, %v1579
        %v1581 = vsub.f32 1.0, %v1580
        %v1582 = vmul.f32 %v1579, %v1581
        %v1583 = vadd.f32 %v1579, %v1582
        %vm1584 = vweird.f32 %v1169
        %vm1585 = vweird.f32 %v1579
        %vm1586 = vmor %vm1584, %vm1585
        %v1587 = vsel %vm1586, %v1579, %v1583
        %v1588 = vand.u32 2147483647, %v1169
        %vm1589 = vcmp.eq.f32.partialorder %v1588, 8.507059e+37
        %v1590 = vand.u32 %v1169, 2147483648
        %v1591 = vor.u32 1.1754944e-38, %v1590
        %v1592 = vsel %vm1589, %v1591, %v1587
        %v1593 = vmul.f32 1.0, %v1592
        %v1594 = vrcp.pop %v1170
        %v1595 = vmul.f32 %v1170, %v1594
        %v1596 = vsub.f32 1.0, %v1595
        %v1597 = vmul.f32 %v1594, %v1596
        %v1598 = vadd.f32 %v1594, %v1597
        %vm1599 = vweird.f32 %v1170
        %vm1600 = vweird.f32 %v1594
        %vm1601 = vmor %vm1599, %vm1600
        %v1602 = vsel %vm1601, %v1594, %v1598
        %v1603 = vand.u32 2147483647, %v1170
        %vm1604 = vcmp.eq.f32.partialorder %v1603, 8.507059e+37
        %v1605 = vand.u32 %v1170, 2147483648
        %v1606 = vor.u32 1.1754944e-38, %v1605
        %v1607 = vsel %vm1604, %v1606, %v1602
        %v1608 = vmul.f32 1.0, %v1607
        %v1609 = vrcp.pop %v1171
        %v1610 = vmul.f32 %v1171, %v1609
        %v1611 = vsub.f32 1.0, %v1610
        %v1612 = vmul.f32 %v1609, %v1611
        %v1613 = vadd.f32 %v1609, %v1612
        %vm1614 = vweird.f32 %v1171
        %vm1615 = vweird.f32 %v1609
        %vm1616 = vmor %vm1614, %vm1615
        %v1617 = vsel %vm1616, %v1609, %v1613
        %v1618 = vand.u32 2147483647, %v1171
        %vm1619 = vcmp.eq.f32.partialorder %v1618, 8.507059e+37
        %v1620 = vand.u32 %v1171, 2147483648
        %v1621 = vor.u32 1.1754944e-38, %v1620
        %v1622 = vsel %vm1619, %v1621, %v1617
        %v1623 = vmul.f32 1.0, %v1622
        %v1624 = vrcp.pop %v1172
        %v1625 = vmul.f32 %v1172, %v1624
        %v1626 = vsub.f32 1.0, %v1625
        %v1627 = vmul.f32 %v1624, %v1626
        %v1628 = vadd.f32 %v1624, %v1627
        %vm1629 = vweird.f32 %v1172
        %vm1630 = vweird.f32 %v1624
        %vm1631 = vmor %vm1629, %vm1630
        %v1632 = vsel %vm1631, %v1624, %v1628
        %v1633 = vand.u32 2147483647, %v1172
        %vm1634 = vcmp.eq.f32.partialorder %v1633, 8.507059e+37
        %v1635 = vand.u32 %v1172, 2147483648
        %v1636 = vor.u32 1.1754944e-38, %v1635
        %v1637 = vsel %vm1634, %v1636, %v1632
        %v1638 = vmul.f32 1.0, %v1637
        %v1639 = vrcp.pop %v1173
        %v1640 = vmul.f32 %v1173, %v1639
        %v1641 = vsub.f32 1.0, %v1640
        %v1642 = vmul.f32 %v1639, %v1641
        %v1643 = vadd.f32 %v1639, %v1642
        %vm1644 = vweird.f32 %v1173
        %vm1645 = vweird.f32 %v1639
        %vm1646 = vmor %vm1644, %vm1645
        %v1647 = vsel %vm1646, %v1639, %v1643
        %v1648 = vand.u32 2147483647, %v1173
        %vm1649 = vcmp.eq.f32.partialorder %v1648, 8.507059e+37
        %v1650 = vand.u32 %v1173, 2147483648
        %v1651 = vor.u32 1.1754944e-38, %v1650
        %v1652 = vsel %vm1649, %v1651, %v1647
        %v1653 = vmul.f32 1.0, %v1652
        %1654 = vst [vmem:[%s348] sm:$0xff] %v1188
        %1655 = vst [vmem:[%s348 + $0x8] sm:$0xff] %v1203
        %1656 = vst [vmem:[%s348 + $0x10] sm:$0xff] %v1218
        %1657 = vst [vmem:[%s348 + $0x18] sm:$0xff] %v1233
        %1658 = vst [vmem:[%s348 + $0x20] sm:$0xff] %v1248
        %1659 = vst [vmem:[%s348 + $0x28] sm:$0xff] %v1263
        %1660 = vst [vmem:[%s348 + $0x30] sm:$0xff] %v1278
        %1661 = vst [vmem:[%s348 + $0x38] sm:$0xff] %v1293
        %1662 = vst [vmem:[%s348 + $0x40] sm:$0xff] %v1308
        %1663 = vst [vmem:[%s348 + $0x48] sm:$0xff] %v1323
        %1664 = vst [vmem:[%s348 + $0x50] sm:$0xff] %v1338
        %1665 = vst [vmem:[%s348 + $0x58] sm:$0xff] %v1353
        %1666 = vst [vmem:[%s348 + $0x60] sm:$0xff] %v1368
        %1667 = vst [vmem:[%s348 + $0x68] sm:$0xff] %v1383
        %1668 = vst [vmem:[%s348 + $0x70] sm:$0xff] %v1398
        %1669 = vst [vmem:[%s348 + $0x78] sm:$0xff] %v1413
        %1670 = vst [vmem:[%s348 + $0x80] sm:$0xff] %v1428
        %1671 = vst [vmem:[%s348 + $0x88] sm:$0xff] %v1443
        %1672 = vst [vmem:[%s348 + $0x90] sm:$0xff] %v1458
        %1673 = vst [vmem:[%s348 + $0x98] sm:$0xff] %v1473
        %1674 = vst [vmem:[%s348 + $0xa0] sm:$0xff] %v1488
        %1675 = vst [vmem:[%s348 + $0xa8] sm:$0xff] %v1503
        %1676 = vst [vmem:[%s348 + $0xb0] sm:$0xff] %v1518
        %1677 = vst [vmem:[%s348 + $0xb8] sm:$0xff] %v1533
        %1678 = vst [vmem:[%s348 + $0xc0] sm:$0xff] %v1548
        %1679 = vst [vmem:[%s348 + $0xc8] sm:$0xff] %v1563
        %1680 = vst [vmem:[%s348 + $0xd0] sm:$0xff] %v1578
        %1681 = vst [vmem:[%s348 + $0xd8] sm:$0xff] %v1593
        %1682 = vst [vmem:[%s348 + $0xe0] sm:$0xff] %v1608
        %1683 = vst [vmem:[%s348 + $0xe8] sm:$0xff] %v1623
        %1684 = vst [vmem:[%s348 + $0xf0] sm:$0xff] %v1638
        %1685 = vst [vmem:[%s348 + $0xf8] sm:$0xff] %v1653
        %s1686 = sand.u32 %s186, 1
        %s1687 = scalar_lea.sflag [#allocation4], %s1686
        %s1688 = sand.u32 %s186, 1
        %s1689 = smul.addr %s1688, 256
        %s1690 = scalar_lea.vmem [#allocation10], %s1689
        // Predicated region
        $region65: #{tpu_custom_call.1} parent=47 // pred_check
          %p1691 = pneg %p196
        $region66: #{tpu_custom_call.1} parent=47 // pred_check_branch
          %1693 = sbr.rel (%p1691) target = $region68
        $region67: #{tpu_custom_call.1} parent=47 // pred_region
          %s1694 = smul.u32 32, %s26
          %1696 = vsyncadd %s1687, 0
          %s1697 = smul.addr %s1694, 8
          %s1698 = scalar_lea.hbm %s7, %s1697
          %s1699 = sshll.u32 %s1690, 4
          %s1700 = int_to_ptr.vmem [resolvable:$true] %s1699
          %s1701 = sshll.u32 %s1698, 4
          %s1702 = int_to_ptr.hbm [resolvable:$true] %s1701
          %1707 = dma.vmem_to_hbm [thread:$0]  %s1700, 4096, %s1702, %s1687, 128, 128, 8
        $region68: #{tpu_custom_call.1} parent=47 // pred_fallthru
          _
      $region48: #{tpu_custom_call.1} parent=5 // pred_fallthru
        _
      %p1708 = scmp.le.s32.totalorder 2, %s21
      // Predicated region
      $region69: #{tpu_custom_call.1} parent=5 // pred_check
        %p1709 = pneg %p1708
      $region70: #{tpu_custom_call.1} parent=5 // pred_check_branch
        %1711 = sbr.rel (%p1709) target = $region72
      $region71: #{tpu_custom_call.1} parent=5 // pred_region
        %s1712 = ssub.s32 %s21, 2
        // Predicated region
        $region73: #{tpu_custom_call.1} parent=71 // pred_check
          %p1713 = pneg %p202
        $region74: #{tpu_custom_call.1} parent=71 // pred_check_branch
          %1715 = sbr.rel (%p1713) target = $region76
        $region75: #{tpu_custom_call.1} parent=71 // pred_region
          %s1716 = sand.u32 %s187, 1
          %s1717 = scalar_lea.sflag [#allocation4], %s1716
          %s1718 = sand.u32 %s187, 1
          %s1719 = smul.addr %s1718, 256
          %s1720 = scalar_lea.vmem [#allocation10], %s1719
          %1722 = dma.done %s1717, 4096
        $region76: #{tpu_custom_call.1} parent=71 // pred_fallthru
          _
      $region72: #{tpu_custom_call.1} parent=5 // pred_fallthru
        _
    $region6: #{tpu_custom_call.1} parent=1 // loop_footer
      %s25 = sadd.s32 1, %s21
    $region7: #{tpu_custom_call.1} parent=1 // loop_footer_branch
      %20 = sbr.rel target = $region3
    $region8: #{tpu_custom_call.1} parent=1 // loop_exit
      _
    %1723 = vsyncpa [#allocation3], 1
    %s1724 = scalar_lea.sflag [#allocation3], 1
    %1725 = vsyncpa %s1724, 1
    %1726 = vsyncpa [#allocation6], 1
    %1727 = vsyncpa [#allocation9], 1
    %1728 = vsyncpa [#allocation4], 1
    %s1729 = scalar_lea.sflag [#allocation4], 1
    %1730 = vsyncpa %s1729, 1

// kernel: tpu_custom_call.1
$region0: #{tpu_custom_call.1}
  #allocation0 [shape = 'u32[]', space=smem, size = 0x4, offset = 0x4, fixed_abs, tag = 'smem constant byte address 0x4 - core index']
  #allocation1 [shape = 'u32[72,128]{1,0:T(1,128)}', space=vmem, size = 0x9000, scoped, tag = 'internal scratch']
  %s0 = inlined_call_operand.hbm [shape: bf16[512,128], index: 0, kind: input, shape index: {}]
  %s1 = inlined_call_operand.hbm [shape: bf16[128,128], index: 1, kind: input, shape index: {}]
  %s2 = inlined_call_operand.vmem [shape: f32[1,128], index: 2, kind: input, shape index: {}]
  %s3 = inlined_call_operand.hbm [shape: bf16[128,128], index: 3, kind: input, shape index: {}]
  %s4 = inlined_call_operand.vmem [shape: f32[1,128], index: 4, kind: input, shape index: {}]
  %s5 = inlined_call_operand.hbm [shape: bf16[128,128], index: 5, kind: input, shape index: {}]
  %s6 = inlined_call_operand.vmem [shape: f32[1,128], index: 6, kind: input, shape index: {}]
  %s7 = inlined_call_operand.hbm [shape: f32[512,128], index: 7, kind: output, shape index: {}]
  %s8 = sld [smem:[#allocation0]]
  $region77: #{tpu_custom_call.1} parent=0
    _
  %s10 = ssub.s32 1, %s8
  %s11 = scalar_select 0, %s10, %s8
  $region1: #{tpu_custom_call.1} parent=0
    #allocation2 [shape = 'u8[131072]{0}', space=vmem, size = 0x20000, scoped, tag = 'input window, operand 0']
    #allocation3 [shape = 's32[2]{0}', space=sflag, size = 0x8, scoped, tag = 'scoped memory for tpu_custom_call.1']
    #allocation4 [shape = 's32[2]{0}', space=sflag, size = 0x8, scoped, tag = 'scoped memory for tpu_custom_call.1']
    #allocation5 [shape = 'u8[32768]{0}', space=vmem, size = 0x8000, scoped, tag = 'input window, operand 1, single buffered']
    #allocation6 [shape = 's32[1]{0}', space=sflag, size = 0x4, scoped, tag = 'scoped memory for tpu_custom_call.1']
    #allocation7 [shape = 'u8[32768]{0}', space=vmem, size = 0x8000, scoped, tag = 'input window, operand 3, single buffered']
    #allocation8 [shape = 'u8[32768]{0}', space=vmem, size = 0x8000, scoped, tag = 'input window, operand 5, single buffered']
    #allocation9 [shape = 's32[1]{0}', space=sflag, size = 0x4, scoped, tag = 'scoped memory for tpu_custom_call.1']
    #allocation10 [shape = 'u8[262144]{0}', space=vmem, size = 0x40000, scoped, tag = 'output window, operand 0']
    %12 = vsyncpa [#allocation3], 0
    %s13 = scalar_lea.sflag [#allocation3], 1
    %14 = vsyncpa %s13, 0
    %15 = vsyncpa [#allocation6], 0
    %16 = vsyncpa [#allocation9], 0
    %17 = vsyncpa [#allocation4], 0
    %s18 = scalar_lea.sflag [#allocation4], 1
    %19 = vsyncpa %s18, 0
    loop: start=0, step=1, limit=4
    $region2: #{tpu_custom_call.1} parent=1 // loop_pre_header
      _
    $region3: #{tpu_custom_call.1} parent=1 // loop_header
      %s21 = sphi 0, %s25
      %p22 = scmp.ge.s32.totalorder %s21, 4
      %s31 = sphi 0, %s33
      %s34 = sphi 0, %s31
      %s35 = sphi 0, %s34
      %s51 = sphi 0, %s35
      %s55 = sphi 0, %s55
      %s57 = sphi 0, %s55
      %s58 = sphi 0, %s57
      %s72 = sphi 0, %s58
      %s76 = sphi 0, %s76
      %s78 = sphi 0, %s76
      %s79 = sphi 0, %s78
      %s93 = sphi 0, %s79
      %s97 = sphi 0, %s97
      %s99 = sphi 0, %s97
      %s100 = sphi 0, %s99
      %s114 = sphi 0, %s100
      %s118 = sphi 0, %s118
      %s120 = sphi 0, %s118
      %s121 = sphi 0, %s120
      %s135 = sphi 0, %s121
      %s139 = sphi 0, %s139
      %s141 = sphi 0, %s139
      %s142 = sphi 0, %s141
      %s156 = sphi 0, %s142
      %s160 = sphi 0, %s160
      %s162 = sphi 0, %s160
      %s163 = sphi 0, %s162
      %s177 = sphi 0, %s163
      %s183 = sphi 0, %s185
      %s186 = sphi 0, %s183
      %s187 = sphi 0, %s186
      %s203 = sphi 0, %s187
    $region4: #{tpu_custom_call.1} parent=1 // loop_header_branch
      %24 = sbr.rel (%p22) target = $region8
    $region5: #{tpu_custom_call.1} parent=1 // loop_body
      %s26 = ssub.s32 %s21, 1
      %s27 = ssub.s32 %s21, 2
      %s28 = sadd.s32 %s21, 1
      %s29 = ssub.s32 %s21, %s28
      %p30 = scmp.eq.s32.totalorder %s29, 0
      %s32 = sadd.s32 %s31, 1
      %s33 = scalar_select %p30, %s31, %s32
      %p36 = pneg %p30
      %p37 = scmp.eq.s32.totalorder %s21, 1
      %p38 = por %p36, %p37
      %p39 = scmp.ne.s32.totalorder %s31, %s34
      %p40 = scmp.eq.s32.totalorder %s21, 0
      %p41 = por %p39, %p40
      %p42 = scmp.ne.s32.totalorder %s31, %s34
      %p43 = scmp.eq.s32.totalorder %s26, 1
      %p44 = por %p42, %p43
      %p45 = scmp.ne.s32.totalorder %s34, %s35
      %p46 = scmp.eq.s32.totalorder %s26, 0
      %p47 = por %p45, %p46
      %p48 = scmp.ne.s32.totalorder %s34, %s35
      %p49 = scmp.eq.s32.totalorder %s27, 1
      %p50 = por %p48, %p49
      %p52 = scmp.ne.s32.totalorder %s35, %s51
      %p53 = scmp.eq.s32.totalorder %s27, 0
      %p54 = por %p52, %p53
      %s56 = sadd.s32 %s55, 1
      %p59 = scmp.eq.s32.totalorder %s21, 1
      %p60 = scmp.ne.s32.totalorder %s55, %s57
      %p61 = scmp.eq.s32.totalorder %s21, 0
      %p62 = por %p60, %p61
      %p63 = scmp.ne.s32.totalorder %s55, %s57
      %p64 = scmp.eq.s32.totalorder %s26, 1
      %p65 = por %p63, %p64
      %p66 = scmp.ne.s32.totalorder %s57, %s58
      %p67 = scmp.eq.s32.totalorder %s26, 0
      %p68 = por %p66, %p67
      %p69 = scmp.ne.s32.totalorder %s57, %s58
      %p70 = scmp.eq.s32.totalorder %s27, 1
      %p71 = por %p69, %p70
      %p73 = scmp.ne.s32.totalorder %s58, %s72
      %p74 = scmp.eq.s32.totalorder %s27, 0
      %p75 = por %p73, %p74
      %s77 = sadd.s32 %s76, 1
      %p80 = scmp.eq.s32.totalorder %s21, 1
      %p81 = scmp.ne.s32.totalorder %s76, %s78
      %p82 = scmp.eq.s32.totalorder %s21, 0
      %p83 = por %p81, %p82
      %p84 = scmp.ne.s32.totalorder %s76, %s78
      %p85 = scmp.eq.s32.totalorder %s26, 1
      %p86 = por %p84, %p85
      %p87 = scmp.ne.s32.totalorder %s78, %s79
      %p88 = scmp.eq.s32.totalorder %s26, 0
      %p89 = por %p87, %p88
      %p90 = scmp.ne.s32.totalorder %s78, %s79
      %p91 = scmp.eq.s32.totalorder %s27, 1
      %p92 = por %p90, %p91
      %p94 = scmp.ne.s32.totalorder %s79, %s93
      %p95 = scmp.eq.s32.totalorder %s27, 0
      %p96 = por %p94, %p95
      %s98 = sadd.s32 %s97, 1
      %p101 = scmp.eq.s32.totalorder %s21, 1
      %p102 = scmp.ne.s32.totalorder %s97, %s99
      %p103 = scmp.eq.s32.totalorder %s21, 0
      %p104 = por %p102, %p103
      %p105 = scmp.ne.s32.totalorder %s97, %s99
      %p106 = scmp.eq.s32.totalorder %s26, 1
      %p107 = por %p105, %p106
      %p108 = scmp.ne.s32.totalorder %s99, %s100
      %p109 = scmp.eq.s32.totalorder %s26, 0
      %p110 = por %p108, %p109
      %p111 = scmp.ne.s32.totalorder %s99, %s100
      %p112 = scmp.eq.s32.totalorder %s27, 1
      %p113 = por %p111, %p112
      %p115 = scmp.ne.s32.totalorder %s100, %s114
      %p116 = scmp.eq.s32.totalorder %s27, 0
      %p117 = por %p115, %p116
      %s119 = sadd.s32 %s118, 1
      %p122 = scmp.eq.s32.totalorder %s21, 1
      %p123 = scmp.ne.s32.totalorder %s118, %s120
      %p124 = scmp.eq.s32.totalorder %s21, 0
      %p125 = por %p123, %p124
      %p126 = scmp.ne.s32.totalorder %s118, %s120
      %p127 = scmp.eq.s32.totalorder %s26, 1
      %p128 = por %p126, %p127
      %p129 = scmp.ne.s32.totalorder %s120, %s121
      %p130 = scmp.eq.s32.totalorder %s26, 0
      %p131 = por %p129, %p130
      %p132 = scmp.ne.s32.totalorder %s120, %s121
      %p133 = scmp.eq.s32.totalorder %s27, 1
      %p134 = por %p132, %p133
      %p136 = scmp.ne.s32.totalorder %s121, %s135
      %p137 = scmp.eq.s32.totalorder %s27, 0
      %p138 = por %p136, %p137
      %s140 = sadd.s32 %s139, 1
      %p143 = scmp.eq.s32.totalorder %s21, 1
      %p144 = scmp.ne.s32.totalorder %s139, %s141
      %p145 = scmp.eq.s32.totalorder %s21, 0
      %p146 = por %p144, %p145
      %p147 = scmp.ne.s32.totalorder %s139, %s141
      %p148 = scmp.eq.s32.totalorder %s26, 1
      %p149 = por %p147, %p148
      %p150 = scmp.ne.s32.totalorder %s141, %s142
      %p151 = scmp.eq.s32.totalorder %s26, 0
      %p152 = por %p150, %p151
      %p153 = scmp.ne.s32.totalorder %s141, %s142
      %p154 = scmp.eq.s32.totalorder %s27, 1
      %p155 = por %p153, %p154
      %p157 = scmp.ne.s32.totalorder %s142, %s156
      %p158 = scmp.eq.s32.totalorder %s27, 0
      %p159 = por %p157, %p158
      %s161 = sadd.s32 %s160, 1
      %p164 = scmp.eq.s32.totalorder %s21, 1
      %p165 = scmp.ne.s32.totalorder %s160, %s162
      %p166 = scmp.eq.s32.totalorder %s21, 0
      %p167 = por %p165, %p166
      %p168 = scmp.ne.s32.totalorder %s160, %s162
      %p169 = scmp.eq.s32.totalorder %s26, 1
      %p170 = por %p168, %p169
      %p171 = scmp.ne.s32.totalorder %s162, %s163
      %p172 = scmp.eq.s32.totalorder %s26, 0
      %p173 = por %p171, %p172
      %p174 = scmp.ne.s32.totalorder %s162, %s163
      %p175 = scmp.eq.s32.totalorder %s27, 1
      %p176 = por %p174, %p175
      %p178 = scmp.ne.s32.totalorder %s163, %s177
      %p179 = scmp.eq.s32.totalorder %s27, 0
      %p180 = por %p178, %p179
      %s181 = ssub.s32 %s21, %s28
      %p182 = scmp.eq.s32.totalorder %s181, 0
      %s184 = sadd.s32 %s183, 1
      %s185 = scalar_select %p182, %s183, %s184
      %p188 = pneg %p182
      %p189 = scmp.eq.s32.totalorder %s21, 1
      %p190 = por %p188, %p189
      %p191 = scmp.ne.s32.totalorder %s183, %s186
      %p192 = scmp.eq.s32.totalorder %s21, 0
      %p193 = por %p191, %p192
      %p194 = scmp.ne.s32.totalorder %s183, %s186
      %p195 = scmp.eq.s32.totalorder %s26, 1
      %p196 = por %p194, %p195
      %p197 = scmp.ne.s32.totalorder %s186, %s187
      %p198 = scmp.eq.s32.totalorder %s26, 0
      %p199 = por %p197, %p198
      %p200 = scmp.ne.s32.totalorder %s186, %s187
      %p201 = scmp.eq.s32.totalorder %s27, 1
      %p202 = por %p200, %p201
      %p204 = scmp.ne.s32.totalorder %s187, %s203
      %p205 = scmp.eq.s32.totalorder %s27, 0
      %p206 = por %p204, %p205
      %p207 = scmp.le.s32.totalorder 1, %s21
      %p208 = scmp.lt.s32.totalorder %s21, 3
      %p209 = pnand %p207, %p208
      %p210 = pneg %p209
      // Predicated region
      $region9: #{tpu_custom_call.1} parent=5 // pred_check
        _
      $region10: #{tpu_custom_call.1} parent=5 // pred_check_branch
        %212 = sbr.rel (%p209) target = $region12
      $region11: #{tpu_custom_call.1} parent=5 // pred_region
        %s213 = ssub.s32 %s21, 1
        // Predicated region
        $region13: #{tpu_custom_call.1} parent=11 // pred_check
          %p214 = pneg %p68
        $region14: #{tpu_custom_call.1} parent=11 // pred_check_branch
          %216 = sbr.rel (%p214) target = $region16
        $region15: #{tpu_custom_call.1} parent=11 // pred_region
          %218 = vsyncadd [#allocation6], 0
          %s219 = sshll.u32 %s1, 4
          %s220 = int_to_ptr.hbm [resolvable:$true] %s219
          %s221 = sshll.u32 [#allocation5], 4
          %s222 = int_to_ptr.vmem [resolvable:$true] %s221
          %227 = dma.hbm_to_vmem [thread:$0]  %s220, 1024, %s222, [#allocation6], 64, 64, 4
        $region16: #{tpu_custom_call.1} parent=11 // pred_fallthru
          _
        // Predicated region
        $region17: #{tpu_custom_call.1} parent=11 // pred_check
          %p228 = pneg %p89
        $region18: #{tpu_custom_call.1} parent=11 // pred_check_branch
          %230 = sbr.rel (%p228) target = $region20
        $region19: #{tpu_custom_call.1} parent=11 // pred_region
          _
        $region20: #{tpu_custom_call.1} parent=11 // pred_fallthru
          _
        // Predicated region
        $region21: #{tpu_custom_call.1} parent=11 // pred_check
          %p231 = pneg %p110
        $region22: #{tpu_custom_call.1} parent=11 // pred_check_branch
          %233 = sbr.rel (%p231) target = $region24
        $region23: #{tpu_custom_call.1} parent=11 // pred_region
          %235 = vsyncadd [#allocation6], 0
          %s236 = sshll.u32 %s3, 4
          %s237 = int_to_ptr.hbm [resolvable:$true] %s236
          %s238 = sshll.u32 [#allocation7], 4
          %s239 = int_to_ptr.vmem [resolvable:$true] %s238
          %244 = dma.hbm_to_vmem [thread:$0]  %s237, 1024, %s239, [#allocation6], 64, 64, 4
        $region24: #{tpu_custom_call.1} parent=11 // pred_fallthru
          _
        // Predicated region
        $region25: #{tpu_custom_call.1} parent=11 // pred_check
          %p245 = pneg %p131
        $region26: #{tpu_custom_call.1} parent=11 // pred_check_branch
          %247 = sbr.rel (%p245) target = $region28
        $region27: #{tpu_custom_call.1} parent=11 // pred_region
          _
        $region28: #{tpu_custom_call.1} parent=11 // pred_fallthru
          _
        // Predicated region
        $region29: #{tpu_custom_call.1} parent=11 // pred_check
          %p248 = pneg %p152
        $region30: #{tpu_custom_call.1} parent=11 // pred_check_branch
          %250 = sbr.rel (%p248) target = $region32
        $region31: #{tpu_custom_call.1} parent=11 // pred_region
          %252 = vsyncadd [#allocation9], 0
          %s253 = sshll.u32 %s5, 4
          %s254 = int_to_ptr.hbm [resolvable:$true] %s253
          %s255 = sshll.u32 [#allocation8], 4
          %s256 = int_to_ptr.vmem [resolvable:$true] %s255
          %261 = dma.hbm_to_vmem [thread:$0]  %s254, 1024, %s256, [#allocation9], 64, 64, 4
        $region32: #{tpu_custom_call.1} parent=11 // pred_fallthru
          _
        // Predicated region
        $region33: #{tpu_custom_call.1} parent=11 // pred_check
          %p262 = pneg %p173
        $region34: #{tpu_custom_call.1} parent=11 // pred_check_branch
          %264 = sbr.rel (%p262) target = $region36
        $region35: #{tpu_custom_call.1} parent=11 // pred_region
          _
        $region36: #{tpu_custom_call.1} parent=11 // pred_fallthru
          _
      $region12: #{tpu_custom_call.1} parent=5 // pred_fallthru
        _
      %p265 = scmp.lt.s32.totalorder %s21, 2
      // Predicated region
      $region37: #{tpu_custom_call.1} parent=5 // pred_check
        %p266 = pneg %p265
      $region38: #{tpu_custom_call.1} parent=5 // pred_check_branch
        %268 = sbr.rel (%p266) target = $region40
      $region39: #{tpu_custom_call.1} parent=5 // pred_region
        // Predicated region
        $region41: #{tpu_custom_call.1} parent=39 // pred_check
          %p269 = pneg %p41
        $region42: #{tpu_custom_call.1} parent=39 // pred_check_branch
          %271 = sbr.rel (%p269) target = $region44
        $region43: #{tpu_custom_call.1} parent=39 // pred_region
          %s272 = sand.u32 %s31, 1
          %s273 = scalar_lea.sflag [#allocation3], %s272
          %s274 = sand.u32 %s31, 1
          %s275 = smul.addr %s274, 128
          %s276 = scalar_lea.vmem [#allocation2], %s275
          %s277 = smul.u32 32, %s21
          %279 = vsyncadd %s273, 0
          %s280 = smul.addr %s277, 4
          %s281 = scalar_lea.hbm %s0, %s280
          %s282 = sshll.u32 %s281, 4
          %s283 = int_to_ptr.hbm [resolvable:$true] %s282
          %s284 = sshll.u32 %s276, 4
          %s285 = int_to_ptr.vmem [resolvable:$true] %s284
          %290 = dma.hbm_to_vmem [thread:$0]  %s283, 2048, %s285, %s273, 64, 64, 4
        $region44: #{tpu_custom_call.1} parent=39 // pred_fallthru
          _
      $region40: #{tpu_custom_call.1} parent=5 // pred_fallthru
        _
      %p291 = scmp.le.s32.totalorder 1, %s21
      %p292 = scmp.lt.s32.totalorder %s21, 3
      %p293 = pnand %p291, %p292
      %p294 = pneg %p293
      // Predicated region
      $region45: #{tpu_custom_call.1} parent=5 // pred_check
        _
      $region46: #{tpu_custom_call.1} parent=5 // pred_check_branch
        %296 = sbr.rel (%p293) target = $region48
      $region47: #{tpu_custom_call.1} parent=5 // pred_region
        %s297 = ssub.s32 %s21, 1
        %s298 = sand.u32 %s34, 1
        %s299 = scalar_lea.sflag [#allocation3], %s298
        %s300 = sand.u32 %s34, 1
        %s301 = smul.addr %s300, 128
        %s302 = scalar_lea.vmem [#allocation2], %s301
        // Predicated region
        $region49: #{tpu_custom_call.1} parent=47 // pred_check
          %p303 = pneg %p47
        $region50: #{tpu_custom_call.1} parent=47 // pred_check_branch
          %305 = sbr.rel (%p303) target = $region52
        $region51: #{tpu_custom_call.1} parent=47 // pred_region
          %307 = dma.done %s299, 2048
        $region52: #{tpu_custom_call.1} parent=47 // pred_fallthru
          _
        // Predicated region
        $region53: #{tpu_custom_call.1} parent=47 // pred_check
          %p308 = pneg %p68
        $region54: #{tpu_custom_call.1} parent=47 // pred_check_branch
          %310 = sbr.rel (%p308) target = $region56
        $region55: #{tpu_custom_call.1} parent=47 // pred_region
          %312 = dma.done [#allocation6], 1024
        $region56: #{tpu_custom_call.1} parent=47 // pred_fallthru
          _
        // Predicated region
        $region57: #{tpu_custom_call.1} parent=47 // pred_check
          %p313 = pneg %p110
        $region58: #{tpu_custom_call.1} parent=47 // pred_check_branch
          %315 = sbr.rel (%p313) target = $region60
        $region59: #{tpu_custom_call.1} parent=47 // pred_region
          %317 = dma.done [#allocation6], 1024
        $region60: #{tpu_custom_call.1} parent=47 // pred_fallthru
          _
        // Predicated region
        $region61: #{tpu_custom_call.1} parent=47 // pred_check
          %p318 = pneg %p152
        $region62: #{tpu_custom_call.1} parent=47 // pred_check_branch
          %320 = sbr.rel (%p318) target = $region64
        $region63: #{tpu_custom_call.1} parent=47 // pred_region
          %322 = dma.done [#allocation9], 1024
        $region64: #{tpu_custom_call.1} parent=47 // pred_fallthru
          _
        %s323 = sand.u32 %s34, 1
        %s324 = scalar_lea.sflag [#allocation3], %s323
        %s325 = sand.u32 %s34, 1
        %s326 = smul.addr %s325, 128
        %s327 = scalar_lea.vmem [#allocation2], %s326
        %p328 = pneg %p47
        %p329 = pneg %p44
        %p330 = pneg %p68
        %p331 = pneg %p65
        %p332 = pneg %p89
        %p333 = pneg %p86
        %p334 = pneg %p110
        %p335 = pneg %p107
        %p336 = pneg %p131
        %p337 = pneg %p128
        %p338 = pneg %p152
        %p339 = pneg %p149
        %p340 = pneg %p173
        %p341 = pneg %p170
        %p342 = pneg %p199
        %p343 = pneg %p196
        %s344 = sand.u32 %s186, 1
        %s345 = scalar_lea.sflag [#allocation4], %s344
        %s346 = sand.u32 %s186, 1
        %s347 = smul.addr %s346, 256
        %s348 = scalar_lea.vmem [#allocation10], %s347
        %s349 = smul.u32 32, %s26
        %s350 = smul.u32 32, %s26
        %v351 = vld [vmem:[%s302] sm:$0xf]
        %v352 = vld [vmem:[%s302 + $0x4] sm:$0xf]
        %v353 = vld [vmem:[%s302 + $0x8] sm:$0xf]
        %v354 = vld [vmem:[%s302 + $0xc] sm:$0xf]
        %v355 = vld [vmem:[%s302 + $0x10] sm:$0xf]
        %v356 = vld [vmem:[%s302 + $0x14] sm:$0xf]
        %v357 = vld [vmem:[%s302 + $0x18] sm:$0xf]
        %v358 = vld [vmem:[%s302 + $0x1c] sm:$0xf]
        %v359 = vld [vmem:[%s302 + $0x20] sm:$0xf]
        %v360 = vld [vmem:[%s302 + $0x24] sm:$0xf]
        %v361 = vld [vmem:[%s302 + $0x28] sm:$0xf]
        %v362 = vld [vmem:[%s302 + $0x2c] sm:$0xf]
        %v363 = vld [vmem:[%s302 + $0x30] sm:$0xf]
        %v364 = vld [vmem:[%s302 + $0x34] sm:$0xf]
        %v365 = vld [vmem:[%s302 + $0x38] sm:$0xf]
        %v366 = vld [vmem:[%s302 + $0x3c] sm:$0xf]
        %v367 = vld [vmem:[%s302 + $0x40] sm:$0xf]
        %v368 = vld [vmem:[%s302 + $0x44] sm:$0xf]
        %v369 = vld [vmem:[%s302 + $0x48] sm:$0xf]
        %v370 = vld [vmem:[%s302 + $0x4c] sm:$0xf]
        %v371 = vld [vmem:[%s302 + $0x50] sm:$0xf]
        %v372 = vld [vmem:[%s302 + $0x54] sm:$0xf]
        %v373 = vld [vmem:[%s302 + $0x58] sm:$0xf]
        %v374 = vld [vmem:[%s302 + $0x5c] sm:$0xf]
        %v375 = vld [vmem:[%s302 + $0x60] sm:$0xf]
        %v376 = vld [vmem:[%s302 + $0x64] sm:$0xf]
        %v377 = vld [vmem:[%s302 + $0x68] sm:$0xf]
        %v378 = vld [vmem:[%s302 + $0x6c] sm:$0xf]
        %v379 = vld [vmem:[%s302 + $0x70] sm:$0xf]
        %v380 = vld [vmem:[%s302 + $0x74] sm:$0xf]
        %v381 = vld [vmem:[%s302 + $0x78] sm:$0xf]
        %v382 = vld [vmem:[%s302 + $0x7c] sm:$0xf]
        %v383 = vld [vmem:[#allocation5] sm:$0xf]
        %v384 = vld [vmem:[#allocation5 + $0x4] sm:$0xf]
        %v385 = vld [vmem:[#allocation5 + $0x8] sm:$0xf]
        %v386 = vld [vmem:[#allocation5 + $0xc] sm:$0xf]
        %v387 = vld [vmem:[#allocation5 + $0x10] sm:$0xf]
        %v388 = vld [vmem:[#allocation5 + $0x14] sm:$0xf]
        %v389 = vld [vmem:[#allocation5 + $0x18] sm:$0xf]
        %v390 = vld [vmem:[#allocation5 + $0x1c] sm:$0xf]
        %v391 = vld [vmem:[#allocation5 + $0x20] sm:$0xf]
        %v392 = vld [vmem:[#allocation5 + $0x24] sm:$0xf]
        %v393 = vld [vmem:[#allocation5 + $0x28] sm:$0xf]
        %v394 = vld [vmem:[#allocation5 + $0x2c] sm:$0xf]
        %v395 = vld [vmem:[#allocation5 + $0x30] sm:$0xf]
        %v396 = vld [vmem:[#allocation5 + $0x34] sm:$0xf]
        %v397 = vld [vmem:[#allocation5 + $0x38] sm:$0xf]
        %v398 = vld [vmem:[#allocation5 + $0x3c] sm:$0xf]
        %v399 = vld [vmem:[%s2] sm:$0x1]
        %v401 = vperm.slane %v399, 0
        %v435 = vunpack.c.l.b16 %v351
        %v436 = vunpack.c.l.b16 %v352
        %v437 = vunpack.c.l.b16 %v353
        %v438 = vunpack.c.l.b16 %v354
        %v439 = vunpack.c.l.b16 %v355
        %v440 = vunpack.c.l.b16 %v356
        %v441 = vunpack.c.l.b16 %v357
        %v442 = vunpack.c.l.b16 %v358
        %v443 = vunpack.c.l.b16 %v359
        %v444 = vunpack.c.l.b16 %v360
        %v445 = vunpack.c.l.b16 %v361
        %v446 = vunpack.c.l.b16 %v362
        %v447 = vunpack.c.l.b16 %v363
        %v448 = vunpack.c.l.b16 %v364
        %v449 = vunpack.c.l.b16 %v365
        %v450 = vunpack.c.l.b16 %v366
        %v451 = vunpack.c.l.b16 %v367
        %v452 = vunpack.c.l.b16 %v368
        %v453 = vunpack.c.l.b16 %v369
        %v454 = vunpack.c.l.b16 %v370
        %v455 = vunpack.c.l.b16 %v371
        %v456 = vunpack.c.l.b16 %v372
        %v457 = vunpack.c.l.b16 %v373
        %v458 = vunpack.c.l.b16 %v374
        %v459 = vunpack.c.l.b16 %v375
        %v460 = vunpack.c.l.b16 %v376
        %v461 = vunpack.c.l.b16 %v377
        %v462 = vunpack.c.l.b16 %v378
        %v463 = vunpack.c.l.b16 %v379
        %v464 = vunpack.c.l.b16 %v380
        %v465 = vunpack.c.l.b16 %v381
        %v466 = vunpack.c.l.b16 %v382
        %v467 = vpack.c.b16 %v436, %v435
        %v468 = vpack.c.b16 %v438, %v437
        %v469 = vpack.c.b16 %v440, %v439
        %v470 = vpack.c.b16 %v442, %v441
        %v471 = vpack.c.b16 %v444, %v443
        %v472 = vpack.c.b16 %v446, %v445
        %v473 = vpack.c.b16 %v448, %v447
        %v474 = vpack.c.b16 %v450, %v449
        %v475 = vpack.c.b16 %v452, %v451
        %v476 = vpack.c.b16 %v454, %v453
        %v477 = vpack.c.b16 %v456, %v455
        %v478 = vpack.c.b16 %v458, %v457
        %v479 = vpack.c.b16 %v460, %v459
        %v480 = vpack.c.b16 %v462, %v461
        %v481 = vpack.c.b16 %v464, %v463
        %v482 = vpack.c.b16 %v466, %v465
        %v515 = vunpack.c.l.b16 %v383
        %v516 = vunpack.c.l.b16 %v384
        %v517 = vunpack.c.l.b16 %v385
        %v518 = vunpack.c.l.b16 %v386
        %v519 = vunpack.c.l.b16 %v387
        %v520 = vunpack.c.l.b16 %v388
        %v521 = vunpack.c.l.b16 %v389
        %v522 = vunpack.c.l.b16 %v390
        %v523 = vunpack.c.l.b16 %v391
        %v524 = vunpack.c.l.b16 %v392
        %v525 = vunpack.c.l.b16 %v393
        %v526 = vunpack.c.l.b16 %v394
        %v527 = vunpack.c.l.b16 %v395
        %v528 = vunpack.c.l.b16 %v396
        %v529 = vunpack.c.l.b16 %v397
        %v530 = vunpack.c.l.b16 %v398
        %v531 = vpack.c.b16 %v516, %v515
        %v532 = vpack.c.b16 %v518, %v517
        %v533 = vpack.c.b16 %v520, %v519
        %v534 = vpack.c.b16 %v522, %v521
        %v535 = vpack.c.b16 %v524, %v523
        %v536 = vpack.c.b16 %v526, %v525
        %v537 = vpack.c.b16 %v528, %v527
        %v538 = vpack.c.b16 %v530, %v529
        %547 = vmatpush.bf16.msra.mxu0 %v538
        %548 = vmatpush.bf16.msra.mxu0 %v537
        %549 = vmatpush.bf16.msra.mxu0 %v536
        %550 = vmatpush.bf16.msra.mxu0 %v535
        %551 = vmatpush.bf16.msra.mxu0 %v534
        %552 = vmatpush.bf16.msra.mxu0 %v533
        %553 = vmatpush.bf16.msra.mxu0 %v532
        %554 = vmatpush.bf16.msra.mxu0 %v531
        %555 = vmatmul.bf16.gmra.mxu0 %v467
        %v556 = vpop.f32.mrf.mxu0
        %v557 = vadd.f32 %v401, %v556
        %v558 = vpop.f32.mrf.mxu0
        %v559 = vadd.f32 %v401, %v558
        %560 = vmatmul.bf16.gmra.mxu0 %v468
        %v561 = vpop.f32.mrf.mxu0
        %v562 = vadd.f32 %v401, %v561
        %v563 = vpop.f32.mrf.mxu0
        %v564 = vadd.f32 %v401, %v563
        %565 = vmatmul.bf16.gmra.mxu0 %v469
        %v566 = vpop.f32.mrf.mxu0
        %v567 = vadd.f32 %v401, %v566
        %v568 = vpop.f32.mrf.mxu0
        %v569 = vadd.f32 %v401, %v568
        %570 = vmatmul.bf16.gmra.mxu0 %v470
        %v571 = vpop.f32.mrf.mxu0
        %v572 = vadd.f32 %v401, %v571
        %v573 = vpop.f32.mrf.mxu0
        %v574 = vadd.f32 %v401, %v573
        %575 = vmatmul.bf16.gmra.mxu0 %v471
        %v576 = vpop.f32.mrf.mxu0
        %v577 = vadd.f32 %v401, %v576
        %v578 = vpop.f32.mrf.mxu0
        %v579 = vadd.f32 %v401, %v578
        %580 = vmatmul.bf16.gmra.mxu0 %v472
        %v581 = vpop.f32.mrf.mxu0
        %v582 = vadd.f32 %v401, %v581
        %v583 = vpop.f32.mrf.mxu0
        %v584 = vadd.f32 %v401, %v583
        %585 = vmatmul.bf16.gmra.mxu0 %v473
        %v586 = vpop.f32.mrf.mxu0
        %v587 = vadd.f32 %v401, %v586
        %v588 = vpop.f32.mrf.mxu0
        %v589 = vadd.f32 %v401, %v588
        %590 = vmatmul.bf16.gmra.mxu0 %v474
        %v591 = vpop.f32.mrf.mxu0
        %v592 = vadd.f32 %v401, %v591
        %v593 = vpop.f32.mrf.mxu0
        %v594 = vadd.f32 %v401, %v593
        %595 = vmatmul.bf16.gmra.mxu0 %v475
        %v596 = vpop.f32.mrf.mxu0
        %v597 = vadd.f32 %v401, %v596
        %v598 = vpop.f32.mrf.mxu0
        %v599 = vadd.f32 %v401, %v598
        %600 = vmatmul.bf16.gmra.mxu0 %v476
        %v601 = vpop.f32.mrf.mxu0
        %v602 = vadd.f32 %v401, %v601
        %v603 = vpop.f32.mrf.mxu0
        %v604 = vadd.f32 %v401, %v603
        %605 = vmatmul.bf16.gmra.mxu0 %v477
        %v606 = vpop.f32.mrf.mxu0
        %v607 = vadd.f32 %v401, %v606
        %v608 = vpop.f32.mrf.mxu0
        %v609 = vadd.f32 %v401, %v608
        %610 = vmatmul.bf16.gmra.mxu0 %v478
        %v611 = vpop.f32.mrf.mxu0
        %v612 = vadd.f32 %v401, %v611
        %v613 = vpop.f32.mrf.mxu0
        %v614 = vadd.f32 %v401, %v613
        %615 = vmatmul.bf16.gmra.mxu0 %v479
        %v616 = vpop.f32.mrf.mxu0
        %v617 = vadd.f32 %v401, %v616
        %v618 = vpop.f32.mrf.mxu0
        %v619 = vadd.f32 %v401, %v618
        %620 = vmatmul.bf16.gmra.mxu0 %v480
        %v621 = vpop.f32.mrf.mxu0
        %v622 = vadd.f32 %v401, %v621
        %v623 = vpop.f32.mrf.mxu0
        %v624 = vadd.f32 %v401, %v623
        %625 = vmatmul.bf16.gmra.mxu0 %v481
        %v626 = vpop.f32.mrf.mxu0
        %v627 = vadd.f32 %v401, %v626
        %v628 = vpop.f32.mrf.mxu0
        %v629 = vadd.f32 %v401, %v628
        %630 = vmatmul.bf16.gmra.mxu0 %v482
        %v631 = vpop.f32.mrf.mxu0
        %v632 = vadd.f32 %v401, %v631
        %v633 = vpop.f32.mrf.mxu0
        %v634 = vadd.f32 %v401, %v633
        %635 = vdwg.mxu0
        %v636 = vmax.f32 %v557, 0.0
        %v637 = vmax.f32 %v559, 0.0
        %v638 = vmax.f32 %v562, 0.0
        %v639 = vmax.f32 %v564, 0.0
        %v640 = vmax.f32 %v567, 0.0
        %v641 = vmax.f32 %v569, 0.0
        %v642 = vmax.f32 %v572, 0.0
        %v643 = vmax.f32 %v574, 0.0
        %v644 = vmax.f32 %v577, 0.0
        %v645 = vmax.f32 %v579, 0.0
        %v646 = vmax.f32 %v582, 0.0
        %v647 = vmax.f32 %v584, 0.0
        %v648 = vmax.f32 %v587, 0.0
        %v649 = vmax.f32 %v589, 0.0
        %v650 = vmax.f32 %v592, 0.0
        %v651 = vmax.f32 %v594, 0.0
        %v652 = vmax.f32 %v597, 0.0
        %v653 = vmax.f32 %v599, 0.0
        %v654 = vmax.f32 %v602, 0.0
        %v655 = vmax.f32 %v604, 0.0
        %v656 = vmax.f32 %v607, 0.0
        %v657 = vmax.f32 %v609, 0.0
        %v658 = vmax.f32 %v612, 0.0
        %v659 = vmax.f32 %v614, 0.0
        %v660 = vmax.f32 %v617, 0.0
        %v661 = vmax.f32 %v619, 0.0
        %v662 = vmax.f32 %v622, 0.0
        %v663 = vmax.f32 %v624, 0.0
        %v664 = vmax.f32 %v627, 0.0
        %v665 = vmax.f32 %v629, 0.0
        %v666 = vmax.f32 %v632, 0.0
        %v667 = vmax.f32 %v634, 0.0
        %v668 = vpack.c.bf16 %v637, %v636
        %v669 = vpack.c.bf16 %v639, %v638
        %v670 = vpack.c.bf16 %v641, %v640
        %v671 = vpack.c.bf16 %v643, %v642
        %v672 = vpack.c.bf16 %v645, %v644
        %v673 = vpack.c.bf16 %v647, %v646
        %v674 = vpack.c.bf16 %v649, %v648
        %v675 = vpack.c.bf16 %v651, %v650
        %v676 = vpack.c.bf16 %v653, %v652
        %v677 = vpack.c.bf16 %v655, %v654
        %v678 = vpack.c.bf16 %v657, %v656
        %v679 = vpack.c.bf16 %v659, %v658
        %v680 = vpack.c.bf16 %v661, %v660
        %v681 = vpack.c.bf16 %v663, %v662
        %v682 = vpack.c.bf16 %v665, %v664
        %v683 = vpack.c.bf16 %v667, %v666
        %v684 = vld [vmem:[#allocation7] sm:$0xf]
        %v685 = vld [vmem:[#allocation7 + $0x4] sm:$0xf]
        %v686 = vld [vmem:[#allocation7 + $0x8] sm:$0xf]
        %v687 = vld [vmem:[#allocation7 + $0xc] sm:$0xf]
        %v688 = vld [vmem:[#allocation7 + $0x10] sm:$0xf]
        %v689 = vld [vmem:[#allocation7 + $0x14] sm:$0xf]
        %v690 = vld [vmem:[#allocation7 + $0x18] sm:$0xf]
        %v691 = vld [vmem:[#allocation7 + $0x1c] sm:$0xf]
        %v692 = vld [vmem:[#allocation7 + $0x20] sm:$0xf]
        %v693 = vld [vmem:[#allocation7 + $0x24] sm:$0xf]
        %v694 = vld [vmem:[#allocation7 + $0x28] sm:$0xf]
        %v695 = vld [vmem:[#allocation7 + $0x2c] sm:$0xf]
        %v696 = vld [vmem:[#allocation7 + $0x30] sm:$0xf]
        %v697 = vld [vmem:[#allocation7 + $0x34] sm:$0xf]
        %v698 = vld [vmem:[#allocation7 + $0x38] sm:$0xf]
        %v699 = vld [vmem:[#allocation7 + $0x3c] sm:$0xf]
        %v700 = vld [vmem:[%s4] sm:$0x1]
        %v702 = vperm.slane %v700, 0
        %v720 = vunpack.c.l.b16 %v684
        %v721 = vunpack.c.l.b16 %v685
        %v722 = vunpack.c.l.b16 %v686
        %v723 = vunpack.c.l.b16 %v687
        %v724 = vunpack.c.l.b16 %v688
        %v725 = vunpack.c.l.b16 %v689
        %v726 = vunpack.c.l.b16 %v690
        %v727 = vunpack.c.l.b16 %v691
        %v728 = vunpack.c.l.b16 %v692
        %v729 = vunpack.c.l.b16 %v693
        %v730 = vunpack.c.l.b16 %v694
        %v731 = vunpack.c.l.b16 %v695
        %v732 = vunpack.c.l.b16 %v696
        %v733 = vunpack.c.l.b16 %v697
        %v734 = vunpack.c.l.b16 %v698
        %v735 = vunpack.c.l.b16 %v699
        %v736 = vpack.c.b16 %v721, %v720
        %v737 = vpack.c.b16 %v723, %v722
        %v738 = vpack.c.b16 %v725, %v724
        %v739 = vpack.c.b16 %v727, %v726
        %v740 = vpack.c.b16 %v729, %v728
        %v741 = vpack.c.b16 %v731, %v730
        %v742 = vpack.c.b16 %v733, %v732
        %v743 = vpack.c.b16 %v735, %v734
        %752 = vmatpush.bf16.msra.mxu0 %v743
        %753 = vmatpush.bf16.msra.mxu0 %v742
        %754 = vmatpush.bf16.msra.mxu0 %v741
        %755 = vmatpush.bf16.msra.mxu0 %v740
        %756 = vmatpush.bf16.msra.mxu0 %v739
        %757 = vmatpush.bf16.msra.mxu0 %v738
        %758 = vmatpush.bf16.msra.mxu0 %v737
        %759 = vmatpush.bf16.msra.mxu0 %v736
        %760 = vmatmul.bf16.gmra.mxu0 %v668
        %v761 = vpop.f32.mrf.mxu0
        %v762 = vadd.f32 %v702, %v761
        %v763 = vpop.f32.mrf.mxu0
        %v764 = vadd.f32 %v702, %v763
        %765 = vmatmul.bf16.gmra.mxu0 %v669
        %v766 = vpop.f32.mrf.mxu0
        %v767 = vadd.f32 %v702, %v766
        %v768 = vpop.f32.mrf.mxu0
        %v769 = vadd.f32 %v702, %v768
        %770 = vmatmul.bf16.gmra.mxu0 %v670
        %v771 = vpop.f32.mrf.mxu0
        %v772 = vadd.f32 %v702, %v771
        %v773 = vpop.f32.mrf.mxu0
        %v774 = vadd.f32 %v702, %v773
        %775 = vmatmul.bf16.gmra.mxu0 %v671
        %v776 = vpop.f32.mrf.mxu0
        %v777 = vadd.f32 %v702, %v776
        %v778 = vpop.f32.mrf.mxu0
        %v779 = vadd.f32 %v702, %v778
        %780 = vmatmul.bf16.gmra.mxu0 %v672
        %v781 = vpop.f32.mrf.mxu0
        %v782 = vadd.f32 %v702, %v781
        %v783 = vpop.f32.mrf.mxu0
        %v784 = vadd.f32 %v702, %v783
        %785 = vmatmul.bf16.gmra.mxu0 %v673
        %v786 = vpop.f32.mrf.mxu0
        %v787 = vadd.f32 %v702, %v786
        %v788 = vpop.f32.mrf.mxu0
        %v789 = vadd.f32 %v702, %v788
        %790 = vmatmul.bf16.gmra.mxu0 %v674
        %v791 = vpop.f32.mrf.mxu0
        %v792 = vadd.f32 %v702, %v791
        %v793 = vpop.f32.mrf.mxu0
        %v794 = vadd.f32 %v702, %v793
        %795 = vmatmul.bf16.gmra.mxu0 %v675
        %v796 = vpop.f32.mrf.mxu0
        %v797 = vadd.f32 %v702, %v796
        %v798 = vpop.f32.mrf.mxu0
        %v799 = vadd.f32 %v702, %v798
        %800 = vmatmul.bf16.gmra.mxu0 %v676
        %v801 = vpop.f32.mrf.mxu0
        %v802 = vadd.f32 %v702, %v801
        %v803 = vpop.f32.mrf.mxu0
        %v804 = vadd.f32 %v702, %v803
        %805 = vmatmul.bf16.gmra.mxu0 %v677
        %v806 = vpop.f32.mrf.mxu0
        %v807 = vadd.f32 %v702, %v806
        %v808 = vpop.f32.mrf.mxu0
        %v809 = vadd.f32 %v702, %v808
        %810 = vmatmul.bf16.gmra.mxu0 %v678
        %v811 = vpop.f32.mrf.mxu0
        %v812 = vadd.f32 %v702, %v811
        %v813 = vpop.f32.mrf.mxu0
        %v814 = vadd.f32 %v702, %v813
        %815 = vmatmul.bf16.gmra.mxu0 %v679
        %v816 = vpop.f32.mrf.mxu0
        %v817 = vadd.f32 %v702, %v816
        %v818 = vpop.f32.mrf.mxu0
        %v819 = vadd.f32 %v702, %v818
        %820 = vmatmul.bf16.gmra.mxu0 %v680
        %v821 = vpop.f32.mrf.mxu0
        %v822 = vadd.f32 %v702, %v821
        %v823 = vpop.f32.mrf.mxu0
        %v824 = vadd.f32 %v702, %v823
        %825 = vmatmul.bf16.gmra.mxu0 %v681
        %v826 = vpop.f32.mrf.mxu0
        %v827 = vadd.f32 %v702, %v826
        %v828 = vpop.f32.mrf.mxu0
        %v829 = vadd.f32 %v702, %v828
        %830 = vmatmul.bf16.gmra.mxu0 %v682
        %v831 = vpop.f32.mrf.mxu0
        %v832 = vadd.f32 %v702, %v831
        %v833 = vpop.f32.mrf.mxu0
        %v834 = vadd.f32 %v702, %v833
        %835 = vmatmul.bf16.gmra.mxu0 %v683
        %v836 = vpop.f32.mrf.mxu0
        %v837 = vadd.f32 %v702, %v836
        %v838 = vpop.f32.mrf.mxu0
        %v839 = vadd.f32 %v702, %v838
        %840 = vdwg.mxu0
        %v841 = vmax.f32 %v762, 0.0
        %v842 = vmax.f32 %v764, 0.0
        %v843 = vmax.f32 %v767, 0.0
        %v844 = vmax.f32 %v769, 0.0
        %v845 = vmax.f32 %v772, 0.0
        %v846 = vmax.f32 %v774, 0.0
        %v847 = vmax.f32 %v777, 0.0
        %v848 = vmax.f32 %v779, 0.0
        %v849 = vmax.f32 %v782, 0.0
        %v850 = vmax.f32 %v784, 0.0
        %v851 = vmax.f32 %v787, 0.0
        %v852 = vmax.f32 %v789, 0.0
        %v853 = vmax.f32 %v792, 0.0
        %v854 = vmax.f32 %v794, 0.0
        %v855 = vmax.f32 %v797, 0.0
        %v856 = vmax.f32 %v799, 0.0
        %v857 = vmax.f32 %v802, 0.0
        %v858 = vmax.f32 %v804, 0.0
        %v859 = vmax.f32 %v807, 0.0
        %v860 = vmax.f32 %v809, 0.0
        %v861 = vmax.f32 %v812, 0.0
        %v862 = vmax.f32 %v814, 0.0
        %v863 = vmax.f32 %v817, 0.0
        %v864 = vmax.f32 %v819, 0.0
        %v865 = vmax.f32 %v822, 0.0
        %v866 = vmax.f32 %v824, 0.0
        %v867 = vmax.f32 %v827, 0.0
        %v868 = vmax.f32 %v829, 0.0
        %v869 = vmax.f32 %v832, 0.0
        %v870 = vmax.f32 %v834, 0.0
        %v871 = vmax.f32 %v837, 0.0
        %v872 = vmax.f32 %v839, 0.0
        %v873 = vpack.c.bf16 %v842, %v841
        %v874 = vpack.c.bf16 %v844, %v843
        %v875 = vpack.c.bf16 %v846, %v845
        %v876 = vpack.c.bf16 %v848, %v847
        %v877 = vpack.c.bf16 %v850, %v849
        %v878 = vpack.c.bf16 %v852, %v851
        %v879 = vpack.c.bf16 %v854, %v853
        %v880 = vpack.c.bf16 %v856, %v855
        %v881 = vpack.c.bf16 %v858, %v857
        %v882 = vpack.c.bf16 %v860, %v859
        %v883 = vpack.c.bf16 %v862, %v861
        %v884 = vpack.c.bf16 %v864, %v863
        %v885 = vpack.c.bf16 %v866, %v865
        %v886 = vpack.c.bf16 %v868, %v867
        %v887 = vpack.c.bf16 %v870, %v869
        %v888 = vpack.c.bf16 %v872, %v871
        %v889 = vld [vmem:[#allocation8] sm:$0xf]
        %v890 = vld [vmem:[#allocation8 + $0x4] sm:$0xf]
        %v891 = vld [vmem:[#allocation8 + $0x8] sm:$0xf]
        %v892 = vld [vmem:[#allocation8 + $0xc] sm:$0xf]
        %v893 = vld [vmem:[#allocation8 + $0x10] sm:$0xf]
        %v894 = vld [vmem:[#allocation8 + $0x14] sm:$0xf]
        %v895 = vld [vmem:[#allocation8 + $0x18] sm:$0xf]
        %v896 = vld [vmem:[#allocation8 + $0x1c] sm:$0xf]
        %v897 = vld [vmem:[#allocation8 + $0x20] sm:$0xf]
        %v898 = vld [vmem:[#allocation8 + $0x24] sm:$0xf]
        %v899 = vld [vmem:[#allocation8 + $0x28] sm:$0xf]
        %v900 = vld [vmem:[#allocation8 + $0x2c] sm:$0xf]
        %v901 = vld [vmem:[#allocation8 + $0x30] sm:$0xf]
        %v902 = vld [vmem:[#allocation8 + $0x34] sm:$0xf]
        %v903 = vld [vmem:[#allocation8 + $0x38] sm:$0xf]
        %v904 = vld [vmem:[#allocation8 + $0x3c] sm:$0xf]
        %v905 = vld [vmem:[%s6] sm:$0x1]
        %v907 = vperm.slane %v905, 0
        %v925 = vunpack.c.l.b16 %v889
        %v926 = vunpack.c.l.b16 %v890
        %v927 = vunpack.c.l.b16 %v891
        %v928 = vunpack.c.l.b16 %v892
        %v929 = vunpack.c.l.b16 %v893
        %v930 = vunpack.c.l.b16 %v894
        %v931 = vunpack.c.l.b16 %v895
        %v932 = vunpack.c.l.b16 %v896
        %v933 = vunpack.c.l.b16 %v897
        %v934 = vunpack.c.l.b16 %v898
        %v935 = vunpack.c.l.b16 %v899
        %v936 = vunpack.c.l.b16 %v900
        %v937 = vunpack.c.l.b16 %v901
        %v938 = vunpack.c.l.b16 %v902
        %v939 = vunpack.c.l.b16 %v903
        %v940 = vunpack.c.l.b16 %v904
        %v941 = vpack.c.b16 %v926, %v925
        %v942 = vpack.c.b16 %v928, %v927
        %v943 = vpack.c.b16 %v930, %v929
        %v944 = vpack.c.b16 %v932, %v931
        %v945 = vpack.c.b16 %v934, %v933
        %v946 = vpack.c.b16 %v936, %v935
        %v947 = vpack.c.b16 %v938, %v937
        %v948 = vpack.c.b16 %v940, %v939
        %957 = vmatpush.bf16.msra.mxu0 %v948
        %958 = vmatpush.bf16.msra.mxu0 %v947
        %959 = vmatpush.bf16.msra.mxu0 %v946
        %960 = vmatpush.bf16.msra.mxu0 %v945
        %961 = vmatpush.bf16.msra.mxu0 %v944
        %962 = vmatpush.bf16.msra.mxu0 %v943
        %963 = vmatpush.bf16.msra.mxu0 %v942
        %964 = vmatpush.bf16.msra.mxu0 %v941
        %965 = vmatmul.bf16.gmra.mxu0 %v873
        %v966 = vpop.f32.mrf.mxu0
        %v967 = vadd.f32 %v907, %v966
        %v968 = vpop.f32.mrf.mxu0
        %v969 = vadd.f32 %v907, %v968
        %970 = vmatmul.bf16.gmra.mxu0 %v874
        %v971 = vpop.f32.mrf.mxu0
        %v972 = vadd.f32 %v907, %v971
        %v973 = vpop.f32.mrf.mxu0
        %v974 = vadd.f32 %v907, %v973
        %975 = vmatmul.bf16.gmra.mxu0 %v875
        %v976 = vpop.f32.mrf.mxu0
        %v977 = vadd.f32 %v907, %v976
        %v978 = vpop.f32.mrf.mxu0
        %v979 = vadd.f32 %v907, %v978
        %980 = vmatmul.bf16.gmra.mxu0 %v876
        %v981 = vpop.f32.mrf.mxu0
        %v982 = vadd.f32 %v907, %v981
        %v983 = vpop.f32.mrf.mxu0
        %v984 = vadd.f32 %v907, %v983
        %985 = vmatmul.bf16.gmra.mxu0 %v877
        %v986 = vpop.f32.mrf.mxu0
        %v987 = vadd.f32 %v907, %v986
        %v988 = vpop.f32.mrf.mxu0
        %v989 = vadd.f32 %v907, %v988
        %990 = vmatmul.bf16.gmra.mxu0 %v878
        %v991 = vpop.f32.mrf.mxu0
        %v992 = vadd.f32 %v907, %v991
        %v993 = vpop.f32.mrf.mxu0
        %v994 = vadd.f32 %v907, %v993
        %995 = vmatmul.bf16.gmra.mxu0 %v879
        %v996 = vpop.f32.mrf.mxu0
        %v997 = vadd.f32 %v907, %v996
        %v998 = vpop.f32.mrf.mxu0
        %v999 = vadd.f32 %v907, %v998
        %1000 = vmatmul.bf16.gmra.mxu0 %v880
        %v1001 = vpop.f32.mrf.mxu0
        %v1002 = vadd.f32 %v907, %v1001
        %v1003 = vpop.f32.mrf.mxu0
        %v1004 = vadd.f32 %v907, %v1003
        %1005 = vmatmul.bf16.gmra.mxu0 %v881
        %v1006 = vpop.f32.mrf.mxu0
        %v1007 = vadd.f32 %v907, %v1006
        %v1008 = vpop.f32.mrf.mxu0
        %v1009 = vadd.f32 %v907, %v1008
        %1010 = vmatmul.bf16.gmra.mxu0 %v882
        %v1011 = vpop.f32.mrf.mxu0
        %v1012 = vadd.f32 %v907, %v1011
        %v1013 = vpop.f32.mrf.mxu0
        %v1014 = vadd.f32 %v907, %v1013
        %1015 = vmatmul.bf16.gmra.mxu0 %v883
        %v1016 = vpop.f32.mrf.mxu0
        %v1017 = vadd.f32 %v907, %v1016
        %v1018 = vpop.f32.mrf.mxu0
        %v1019 = vadd.f32 %v907, %v1018
        %1020 = vmatmul.bf16.gmra.mxu0 %v884
        %v1021 = vpop.f32.mrf.mxu0
        %v1022 = vadd.f32 %v907, %v1021
        %v1023 = vpop.f32.mrf.mxu0
        %v1024 = vadd.f32 %v907, %v1023
        %1025 = vmatmul.bf16.gmra.mxu0 %v885
        %v1026 = vpop.f32.mrf.mxu0
        %v1027 = vadd.f32 %v907, %v1026
        %v1028 = vpop.f32.mrf.mxu0
        %v1029 = vadd.f32 %v907, %v1028
        %1030 = vmatmul.bf16.gmra.mxu0 %v886
        %v1031 = vpop.f32.mrf.mxu0
        %v1032 = vadd.f32 %v907, %v1031
        %v1033 = vpop.f32.mrf.mxu0
        %v1034 = vadd.f32 %v907, %v1033
        %1035 = vmatmul.bf16.gmra.mxu0 %v887
        %v1036 = vpop.f32.mrf.mxu0
        %v1037 = vadd.f32 %v907, %v1036
        %v1038 = vpop.f32.mrf.mxu0
        %v1039 = vadd.f32 %v907, %v1038
        %1040 = vmatmul.bf16.gmra.mxu0 %v888
        %v1041 = vpop.f32.mrf.mxu0
        %v1042 = vadd.f32 %v907, %v1041
        %v1043 = vpop.f32.mrf.mxu0
        %v1044 = vadd.f32 %v907, %v1043
        %1045 = vdwg.mxu0
        %v1046 = vxor.u32 %v967, 2147483648
        %v1047 = vxor.u32 %v969, 2147483648
        %v1048 = vxor.u32 %v972, 2147483648
        %v1049 = vxor.u32 %v974, 2147483648
        %v1050 = vxor.u32 %v977, 2147483648
        %v1051 = vxor.u32 %v979, 2147483648
        %v1052 = vxor.u32 %v982, 2147483648
        %v1053 = vxor.u32 %v984, 2147483648
        %v1054 = vxor.u32 %v987, 2147483648
        %v1055 = vxor.u32 %v989, 2147483648
        %v1056 = vxor.u32 %v992, 2147483648
        %v1057 = vxor.u32 %v994, 2147483648
        %v1058 = vxor.u32 %v997, 2147483648
        %v1059 = vxor.u32 %v999, 2147483648
        %v1060 = vxor.u32 %v1002, 2147483648
        %v1061 = vxor.u32 %v1004, 2147483648
        %v1062 = vxor.u32 %v1007, 2147483648
        %v1063 = vxor.u32 %v1009, 2147483648
        %v1064 = vxor.u32 %v1012, 2147483648
        %v1065 = vxor.u32 %v1014, 2147483648
        %v1066 = vxor.u32 %v1017, 2147483648
        %v1067 = vxor.u32 %v1019, 2147483648
        %v1068 = vxor.u32 %v1022, 2147483648
        %v1069 = vxor.u32 %v1024, 2147483648
        %v1070 = vxor.u32 %v1027, 2147483648
        %v1071 = vxor.u32 %v1029, 2147483648
        %v1072 = vxor.u32 %v1032, 2147483648
        %v1073 = vxor.u32 %v1034, 2147483648
        %v1074 = vxor.u32 %v1037, 2147483648
        %v1075 = vxor.u32 %v1039, 2147483648
        %v1076 = vxor.u32 %v1042, 2147483648
        %v1077 = vxor.u32 %v1044, 2147483648
        %v1078 = vmul.f32 %v1046, 1.442695
        %v1079 = vpow.pop %v1078
        %v1080 = vmul.f32 %v1047, 1.442695
        %v1081 = vpow.pop %v1080
        %v1082 = vmul.f32 %v1048, 1.442695
        %v1083 = vpow.pop %v1082
        %v1084 = vmul.f32 %v1049, 1.442695
        %v1085 = vpow.pop %v1084
        %v1086 = vmul.f32 %v1050, 1.442695
        %v1087 = vpow.pop %v1086
        %v1088 = vmul.f32 %v1051, 1.442695
        %v1089 = vpow.pop %v1088
        %v1090 = vmul.f32 %v1052, 1.442695
        %v1091 = vpow.pop %v1090
        %v1092 = vmul.f32 %v1053, 1.442695
        %v1093 = vpow.pop %v1092
        %v1094 = vmul.f32 %v1054, 1.442695
        %v1095 = vpow.pop %v1094
        %v1096 = vmul.f32 %v1055, 1.442695
        %v1097 = vpow.pop %v1096
        %v1098 = vmul.f32 %v1056, 1.442695
        %v1099 = vpow.pop %v1098
        %v1100 = vmul.f32 %v1057, 1.442695
        %v1101 = vpow.pop %v1100
        %v1102 = vmul.f32 %v1058, 1.442695
        %v1103 = vpow.pop %v1102
        %v1104 = vmul.f32 %v1059, 1.442695
        %v1105 = vpow.pop %v1104
        %v1106 = vmul.f32 %v1060, 1.442695
        %v1107 = vpow.pop %v1106
        %v1108 = vmul.f32 %v1061, 1.442695
        %v1109 = vpow.pop %v1108
        %v1110 = vmul.f32 %v1062, 1.442695
        %v1111 = vpow.pop %v1110
        %v1112 = vmul.f32 %v1063, 1.442695
        %v1113 = vpow.pop %v1112
        %v1114 = vmul.f32 %v1064, 1.442695
        %v1115 = vpow.pop %v1114
        %v1116 = vmul.f32 %v1065, 1.442695
        %v1117 = vpow.pop %v1116
        %v1118 = vmul.f32 %v1066, 1.442695
        %v1119 = vpow.pop %v1118
        %v1120 = vmul.f32 %v1067, 1.442695
        %v1121 = vpow.pop %v1120
        %v1122 = vmul.f32 %v1068, 1.442695
        %v1123 = vpow.pop %v1122
        %v1124 = vmul.f32 %v1069, 1.442695
        %v1125 = vpow.pop %v1124
        %v1126 = vmul.f32 %v1070, 1.442695
        %v1127 = vpow.pop %v1126
        %v1128 = vmul.f32 %v1071, 1.442695
        %v1129 = vpow.pop %v1128
        %v1130 = vmul.f32 %v1072, 1.442695
        %v1131 = vpow.pop %v1130
        %v1132 = vmul.f32 %v1073, 1.442695
        %v1133 = vpow.pop %v1132
        %v1134 = vmul.f32 %v1074, 1.442695
        %v1135 = vpow.pop %v1134
        %v1136 = vmul.f32 %v1075, 1.442695
        %v1137 = vpow.pop %v1136
        %v1138 = vmul.f32 %v1076, 1.442695
        %v1139 = vpow.pop %v1138
        %v1140 = vmul.f32 %v1077, 1.442695
        %v1141 = vpow.pop %v1140
        %v1142 = vadd.f32 %v1079, 1.0
        %v1143 = vadd.f32 %v1081, 1.0
        %v1144 = vadd.f32 %v1083, 1.0
        %v1145 = vadd.f32 %v1085, 1.0
        %v1146 = vadd.f32 %v1087, 1.0
        %v1147 = vadd.f32 %v1089, 1.0
        %v1148 = vadd.f32 %v1091, 1.0
        %v1149 = vadd.f32 %v1093, 1.0
        %v1150 = vadd.f32 %v1095, 1.0
        %v1151 = vadd.f32 %v1097, 1.0
        %v1152 = vadd.f32 %v1099, 1.0
        %v1153 = vadd.f32 %v1101, 1.0
        %v1154 = vadd.f32 %v1103, 1.0
        %v1155 = vadd.f32 %v1105, 1.0
        %v1156 = vadd.f32 %v1107, 1.0
        %v1157 = vadd.f32 %v1109, 1.0
        %v1158 = vadd.f32 %v1111, 1.0
        %v1159 = vadd.f32 %v1113, 1.0
        %v1160 = vadd.f32 %v1115, 1.0
        %v1161 = vadd.f32 %v1117, 1.0
        %v1162 = vadd.f32 %v1119, 1.0
        %v1163 = vadd.f32 %v1121, 1.0
        %v1164 = vadd.f32 %v1123, 1.0
        %v1165 = vadd.f32 %v1125, 1.0
        %v1166 = vadd.f32 %v1127, 1.0
        %v1167 = vadd.f32 %v1129, 1.0
        %v1168 = vadd.f32 %v1131, 1.0
        %v1169 = vadd.f32 %v1133, 1.0
        %v1170 = vadd.f32 %v1135, 1.0
        %v1171 = vadd.f32 %v1137, 1.0
        %v1172 = vadd.f32 %v1139, 1.0
        %v1173 = vadd.f32 %v1141, 1.0
        %v1174 = vrcp.pop %v1142
        %v1175 = vmul.f32 %v1142, %v1174
        %v1176 = vsub.f32 1.0, %v1175
        %v1177 = vmul.f32 %v1174, %v1176
        %v1178 = vadd.f32 %v1174, %v1177
        %vm1179 = vweird.f32 %v1142
        %vm1180 = vweird.f32 %v1174
        %vm1181 = vmor %vm1179, %vm1180
        %v1182 = vsel %vm1181, %v1174, %v1178
        %v1183 = vand.u32 2147483647, %v1142
        %vm1184 = vcmp.eq.f32.partialorder %v1183, 8.507059e+37
        %v1185 = vand.u32 %v1142, 2147483648
        %v1186 = vor.u32 1.1754944e-38, %v1185
        %v1187 = vsel %vm1184, %v1186, %v1182
        %v1188 = vmul.f32 1.0, %v1187
        %v1189 = vrcp.pop %v1143
        %v1190 = vmul.f32 %v1143, %v1189
        %v1191 = vsub.f32 1.0, %v1190
        %v1192 = vmul.f32 %v1189, %v1191
        %v1193 = vadd.f32 %v1189, %v1192
        %vm1194 = vweird.f32 %v1143
        %vm1195 = vweird.f32 %v1189
        %vm1196 = vmor %vm1194, %vm1195
        %v1197 = vsel %vm1196, %v1189, %v1193
        %v1198 = vand.u32 2147483647, %v1143
        %vm1199 = vcmp.eq.f32.partialorder %v1198, 8.507059e+37
        %v1200 = vand.u32 %v1143, 2147483648
        %v1201 = vor.u32 1.1754944e-38, %v1200
        %v1202 = vsel %vm1199, %v1201, %v1197
        %v1203 = vmul.f32 1.0, %v1202
        %v1204 = vrcp.pop %v1144
        %v1205 = vmul.f32 %v1144, %v1204
        %v1206 = vsub.f32 1.0, %v1205
        %v1207 = vmul.f32 %v1204, %v1206
        %v1208 = vadd.f32 %v1204, %v1207
        %vm1209 = vweird.f32 %v1144
        %vm1210 = vweird.f32 %v1204
        %vm1211 = vmor %vm1209, %vm1210
        %v1212 = vsel %vm1211, %v1204, %v1208
        %v1213 = vand.u32 2147483647, %v1144
        %vm1214 = vcmp.eq.f32.partialorder %v1213, 8.507059e+37
        %v1215 = vand.u32 %v1144, 2147483648
        %v1216 = vor.u32 1.1754944e-38, %v1215
        %v1217 = vsel %vm1214, %v1216, %v1212
        %v1218 = vmul.f32 1.0, %v1217
        %v1219 = vrcp.pop %v1145
        %v1220 = vmul.f32 %v1145, %v1219
        %v1221 = vsub.f32 1.0, %v1220
        %v1222 = vmul.f32 %v1219, %v1221
        %v1223 = vadd.f32 %v1219, %v1222
        %vm1224 = vweird.f32 %v1145
        %vm1225 = vweird.f32 %v1219
        %vm1226 = vmor %vm1224, %vm1225
        %v1227 = vsel %vm1226, %v1219, %v1223
        %v1228 = vand.u32 2147483647, %v1145
        %vm1229 = vcmp.eq.f32.partialorder %v1228, 8.507059e+37
        %v1230 = vand.u32 %v1145, 2147483648
        %v1231 = vor.u32 1.1754944e-38, %v1230
        %v1232 = vsel %vm1229, %v1231, %v1227
        %v1233 = vmul.f32 1.0, %v1232
        %v1234 = vrcp.pop %v1146
        %v1235 = vmul.f32 %v1146, %v1234
        %v1236 = vsub.f32 1.0, %v1235
        %v1237 = vmul.f32 %v1234, %v1236
        %v1238 = vadd.f32 %v1234, %v1237
        %vm1239 = vweird.f32 %v1146
        %vm1240 = vweird.f32 %v1234
        %vm1241 = vmor %vm1239, %vm1240
        %v1242 = vsel %vm1241, %v1234, %v1238
        %v1243 = vand.u32 2147483647, %v1146
        %vm1244 = vcmp.eq.f32.partialorder %v1243, 8.507059e+37
        %v1245 = vand.u32 %v1146, 2147483648
        %v1246 = vor.u32 1.1754944e-38, %v1245
        %v1247 = vsel %vm1244, %v1246, %v1242
        %v1248 = vmul.f32 1.0, %v1247
        %v1249 = vrcp.pop %v1147
        %v1250 = vmul.f32 %v1147, %v1249
        %v1251 = vsub.f32 1.0, %v1250
        %v1252 = vmul.f32 %v1249, %v1251
        %v1253 = vadd.f32 %v1249, %v1252
        %vm1254 = vweird.f32 %v1147
        %vm1255 = vweird.f32 %v1249
        %vm1256 = vmor %vm1254, %vm1255
        %v1257 = vsel %vm1256, %v1249, %v1253
        %v1258 = vand.u32 2147483647, %v1147
        %vm1259 = vcmp.eq.f32.partialorder %v1258, 8.507059e+37
        %v1260 = vand.u32 %v1147, 2147483648
        %v1261 = vor.u32 1.1754944e-38, %v1260
        %v1262 = vsel %vm1259, %v1261, %v1257
        %v1263 = vmul.f32 1.0, %v1262
        %v1264 = vrcp.pop %v1148
        %v1265 = vmul.f32 %v1148, %v1264
        %v1266 = vsub.f32 1.0, %v1265
        %v1267 = vmul.f32 %v1264, %v1266
        %v1268 = vadd.f32 %v1264, %v1267
        %vm1269 = vweird.f32 %v1148
        %vm1270 = vweird.f32 %v1264
        %vm1271 = vmor %vm1269, %vm1270
        %v1272 = vsel %vm1271, %v1264, %v1268
        %v1273 = vand.u32 2147483647, %v1148
        %vm1274 = vcmp.eq.f32.partialorder %v1273, 8.507059e+37
        %v1275 = vand.u32 %v1148, 2147483648
        %v1276 = vor.u32 1.1754944e-38, %v1275
        %v1277 = vsel %vm1274, %v1276, %v1272
        %v1278 = vmul.f32 1.0, %v1277
        %v1279 = vrcp.pop %v1149
        %v1280 = vmul.f32 %v1149, %v1279
        %v1281 = vsub.f32 1.0, %v1280
        %v1282 = vmul.f32 %v1279, %v1281
        %v1283 = vadd.f32 %v1279, %v1282
        %vm1284 = vweird.f32 %v1149
        %vm1285 = vweird.f32 %v1279
        %vm1286 = vmor %vm1284, %vm1285
        %v1287 = vsel %vm1286, %v1279, %v1283
        %v1288 = vand.u32 2147483647, %v1149
        %vm1289 = vcmp.eq.f32.partialorder %v1288, 8.507059e+37
        %v1290 = vand.u32 %v1149, 2147483648
        %v1291 = vor.u32 1.1754944e-38, %v1290
        %v1292 = vsel %vm1289, %v1291, %v1287
        %v1293 = vmul.f32 1.0, %v1292
        %v1294 = vrcp.pop %v1150
        %v1295 = vmul.f32 %v1150, %v1294
        %v1296 = vsub.f32 1.0, %v1295
        %v1297 = vmul.f32 %v1294, %v1296
        %v1298 = vadd.f32 %v1294, %v1297
        %vm1299 = vweird.f32 %v1150
        %vm1300 = vweird.f32 %v1294
        %vm1301 = vmor %vm1299, %vm1300
        %v1302 = vsel %vm1301, %v1294, %v1298
        %v1303 = vand.u32 2147483647, %v1150
        %vm1304 = vcmp.eq.f32.partialorder %v1303, 8.507059e+37
        %v1305 = vand.u32 %v1150, 2147483648
        %v1306 = vor.u32 1.1754944e-38, %v1305
        %v1307 = vsel %vm1304, %v1306, %v1302
        %v1308 = vmul.f32 1.0, %v1307
        %v1309 = vrcp.pop %v1151
        %v1310 = vmul.f32 %v1151, %v1309
        %v1311 = vsub.f32 1.0, %v1310
        %v1312 = vmul.f32 %v1309, %v1311
        %v1313 = vadd.f32 %v1309, %v1312
        %vm1314 = vweird.f32 %v1151
        %vm1315 = vweird.f32 %v1309
        %vm1316 = vmor %vm1314, %vm1315
        %v1317 = vsel %vm1316, %v1309, %v1313
        %v1318 = vand.u32 2147483647, %v1151
        %vm1319 = vcmp.eq.f32.partialorder %v1318, 8.507059e+37
        %v1320 = vand.u32 %v1151, 2147483648
        %v1321 = vor.u32 1.1754944e-38, %v1320
        %v1322 = vsel %vm1319, %v1321, %v1317
        %v1323 = vmul.f32 1.0, %v1322
        %v1324 = vrcp.pop %v1152
        %v1325 = vmul.f32 %v1152, %v1324
        %v1326 = vsub.f32 1.0, %v1325
        %v1327 = vmul.f32 %v1324, %v1326
        %v1328 = vadd.f32 %v1324, %v1327
        %vm1329 = vweird.f32 %v1152
        %vm1330 = vweird.f32 %v1324
        %vm1331 = vmor %vm1329, %vm1330
        %v1332 = vsel %vm1331, %v1324, %v1328
        %v1333 = vand.u32 2147483647, %v1152
        %vm1334 = vcmp.eq.f32.partialorder %v1333, 8.507059e+37
        %v1335 = vand.u32 %v1152, 2147483648
        %v1336 = vor.u32 1.1754944e-38, %v1335
        %v1337 = vsel %vm1334, %v1336, %v1332
        %v1338 = vmul.f32 1.0, %v1337
        %v1339 = vrcp.pop %v1153
        %v1340 = vmul.f32 %v1153, %v1339
        %v1341 = vsub.f32 1.0, %v1340
        %v1342 = vmul.f32 %v1339, %v1341
        %v1343 = vadd.f32 %v1339, %v1342
        %vm1344 = vweird.f32 %v1153
        %vm1345 = vweird.f32 %v1339
        %vm1346 = vmor %vm1344, %vm1345
        %v1347 = vsel %vm1346, %v1339, %v1343
        %v1348 = vand.u32 2147483647, %v1153
        %vm1349 = vcmp.eq.f32.partialorder %v1348, 8.507059e+37
        %v1350 = vand.u32 %v1153, 2147483648
        %v1351 = vor.u32 1.1754944e-38, %v1350
        %v1352 = vsel %vm1349, %v1351, %v1347
        %v1353 = vmul.f32 1.0, %v1352
        %v1354 = vrcp.pop %v1154
        %v1355 = vmul.f32 %v1154, %v1354
        %v1356 = vsub.f32 1.0, %v1355
        %v1357 = vmul.f32 %v1354, %v1356
        %v1358 = vadd.f32 %v1354, %v1357
        %vm1359 = vweird.f32 %v1154
        %vm1360 = vweird.f32 %v1354
        %vm1361 = vmor %vm1359, %vm1360
        %v1362 = vsel %vm1361, %v1354, %v1358
        %v1363 = vand.u32 2147483647, %v1154
        %vm1364 = vcmp.eq.f32.partialorder %v1363, 8.507059e+37
        %v1365 = vand.u32 %v1154, 2147483648
        %v1366 = vor.u32 1.1754944e-38, %v1365
        %v1367 = vsel %vm1364, %v1366, %v1362
        %v1368 = vmul.f32 1.0, %v1367
        %v1369 = vrcp.pop %v1155
        %v1370 = vmul.f32 %v1155, %v1369
        %v1371 = vsub.f32 1.0, %v1370
        %v1372 = vmul.f32 %v1369, %v1371
        %v1373 = vadd.f32 %v1369, %v1372
        %vm1374 = vweird.f32 %v1155
        %vm1375 = vweird.f32 %v1369
        %vm1376 = vmor %vm1374, %vm1375
        %v1377 = vsel %vm1376, %v1369, %v1373
        %v1378 = vand.u32 2147483647, %v1155
        %vm1379 = vcmp.eq.f32.partialorder %v1378, 8.507059e+37
        %v1380 = vand.u32 %v1155, 2147483648
        %v1381 = vor.u32 1.1754944e-38, %v1380
        %v1382 = vsel %vm1379, %v1381, %v1377
        %v1383 = vmul.f32 1.0, %v1382
        %v1384 = vrcp.pop %v1156
        %v1385 = vmul.f32 %v1156, %v1384
        %v1386 = vsub.f32 1.0, %v1385
        %v1387 = vmul.f32 %v1384, %v1386
        %v1388 = vadd.f32 %v1384, %v1387
        %vm1389 = vweird.f32 %v1156
        %vm1390 = vweird.f32 %v1384
        %vm1391 = vmor %vm1389, %vm1390
        %v1392 = vsel %vm1391, %v1384, %v1388
        %v1393 = vand.u32 2147483647, %v1156
        %vm1394 = vcmp.eq.f32.partialorder %v1393, 8.507059e+37
        %v1395 = vand.u32 %v1156, 2147483648
        %v1396 = vor.u32 1.1754944e-38, %v1395
        %v1397 = vsel %vm1394, %v1396, %v1392
        %v1398 = vmul.f32 1.0, %v1397
        %v1399 = vrcp.pop %v1157
        %v1400 = vmul.f32 %v1157, %v1399
        %v1401 = vsub.f32 1.0, %v1400
        %v1402 = vmul.f32 %v1399, %v1401
        %v1403 = vadd.f32 %v1399, %v1402
        %vm1404 = vweird.f32 %v1157
        %vm1405 = vweird.f32 %v1399
        %vm1406 = vmor %vm1404, %vm1405
        %v1407 = vsel %vm1406, %v1399, %v1403
        %v1408 = vand.u32 2147483647, %v1157
        %vm1409 = vcmp.eq.f32.partialorder %v1408, 8.507059e+37
        %v1410 = vand.u32 %v1157, 2147483648
        %v1411 = vor.u32 1.1754944e-38, %v1410
        %v1412 = vsel %vm1409, %v1411, %v1407
        %v1413 = vmul.f32 1.0, %v1412
        %v1414 = vrcp.pop %v1158
        %v1415 = vmul.f32 %v1158, %v1414
        %v1416 = vsub.f32 1.0, %v1415
        %v1417 = vmul.f32 %v1414, %v1416
        %v1418 = vadd.f32 %v1414, %v1417
        %vm1419 = vweird.f32 %v1158
        %vm1420 = vweird.f32 %v1414
        %vm1421 = vmor %vm1419, %vm1420
        %v1422 = vsel %vm1421, %v1414, %v1418
        %v1423 = vand.u32 2147483647, %v1158
        %vm1424 = vcmp.eq.f32.partialorder %v1423, 8.507059e+37
        %v1425 = vand.u32 %v1158, 2147483648
        %v1426 = vor.u32 1.1754944e-38, %v1425
        %v1427 = vsel %vm1424, %v1426, %v1422
        %v1428 = vmul.f32 1.0, %v1427
        %v1429 = vrcp.pop %v1159
        %v1430 = vmul.f32 %v1159, %v1429
        %v1431 = vsub.f32 1.0, %v1430
        %v1432 = vmul.f32 %v1429, %v1431
        %v1433 = vadd.f32 %v1429, %v1432
        %vm1434 = vweird.f32 %v1159
        %vm1435 = vweird.f32 %v1429
        %vm1436 = vmor %vm1434, %vm1435
        %v1437 = vsel %vm1436, %v1429, %v1433
        %v1438 = vand.u32 2147483647, %v1159
        %vm1439 = vcmp.eq.f32.partialorder %v1438, 8.507059e+37
        %v1440 = vand.u32 %v1159, 2147483648
        %v1441 = vor.u32 1.1754944e-38, %v1440
        %v1442 = vsel %vm1439, %v1441, %v1437
        %v1443 = vmul.f32 1.0, %v1442
        %v1444 = vrcp.pop %v1160
        %v1445 = vmul.f32 %v1160, %v1444
        %v1446 = vsub.f32 1.0, %v1445
        %v1447 = vmul.f32 %v1444, %v1446
        %v1448 = vadd.f32 %v1444, %v1447
        %vm1449 = vweird.f32 %v1160
        %vm1450 = vweird.f32 %v1444
        %vm1451 = vmor %vm1449, %vm1450
        %v1452 = vsel %vm1451, %v1444, %v1448
        %v1453 = vand.u32 2147483647, %v1160
        %vm1454 = vcmp.eq.f32.partialorder %v1453, 8.507059e+37
        %v1455 = vand.u32 %v1160, 2147483648
        %v1456 = vor.u32 1.1754944e-38, %v1455
        %v1457 = vsel %vm1454, %v1456, %v1452
        %v1458 = vmul.f32 1.0, %v1457
        %v1459 = vrcp.pop %v1161
        %v1460 = vmul.f32 %v1161, %v1459
        %v1461 = vsub.f32 1.0, %v1460
        %v1462 = vmul.f32 %v1459, %v1461
        %v1463 = vadd.f32 %v1459, %v1462
        %vm1464 = vweird.f32 %v1161
        %vm1465 = vweird.f32 %v1459
        %vm1466 = vmor %vm1464, %vm1465
        %v1467 = vsel %vm1466, %v1459, %v1463
        %v1468 = vand.u32 2147483647, %v1161
        %vm1469 = vcmp.eq.f32.partialorder %v1468, 8.507059e+37
        %v1470 = vand.u32 %v1161, 2147483648
        %v1471 = vor.u32 1.1754944e-38, %v1470
        %v1472 = vsel %vm1469, %v1471, %v1467
        %v1473 = vmul.f32 1.0, %v1472
        %v1474 = vrcp.pop %v1162
        %v1475 = vmul.f32 %v1162, %v1474
        %v1476 = vsub.f32 1.0, %v1475
        %v1477 = vmul.f32 %v1474, %v1476
        %v1478 = vadd.f32 %v1474, %v1477
        %vm1479 = vweird.f32 %v1162
        %vm1480 = vweird.f32 %v1474
        %vm1481 = vmor %vm1479, %vm1480
        %v1482 = vsel %vm1481, %v1474, %v1478
        %v1483 = vand.u32 2147483647, %v1162
        %vm1484 = vcmp.eq.f32.partialorder %v1483, 8.507059e+37
        %v1485 = vand.u32 %v1162, 2147483648
        %v1486 = vor.u32 1.1754944e-38, %v1485
        %v1487 = vsel %vm1484, %v1486, %v1482
        %v1488 = vmul.f32 1.0, %v1487
        %v1489 = vrcp.pop %v1163
        %v1490 = vmul.f32 %v1163, %v1489
        %v1491 = vsub.f32 1.0, %v1490
        %v1492 = vmul.f32 %v1489, %v1491
        %v1493 = vadd.f32 %v1489, %v1492
        %vm1494 = vweird.f32 %v1163
        %vm1495 = vweird.f32 %v1489
        %vm1496 = vmor %vm1494, %vm1495
        %v1497 = vsel %vm1496, %v1489, %v1493
        %v1498 = vand.u32 2147483647, %v1163
        %vm1499 = vcmp.eq.f32.partialorder %v1498, 8.507059e+37
        %v1500 = vand.u32 %v1163, 2147483648
        %v1501 = vor.u32 1.1754944e-38, %v1500
        %v1502 = vsel %vm1499, %v1501, %v1497
        %v1503 = vmul.f32 1.0, %v1502
        %v1504 = vrcp.pop %v1164
        %v1505 = vmul.f32 %v1164, %v1504
        %v1506 = vsub.f32 1.0, %v1505
        %v1507 = vmul.f32 %v1504, %v1506
        %v1508 = vadd.f32 %v1504, %v1507
        %vm1509 = vweird.f32 %v1164
        %vm1510 = vweird.f32 %v1504
        %vm1511 = vmor %vm1509, %vm1510
        %v1512 = vsel %vm1511, %v1504, %v1508
        %v1513 = vand.u32 2147483647, %v1164
        %vm1514 = vcmp.eq.f32.partialorder %v1513, 8.507059e+37
        %v1515 = vand.u32 %v1164, 2147483648
        %v1516 = vor.u32 1.1754944e-38, %v1515
        %v1517 = vsel %vm1514, %v1516, %v1512
        %v1518 = vmul.f32 1.0, %v1517
        %v1519 = vrcp.pop %v1165
        %v1520 = vmul.f32 %v1165, %v1519
        %v1521 = vsub.f32 1.0, %v1520
        %v1522 = vmul.f32 %v1519, %v1521
        %v1523 = vadd.f32 %v1519, %v1522
        %vm1524 = vweird.f32 %v1165
        %vm1525 = vweird.f32 %v1519
        %vm1526 = vmor %vm1524, %vm1525
        %v1527 = vsel %vm1526, %v1519, %v1523
        %v1528 = vand.u32 2147483647, %v1165
        %vm1529 = vcmp.eq.f32.partialorder %v1528, 8.507059e+37
        %v1530 = vand.u32 %v1165, 2147483648
        %v1531 = vor.u32 1.1754944e-38, %v1530
        %v1532 = vsel %vm1529, %v1531, %v1527
        %v1533 = vmul.f32 1.0, %v1532
        %v1534 = vrcp.pop %v1166
        %v1535 = vmul.f32 %v1166, %v1534
        %v1536 = vsub.f32 1.0, %v1535
        %v1537 = vmul.f32 %v1534, %v1536
        %v1538 = vadd.f32 %v1534, %v1537
        %vm1539 = vweird.f32 %v1166
        %vm1540 = vweird.f32 %v1534
        %vm1541 = vmor %vm1539, %vm1540
        %v1542 = vsel %vm1541, %v1534, %v1538
        %v1543 = vand.u32 2147483647, %v1166
        %vm1544 = vcmp.eq.f32.partialorder %v1543, 8.507059e+37
        %v1545 = vand.u32 %v1166, 2147483648
        %v1546 = vor.u32 1.1754944e-38, %v1545
        %v1547 = vsel %vm1544, %v1546, %v1542
        %v1548 = vmul.f32 1.0, %v1547
        %v1549 = vrcp.pop %v1167
        %v1550 = vmul.f32 %v1167, %v1549
        %v1551 = vsub.f32 1.0, %v1550
        %v1552 = vmul.f32 %v1549, %v1551
        %v1553 = vadd.f32 %v1549, %v1552
        %vm1554 = vweird.f32 %v1167
        %vm1555 = vweird.f32 %v1549
        %vm1556 = vmor %vm1554, %vm1555
        %v1557 = vsel %vm1556, %v1549, %v1553
        %v1558 = vand.u32 2147483647, %v1167
        %vm1559 = vcmp.eq.f32.partialorder %v1558, 8.507059e+37
        %v1560 = vand.u32 %v1167, 2147483648
        %v1561 = vor.u32 1.1754944e-38, %v1560
        %v1562 = vsel %vm1559, %v1561, %v1557
        %v1563 = vmul.f32 1.0, %v1562
        %v1564 = vrcp.pop %v1168
        %v1565 = vmul.f32 %v1168, %v1564
        %v1566 = vsub.f32 1.0, %v1565
        %v1567 = vmul.f32 %v1564, %v1566
        %v1568 = vadd.f32 %v1564, %v1567
        %vm1569 = vweird.f32 %v1168
        %vm1570 = vweird.f32 %v1564
        %vm1571 = vmor %vm1569, %vm1570
        %v1572 = vsel %vm1571, %v1564, %v1568
        %v1573 = vand.u32 2147483647, %v1168
        %vm1574 = vcmp.eq.f32.partialorder %v1573, 8.507059e+37
        %v1575 = vand.u32 %v1168, 2147483648
        %v1576 = vor.u32 1.1754944e-38, %v1575
        %v1577 = vsel %vm1574, %v1576, %v1572
        %v1578 = vmul.f32 1.0, %v1577
        %v1579 = vrcp.pop %v1169
        %v1580 = vmul.f32 %v1169, %v1579
        %v1581 = vsub.f32 1.0, %v1580
        %v1582 = vmul.f32 %v1579, %v1581
        %v1583 = vadd.f32 %v1579, %v1582
        %vm1584 = vweird.f32 %v1169
        %vm1585 = vweird.f32 %v1579
        %vm1586 = vmor %vm1584, %vm1585
        %v1587 = vsel %vm1586, %v1579, %v1583
        %v1588 = vand.u32 2147483647, %v1169
        %vm1589 = vcmp.eq.f32.partialorder %v1588, 8.507059e+37
        %v1590 = vand.u32 %v1169, 2147483648
        %v1591 = vor.u32 1.1754944e-38, %v1590
        %v1592 = vsel %vm1589, %v1591, %v1587
        %v1593 = vmul.f32 1.0, %v1592
        %v1594 = vrcp.pop %v1170
        %v1595 = vmul.f32 %v1170, %v1594
        %v1596 = vsub.f32 1.0, %v1595
        %v1597 = vmul.f32 %v1594, %v1596
        %v1598 = vadd.f32 %v1594, %v1597
        %vm1599 = vweird.f32 %v1170
        %vm1600 = vweird.f32 %v1594
        %vm1601 = vmor %vm1599, %vm1600
        %v1602 = vsel %vm1601, %v1594, %v1598
        %v1603 = vand.u32 2147483647, %v1170
        %vm1604 = vcmp.eq.f32.partialorder %v1603, 8.507059e+37
        %v1605 = vand.u32 %v1170, 2147483648
        %v1606 = vor.u32 1.1754944e-38, %v1605
        %v1607 = vsel %vm1604, %v1606, %v1602
        %v1608 = vmul.f32 1.0, %v1607
        %v1609 = vrcp.pop %v1171
        %v1610 = vmul.f32 %v1171, %v1609
        %v1611 = vsub.f32 1.0, %v1610
        %v1612 = vmul.f32 %v1609, %v1611
        %v1613 = vadd.f32 %v1609, %v1612
        %vm1614 = vweird.f32 %v1171
        %vm1615 = vweird.f32 %v1609
        %vm1616 = vmor %vm1614, %vm1615
        %v1617 = vsel %vm1616, %v1609, %v1613
        %v1618 = vand.u32 2147483647, %v1171
        %vm1619 = vcmp.eq.f32.partialorder %v1618, 8.507059e+37
        %v1620 = vand.u32 %v1171, 2147483648
        %v1621 = vor.u32 1.1754944e-38, %v1620
        %v1622 = vsel %vm1619, %v1621, %v1617
        %v1623 = vmul.f32 1.0, %v1622
        %v1624 = vrcp.pop %v1172
        %v1625 = vmul.f32 %v1172, %v1624
        %v1626 = vsub.f32 1.0, %v1625
        %v1627 = vmul.f32 %v1624, %v1626
        %v1628 = vadd.f32 %v1624, %v1627
        %vm1629 = vweird.f32 %v1172
        %vm1630 = vweird.f32 %v1624
        %vm1631 = vmor %vm1629, %vm1630
        %v1632 = vsel %vm1631, %v1624, %v1628
        %v1633 = vand.u32 2147483647, %v1172
        %vm1634 = vcmp.eq.f32.partialorder %v1633, 8.507059e+37
        %v1635 = vand.u32 %v1172, 2147483648
        %v1636 = vor.u32 1.1754944e-38, %v1635
        %v1637 = vsel %vm1634, %v1636, %v1632
        %v1638 = vmul.f32 1.0, %v1637
        %v1639 = vrcp.pop %v1173
        %v1640 = vmul.f32 %v1173, %v1639
        %v1641 = vsub.f32 1.0, %v1640
        %v1642 = vmul.f32 %v1639, %v1641
        %v1643 = vadd.f32 %v1639, %v1642
        %vm1644 = vweird.f32 %v1173
        %vm1645 = vweird.f32 %v1639
        %vm1646 = vmor %vm1644, %vm1645
        %v1647 = vsel %vm1646, %v1639, %v1643
        %v1648 = vand.u32 2147483647, %v1173
        %vm1649 = vcmp.eq.f32.partialorder %v1648, 8.507059e+37
        %v1650 = vand.u32 %v1173, 2147483648
        %v1651 = vor.u32 1.1754944e-38, %v1650
        %v1652 = vsel %vm1649, %v1651, %v1647
        %v1653 = vmul.f32 1.0, %v1652
        %1654 = vst [vmem:[%s348] sm:$0xff] %v1188
        %1655 = vst [vmem:[%s348 + $0x8] sm:$0xff] %v1203
        %1656 = vst [vmem:[%s348 + $0x10] sm:$0xff] %v1218
        %1657 = vst [vmem:[%s348 + $0x18] sm:$0xff] %v1233
        %1658 = vst [vmem:[%s348 + $0x20] sm:$0xff] %v1248
        %1659 = vst [vmem:[%s348 + $0x28] sm:$0xff] %v1263
        %1660 = vst [vmem:[%s348 + $0x30] sm:$0xff] %v1278
        %1661 = vst [vmem:[%s348 + $0x38] sm:$0xff] %v1293
        %1662 = vst [vmem:[%s348 + $0x40] sm:$0xff] %v1308
        %1663 = vst [vmem:[%s348 + $0x48] sm:$0xff] %v1323
        %1664 = vst [vmem:[%s348 + $0x50] sm:$0xff] %v1338
        %1665 = vst [vmem:[%s348 + $0x58] sm:$0xff] %v1353
        %1666 = vst [vmem:[%s348 + $0x60] sm:$0xff] %v1368
        %1667 = vst [vmem:[%s348 + $0x68] sm:$0xff] %v1383
        %1668 = vst [vmem:[%s348 + $0x70] sm:$0xff] %v1398
        %1669 = vst [vmem:[%s348 + $0x78] sm:$0xff] %v1413
        %1670 = vst [vmem:[%s348 + $0x80] sm:$0xff] %v1428
        %1671 = vst [vmem:[%s348 + $0x88] sm:$0xff] %v1443
        %1672 = vst [vmem:[%s348 + $0x90] sm:$0xff] %v1458
        %1673 = vst [vmem:[%s348 + $0x98] sm:$0xff] %v1473
        %1674 = vst [vmem:[%s348 + $0xa0] sm:$0xff] %v1488
        %1675 = vst [vmem:[%s348 + $0xa8] sm:$0xff] %v1503
        %1676 = vst [vmem:[%s348 + $0xb0] sm:$0xff] %v1518
        %1677 = vst [vmem:[%s348 + $0xb8] sm:$0xff] %v1533
        %1678 = vst [vmem:[%s348 + $0xc0] sm:$0xff] %v1548
        %1679 = vst [vmem:[%s348 + $0xc8] sm:$0xff] %v1563
        %1680 = vst [vmem:[%s348 + $0xd0] sm:$0xff] %v1578
        %1681 = vst [vmem:[%s348 + $0xd8] sm:$0xff] %v1593
        %1682 = vst [vmem:[%s348 + $0xe0] sm:$0xff] %v1608
        %1683 = vst [vmem:[%s348 + $0xe8] sm:$0xff] %v1623
        %1684 = vst [vmem:[%s348 + $0xf0] sm:$0xff] %v1638
        %1685 = vst [vmem:[%s348 + $0xf8] sm:$0xff] %v1653
        %s1686 = sand.u32 %s186, 1
        %s1687 = scalar_lea.sflag [#allocation4], %s1686
        %s1688 = sand.u32 %s186, 1
        %s1689 = smul.addr %s1688, 256
        %s1690 = scalar_lea.vmem [#allocation10], %s1689
        // Predicated region
        $region65: #{tpu_custom_call.1} parent=47 // pred_check
          %p1691 = pneg %p196
        $region66: #{tpu_custom_call.1} parent=47 // pred_check_branch
          %1693 = sbr.rel (%p1691) target = $region68
        $region67: #{tpu_custom_call.1} parent=47 // pred_region
          %s1694 = smul.u32 32, %s26
          %1696 = vsyncadd %s1687, 0
          %s1697 = smul.addr %s1694, 8
          %s1698 = scalar_lea.hbm %s7, %s1697
          %s1699 = sshll.u32 %s1690, 4
          %s1700 = int_to_ptr.vmem [resolvable:$true] %s1699
          %s1701 = sshll.u32 %s1698, 4
          %s1702 = int_to_ptr.hbm [resolvable:$true] %s1701
          %1707 = dma.vmem_to_hbm [thread:$0]  %s1700, 4096, %s1702, %s1687, 128, 128, 8
        $region68: #{tpu_custom_call.1} parent=47 // pred_fallthru
          _
      $region48: #{tpu_custom_call.1} parent=5 // pred_fallthru
        _
      %p1708 = scmp.le.s32.totalorder 2, %s21
      // Predicated region
      $region69: #{tpu_custom_call.1} parent=5 // pred_check
        %p1709 = pneg %p1708
      $region70: #{tpu_custom_call.1} parent=5 // pred_check_branch
        %1711 = sbr.rel (%p1709) target = $region72
      $region71: #{tpu_custom_call.1} parent=5 // pred_region
        %s1712 = ssub.s32 %s21, 2
        // Predicated region
        $region73: #{tpu_custom_call.1} parent=71 // pred_check
          %p1713 = pneg %p202
        $region74: #{tpu_custom_call.1} parent=71 // pred_check_branch
          %1715 = sbr.rel (%p1713) target = $region76
        $region75: #{tpu_custom_call.1} parent=71 // pred_region
          %s1716 = sand.u32 %s187, 1
          %s1717 = scalar_lea.sflag [#allocation4], %s1716
          %s1718 = sand.u32 %s187, 1
          %s1719 = smul.addr %s1718, 256
          %s1720 = scalar_lea.vmem [#allocation10], %s1719
          %1722 = dma.done %s1717, 4096
        $region76: #{tpu_custom_call.1} parent=71 // pred_fallthru
          _
      $region72: #{tpu_custom_call.1} parent=5 // pred_fallthru
        _
    $region6: #{tpu_custom_call.1} parent=1 // loop_footer
      %s25 = sadd.s32 1, %s21
    $region7: #{tpu_custom_call.1} parent=1 // loop_footer_branch
      %20 = sbr.rel target = $region3
    $region8: #{tpu_custom_call.1} parent=1 // loop_exit
      _
    %1723 = vsyncpa [#allocation3], 1
    %s1724 = scalar_lea.sflag [#allocation3], 1
    %1725 = vsyncpa %s1724, 1
    %1726 = vsyncpa [#allocation6], 1
    %1727 = vsyncpa [#allocation9], 1
    %1728 = vsyncpa [#allocation4], 1
    %s1729 = scalar_lea.sflag [#allocation4], 1
    %1730 = vsyncpa %s1729, 1

</llo_original>
